<compile_context>
chip_gen: v7x
topology: tpu7x:2x2x1
jax: 0.10.0
libtpu: 0.0.40
codegen_flags: <defaults>
</compile_context>

<pallas_src>
import jax
import jax.numpy as jnp
from jax.experimental import pallas as pl
from jax.experimental.pallas import tpu as pltpu

_IN = 784
_H1, _H2, _H3 = 1024, 512, 256


def _leaky_relu(x, slope=0.2):
    # max(x, slope*x) == LeakyReLU(slope) for slope in (0, 1)
    return jnp.maximum(x, slope * x)


def discriminator_kernel(x_ref,
                         w1_ref, b1_ref,
                         w2_ref, b2_ref,
                         w3_ref, b3_ref,
                         w4_ref, b4_ref,
                         o_ref):
    # x_ref: (TB, 784) f32 tile -> cast to bf16 in-kernel (VPU; free vs. MXU).
    # w1/w2/w3: bf16 (in, out), VMEM-resident.  b1..b3: f32 (1, out).
    # w4_ref: (1, 256) f32 row.  b4_ref: (1, 1) f32 scalar in SMEM.
    x = x_ref[...].astype(jnp.bfloat16)

    # Layer 1: 784 -> 1024  (bf16 MXU, f32 accumulation)
    h = jnp.dot(x, w1_ref[...], preferred_element_type=jnp.float32) + b1_ref[...]
    h = _leaky_relu(h)
    # Dropout(0.3): identity in eval mode.

    # Layer 2: 1024 -> 512
    h = jnp.dot(h.astype(jnp.bfloat16), w2_ref[...],
                preferred_element_type=jnp.float32) + b2_ref[...]
    h = _leaky_relu(h)

    # Layer 3: 512 -> 256
    h = jnp.dot(h.astype(jnp.bfloat16), w3_ref[...],
                preferred_element_type=jnp.float32) + b3_ref[...]
    h = _leaky_relu(h)

    # Layer 4: 256 -> 1 as a VPU multiply + row reduction (avoids a degenerate
    # N=1 MXU matmul), then Sigmoid.
    logits = jnp.sum(h * w4_ref[...], axis=-1, keepdims=True) + b4_ref[0, 0]
    o_ref[...] = (1.0 / (1.0 + jnp.exp(-logits))).astype(o_ref.dtype)


def _round_up(v, m):
    return ((v + m - 1) // m) * m


def _pick_batch_tile(B):
    if B <= 256:
        return max(8, _round_up(B, 8))   # single grid step for tiny batches
    if B <= 1024:
        return 256                       # >=2 steps: both v7x TCs get work
    return 512                           # amortize per-step pipeline overhead


def prepare_params(params):
    """One-time weight prep (dtype/layout). Call ONCE, reuse across forwards."""
    w1, b1, w2, b2, w3, b3, w4, b4 = params
    assert w1.shape == (_IN, _H1) and w2.shape == (_H1, _H2)
    assert w3.shape == (_H2, _H3) and w4.shape == (_H3, 1), \
        "weights must be (in, out); w4 must be a (256, 1) column"
    return (
        w1.astype(jnp.bfloat16),
        b1.reshape(1, _H1).astype(jnp.float32),
        w2.astype(jnp.bfloat16),
        b2.reshape(1, _H2).astype(jnp.float32),
        w3.astype(jnp.bfloat16),
        b3.reshape(1, _H3).astype(jnp.float32),
        w4.reshape(1, _H3).astype(jnp.float32),   # (256,1) column -> (1,256) row
        b4.reshape(1, 1).astype(jnp.float32),     # SMEM scalar
    )


def discriminator_forward(x, prepared_params):
    """x: any shape with prod(trailing dims) == 784 per sample (e.g. (B,1,28,28))."""
    x2d = x.reshape(-1, _IN).astype(jnp.float32)
    B = x2d.shape[0]

    TB = _pick_batch_tile(B)
    B_pad = _round_up(B, TB)
    if B_pad != B:
        x2d = jnp.pad(x2d, ((0, B_pad - B), (0, 0)))

    (w1, b1, w2, b2, w3, b3, w4_row, b4_s) = prepared_params

    # Constant index_map + single buffer: weights/biases are DMA'd once and
    # stay VMEM-resident across all grid steps.
    resident = dict(index_map=lambda i: (0, 0), pipeline_mode=pl.Buffered(1))
    grid = (B_pad // TB,)

    out = pl.pallas_call(
        discriminator_kernel,
        out_shape=jax.ShapeDtypeStruct((B_pad, 1), jnp.float32),
        grid=grid,
        in_specs=[
            pl.BlockSpec((TB, _IN), lambda i: (i, 0)),            # x tile (f32)
            pl.BlockSpec((_IN, _H1), **resident),                 # w1 (resident)
            pl.BlockSpec((1, _H1), **resident),                   # b1
            pl.BlockSpec((_H1, _H2), **resident),                 # w2
            pl.BlockSpec((1, _H2), **resident),                   # b2
            pl.BlockSpec((_H2, _H3), **resident),                 # w3
            pl.BlockSpec((1, _H3), **resident),                   # b3
            pl.BlockSpec((1, _H3), **resident),                   # w4 row
            pl.BlockSpec(memory_space=pltpu.MemorySpace.SMEM),    # b4 scalar
        ],
        out_specs=pl.BlockSpec((TB, 1), lambda i: (i, 0)),
        compiler_params=pltpu.CompilerParams(
            dimension_semantics=("parallel",),
            vmem_limit_bytes=32 * 1024 * 1024,
        ),
    )(x2d, w1, b1, w2, b2, w3, b3, w4_row, b4_s)

    return out[:B]


def init_params(key):
    """Deterministic init mimicking PyTorch Linear default:
    U(-1/sqrt(fan_in), 1/sqrt(fan_in)). Weights stored as (in, out)."""
    dims = [(_IN, _H1), (_H1, _H2), (_H2, _H3), (_H3, 1)]
    params = []
    for (fan_in, fan_out) in dims:
        key, kw, kb = jax.random.split(key, 3)
        bound = 1.0 / (fan_in ** 0.5)
        w = jax.random.uniform(kw, (fan_in, fan_out), jnp.float32, -bound, bound)
        b = jax.random.uniform(kb, (1, fan_out), jnp.float32, -bound, bound)
        params += [w, b]
    return tuple(params)


if __name__ == "__main__":
    key = jax.random.PRNGKey(0)
    k_params, k_x = jax.random.split(key)

    params = init_params(k_params)
    prepared = prepare_params(params)   # one-time weight prep, reused per call

    # Small batch of MNIST-like inputs (B, 1, 28, 28); forward flattens to (B, 784).
    x = jax.random.normal(k_x, (2, 1, 28, 28), jnp.float32)

    out = discriminator_forward(x, prepared)
    out = jax.block_until_ready(out)

    assert out.shape == (2, 1)
    assert bool(jnp.all((out >= 0.0) & (out <= 1.0)))
    print("KERNEL_OK")
</pallas_src>

<mosaic_0001>
module attributes {stable_mosaic.version = 11 : i64} {
  func.func @discriminator_kernel(%arg0: i32, %arg1: memref<8x784xf32, #tpu.memory_space<vmem>>, %arg2: memref<784x1024xbf16, #tpu.memory_space<vmem>>, %arg3: memref<1x1024xf32, #tpu.memory_space<vmem>>, %arg4: memref<1024x512xbf16, #tpu.memory_space<vmem>>, %arg5: memref<1x512xf32, #tpu.memory_space<vmem>>, %arg6: memref<512x256xbf16, #tpu.memory_space<vmem>>, %arg7: memref<1x256xf32, #tpu.memory_space<vmem>>, %arg8: memref<1x256xf32, #tpu.memory_space<vmem>>, %arg9: memref<1x1xf32, #tpu.memory_space<smem>>, %arg10: memref<8x1xf32, #tpu.memory_space<vmem>>) attributes {dimension_semantics = [#tpu.dimension_semantics<parallel>], iteration_bounds = array<i64: 1>, scalar_prefetch = 0 : i64, scratch_operands = 0 : i64, tpu.core_type = #tpu.core_type<tc>, window_params = [{transform_indices = @transform_0, window_bounds = array<i64: 8, 784>}, {pipeline_mode = #tpu.pipeline_mode<synchronous>, transform_indices = @transform_1, window_bounds = array<i64: 784, 1024>}, {pipeline_mode = #tpu.pipeline_mode<synchronous>, transform_indices = @transform_2, window_bounds = array<i64: 1, 1024>}, {pipeline_mode = #tpu.pipeline_mode<synchronous>, transform_indices = @transform_3, window_bounds = array<i64: 1024, 512>}, {pipeline_mode = #tpu.pipeline_mode<synchronous>, transform_indices = @transform_4, window_bounds = array<i64: 1, 512>}, {pipeline_mode = #tpu.pipeline_mode<synchronous>, transform_indices = @transform_5, window_bounds = array<i64: 512, 256>}, {pipeline_mode = #tpu.pipeline_mode<synchronous>, transform_indices = @transform_6, window_bounds = array<i64: 1, 256>}, {pipeline_mode = #tpu.pipeline_mode<synchronous>, transform_indices = @transform_7, window_bounds = array<i64: 1, 256>}, {transform_indices = @transform_8, window_bounds = array<i64: 1, 1>}, {transform_indices = @transform_9, window_bounds = array<i64: 8, 1>}]} {
    %c0 = arith.constant 0 : index
    %c0_0 = arith.constant 0 : index
    %0 = vector.load %arg1[%c0, %c0_0] : memref<8x784xf32, #tpu.memory_space<vmem>>, vector<8x784xf32>
    %1 = arith.truncf %0 : vector<8x784xf32> to vector<8x784xbf16>
    %c0_1 = arith.constant 0 : index
    %c0_2 = arith.constant 0 : index
    %2 = vector.load %arg2[%c0_1, %c0_2] : memref<784x1024xbf16, #tpu.memory_space<vmem>>, vector<784x1024xbf16>
    %cst = arith.constant dense<0.000000e+00> : vector<8x1024xf32>
    %3 = tpu.matmul %1, %2, %cst {dimension_numbers = #tpu.dot_dimension_numbers<[1], [0], [0], [1], [0, 0, 1, 1], [], []>} : vector<8x784xbf16>, vector<784x1024xbf16>, vector<8x1024xf32> -> vector<8x1024xf32>
    %c0_3 = arith.constant 0 : index
    %c0_4 = arith.constant 0 : index
    %4 = vector.load %arg3[%c0_3, %c0_4] : memref<1x1024xf32, #tpu.memory_space<vmem>>, vector<1x1024xf32>
    %5 = vector.broadcast %4 : vector<1x1024xf32> to vector<8x1024xf32>
    %6 = arith.addf %3, %5 : vector<8x1024xf32>
    %cst_5 = arith.constant 2.000000e-01 : f32
    %7 = vector.broadcast %cst_5 : f32 to vector<8x1024xf32>
    %8 = arith.mulf %7, %6 : vector<8x1024xf32>
    %9 = arith.maximumf %6, %8 : vector<8x1024xf32>
    %10 = arith.truncf %9 : vector<8x1024xf32> to vector<8x1024xbf16>
    %c0_6 = arith.constant 0 : index
    %c0_7 = arith.constant 0 : index
    %11 = vector.load %arg4[%c0_6, %c0_7] : memref<1024x512xbf16, #tpu.memory_space<vmem>>, vector<1024x512xbf16>
    %cst_8 = arith.constant dense<0.000000e+00> : vector<8x512xf32>
    %12 = tpu.matmul %10, %11, %cst_8 {dimension_numbers = #tpu.dot_dimension_numbers<[1], [0], [0], [1], [0, 0, 1, 1], [], []>} : vector<8x1024xbf16>, vector<1024x512xbf16>, vector<8x512xf32> -> vector<8x512xf32>
    %c0_9 = arith.constant 0 : index
    %c0_10 = arith.constant 0 : index
    %13 = vector.load %arg5[%c0_9, %c0_10] : memref<1x512xf32, #tpu.memory_space<vmem>>, vector<1x512xf32>
    %14 = vector.broadcast %13 : vector<1x512xf32> to vector<8x512xf32>
    %15 = arith.addf %12, %14 : vector<8x512xf32>
    %cst_11 = arith.constant 2.000000e-01 : f32
    %16 = vector.broadcast %cst_11 : f32 to vector<8x512xf32>
    %17 = arith.mulf %16, %15 : vector<8x512xf32>
    %18 = arith.maximumf %15, %17 : vector<8x512xf32>
    %19 = arith.truncf %18 : vector<8x512xf32> to vector<8x512xbf16>
    %c0_12 = arith.constant 0 : index
    %c0_13 = arith.constant 0 : index
    %20 = vector.load %arg6[%c0_12, %c0_13] : memref<512x256xbf16, #tpu.memory_space<vmem>>, vector<512x256xbf16>
    %cst_14 = arith.constant dense<0.000000e+00> : vector<8x256xf32>
    %21 = tpu.matmul %19, %20, %cst_14 {dimension_numbers = #tpu.dot_dimension_numbers<[1], [0], [0], [1], [0, 0, 1, 1], [], []>} : vector<8x512xbf16>, vector<512x256xbf16>, vector<8x256xf32> -> vector<8x256xf32>
    %c0_15 = arith.constant 0 : index
    %c0_16 = arith.constant 0 : index
    %22 = vector.load %arg7[%c0_15, %c0_16] : memref<1x256xf32, #tpu.memory_space<vmem>>, vector<1x256xf32>
    %23 = vector.broadcast %22 : vector<1x256xf32> to vector<8x256xf32>
    %24 = arith.addf %21, %23 : vector<8x256xf32>
    %cst_17 = arith.constant 2.000000e-01 : f32
    %25 = vector.broadcast %cst_17 : f32 to vector<8x256xf32>
    %26 = arith.mulf %25, %24 : vector<8x256xf32>
    %27 = arith.maximumf %24, %26 : vector<8x256xf32>
    %c0_18 = arith.constant 0 : index
    %c0_19 = arith.constant 0 : index
    %28 = vector.load %arg8[%c0_18, %c0_19] : memref<1x256xf32, #tpu.memory_space<vmem>>, vector<1x256xf32>
    %29 = vector.broadcast %28 : vector<1x256xf32> to vector<8x256xf32>
    %30 = arith.mulf %27, %29 : vector<8x256xf32>
    %cst_20 = arith.constant dense<0.000000e+00> : vector<8xf32>
    %31 = vector.multi_reduction <add>, %30, %cst_20 [1] : vector<8x256xf32> to vector<8xf32>
    %32 = vector.shape_cast %31 : vector<8xf32> to vector<8x1xf32>
    %c0_21 = arith.constant 0 : index
    %c0_22 = arith.constant 0 : index
    %33 = memref.load %arg9[%c0_21, %c0_22] : memref<1x1xf32, #tpu.memory_space<smem>>
    %34 = vector.broadcast %33 : f32 to vector<8x1xf32>
    %35 = arith.addf %32, %34 : vector<8x1xf32>
    %cst_23 = arith.constant 0.000000e+00 : f32
    %36 = vector.broadcast %cst_23 : f32 to vector<8x1xf32>
    %37 = arith.subf %36, %35 : vector<8x1xf32>
    %38 = math.exp %37 : vector<8x1xf32>
    %cst_24 = arith.constant 1.000000e+00 : f32
    %39 = vector.broadcast %cst_24 : f32 to vector<8x1xf32>
    %40 = arith.addf %39, %38 : vector<8x1xf32>
    %cst_25 = arith.constant 1.000000e+00 : f32
    %41 = vector.broadcast %cst_25 : f32 to vector<8x1xf32>
    %42 = arith.divf %41, %40 : vector<8x1xf32>
    %c0_26 = arith.constant 0 : index
    %c0_27 = arith.constant 0 : index
    %43 = vector.load %arg10[%c0_26, %c0_27] : memref<8x1xf32, #tpu.memory_space<vmem>>, vector<8x1xf32>
    tpu.vector_store %arg10[%c0_26, %c0_27], %42 {strides = array<i32>} : memref<8x1xf32, #tpu.memory_space<vmem>>, vector<8x1xf32>,
    return
  }
  func.func @transform_0(%arg0: i32) -> (i32, i32) {
    %c0_i32 = arith.constant 0 : i32
    %c0_i32_0 = arith.constant 0 : i32
    return %arg0, %c0_i32 : i32, i32
  }
  func.func @transform_1(%arg0: i32) -> (i32, i32) {
    %c0_i32 = arith.constant 0 : i32
    %c0_i32_0 = arith.constant 0 : i32
    %c0_i32_1 = arith.constant 0 : i32
    return %c0_i32, %c0_i32_0 : i32, i32
  }
  func.func @transform_2(%arg0: i32) -> (i32, i32) {
    %c0_i32 = arith.constant 0 : i32
    %c0_i32_0 = arith.constant 0 : i32
    %c0_i32_1 = arith.constant 0 : i32
    return %c0_i32, %c0_i32_0 : i32, i32
  }
  func.func @transform_3(%arg0: i32) -> (i32, i32) {
    %c0_i32 = arith.constant 0 : i32
    %c0_i32_0 = arith.constant 0 : i32
    %c0_i32_1 = arith.constant 0 : i32
    return %c0_i32, %c0_i32_0 : i32, i32
  }
  func.func @transform_4(%arg0: i32) -> (i32, i32) {
    %c0_i32 = arith.constant 0 : i32
    %c0_i32_0 = arith.constant 0 : i32
    %c0_i32_1 = arith.constant 0 : i32
    return %c0_i32, %c0_i32_0 : i32, i32
  }
  func.func @transform_5(%arg0: i32) -> (i32, i32) {
    %c0_i32 = arith.constant 0 : i32
    %c0_i32_0 = arith.constant 0 : i32
    %c0_i32_1 = arith.constant 0 : i32
    return %c0_i32, %c0_i32_0 : i32, i32
  }
  func.func @transform_6(%arg0: i32) -> (i32, i32) {
    %c0_i32 = arith.constant 0 : i32
    %c0_i32_0 = arith.constant 0 : i32
    %c0_i32_1 = arith.constant 0 : i32
    return %c0_i32, %c0_i32_0 : i32, i32
  }
  func.func @transform_7(%arg0: i32) -> (i32, i32) {
    %c0_i32 = arith.constant 0 : i32
    %c0_i32_0 = arith.constant 0 : i32
    %c0_i32_1 = arith.constant 0 : i32
    return %c0_i32, %c0_i32_0 : i32, i32
  }
  func.func @transform_8(%arg0: i32) -> (i32, i32) {
    %c0_i32 = arith.constant 0 : i32
    %c0_i32_0 = arith.constant 0 : i32
    %c0_i32_1 = arith.constant 0 : i32
    return %c0_i32, %c0_i32_0 : i32, i32
  }
  func.func @transform_9(%arg0: i32) -> (i32, i32) {
    %c0_i32 = arith.constant 0 : i32
    %c0_i32_0 = arith.constant 0 : i32
    return %arg0, %c0_i32 : i32, i32
  }
}

</mosaic_0001>

<llo_original>
// kernel: tpu_custom_call.1
$region0: #{tpu_custom_call.1}
  #allocation0 [shape = 'u32[]', space=smem, size = 0x4, offset = 0x4, fixed_abs, tag = 'smem constant byte address 0x4 - core index']
  #allocation1 [shape = 'u32[144,128]{1,0:T(1,128)}', space=vmem, size = 0x12000, scoped, tag = 'internal scratch']
  #allocation2 [shape = 'f32[1,1]{1,0:T(1,128)S(6)}', space=smem, size = 0x200, scoped, tag = 'scoped memory for tpu_custom_call.1']
  %s0 = inlined_call_operand.hbm [shape: f32[8,784], index: 0, kind: input, shape index: {}]
  %s1 = inlined_call_operand.hbm [shape: bf16[784,1024], index: 1, kind: input, shape index: {}]
  %s2 = inlined_call_operand.hbm [shape: f32[1,1024], index: 2, kind: input, shape index: {}]
  %s3 = inlined_call_operand.hbm [shape: bf16[1024,512], index: 3, kind: input, shape index: {}]
  %s4 = inlined_call_operand.hbm [shape: f32[1,512], index: 4, kind: input, shape index: {}]
  %s5 = inlined_call_operand.hbm [shape: bf16[512,256], index: 5, kind: input, shape index: {}]
  %s6 = inlined_call_operand.hbm [shape: f32[1,256], index: 6, kind: input, shape index: {}]
  %s7 = inlined_call_operand.hbm [shape: f32[1,256], index: 7, kind: input, shape index: {}]
  %s8 = inlined_call_operand.<no memory space> [shape: f32[1,1], index: 8, kind: input, shape index: {}]
  %s9 = inlined_call_operand.vmem [shape: f32[8,1], index: 9, kind: output, shape index: {}]
  %s10 = sld [smem:[#allocation0]]
  $region78: #{tpu_custom_call.1} parent=0
    _
  %s12 = ssub.s32 1, %s10
  %s13 = scalar_select 0, %s12, %s10
  %14 = sst [smem:[#allocation2]] %s8
  $region1: #{tpu_custom_call.1} parent=0
    #allocation3 [shape = 'u8[28672]{0}', space=vmem, size = 0x7000, scoped, tag = 'input window, operand 0, single buffered']
    #allocation4 [shape = 's32[1]{0}', space=sflag, size = 0x4, scoped, tag = 'scoped memory for tpu_custom_call.1']
    #allocation5 [shape = 'u8[1605632]{0}', space=vmem, size = 0x188000, scoped, tag = 'input window, operand 1, single buffered']
    #allocation6 [shape = 's32[1]{0}', space=sflag, size = 0x4, scoped, tag = 'scoped memory for tpu_custom_call.1']
    #allocation7 [shape = 'u8[4096]{0}', space=vmem, size = 0x1000, scoped, tag = 'input window, operand 2, single buffered']
    #allocation8 [shape = 'u8[1048576]{0}', space=vmem, size = 0x100000, scoped, tag = 'input window, operand 3, single buffered']
    #allocation9 [shape = 's32[1]{0}', space=sflag, size = 0x4, scoped, tag = 'scoped memory for tpu_custom_call.1']
    #allocation10 [shape = 'u8[2048]{0}', space=vmem, size = 0x800, scoped, tag = 'input window, operand 4, single buffered']
    #allocation11 [shape = 'u8[262144]{0}', space=vmem, size = 0x40000, scoped, tag = 'input window, operand 5, single buffered']
    #allocation12 [shape = 's32[1]{0}', space=sflag, size = 0x4, scoped, tag = 'scoped memory for tpu_custom_call.1']
    #allocation13 [shape = 'u8[1024]{0}', space=vmem, size = 0x400, scoped, tag = 'input window, operand 6, single buffered']
    #allocation14 [shape = 'u8[1024]{0}', space=vmem, size = 0x400, scoped, tag = 'input window, operand 7, single buffered']
    #allocation15 [shape = 's32[1]{0}', space=sflag, size = 0x4, scoped, tag = 'scoped memory for tpu_custom_call.1']
    %15 = vsyncpa [#allocation4], 0
    %16 = vsyncpa [#allocation6], 0
    %17 = vsyncpa [#allocation9], 0
    %18 = vsyncpa [#allocation12], 0
    %19 = vsyncpa [#allocation15], 0
    // Predicated region
    $region2: #{tpu_custom_call.1} parent=1 // pred_check
      _
    $region3: #{tpu_custom_call.1} parent=1 // pred_check_branch
      %21 = sbr.rel (0) target = $region5
    $region4: #{tpu_custom_call.1} parent=1 // pred_region
      %s23 = ssub.s32 896, 896
      %24 = vsyncadd [#allocation4], %s23
      %s26 = sshll.u32 [#allocation3], 4
      %s27 = int_to_ptr.vmem [resolvable:$true] %s26
      %29 = dma.hbm_to_vmem [thread:$0]  %s0, 896, %s27, [#allocation4]
    $region5: #{tpu_custom_call.1} parent=1 // pred_fallthru
      _
    // Predicated region
    $region6: #{tpu_custom_call.1} parent=1 // pred_check
      _
    $region7: #{tpu_custom_call.1} parent=1 // pred_check_branch
      %31 = sbr.rel (0) target = $region9
    $region8: #{tpu_custom_call.1} parent=1 // pred_region
      %s33 = ssub.s32 50176, 50176
      %34 = vsyncadd [#allocation6], %s33
      %s35 = sshll.u32 [#allocation5], 4
      %s36 = int_to_ptr.vmem [resolvable:$true] %s35
      %41 = dma.hbm_to_vmem [thread:$0]  %s1, 50176, %s36, [#allocation6], 512, 512, 32
    $region9: #{tpu_custom_call.1} parent=1 // pred_fallthru
      _
    // Predicated region
    $region10: #{tpu_custom_call.1} parent=1 // pred_check
      _
    $region11: #{tpu_custom_call.1} parent=1 // pred_check_branch
      %43 = sbr.rel (0) target = $region13
    $region12: #{tpu_custom_call.1} parent=1 // pred_region
      %s45 = ssub.s32 128, 128
      %46 = vsyncadd [#allocation6], %s45
      %s48 = sshll.u32 [#allocation7], 4
      %s49 = int_to_ptr.vmem [resolvable:$true] %s48
      %51 = dma.hbm_to_vmem [thread:$0]  %s2, 128, %s49, [#allocation6]
    $region13: #{tpu_custom_call.1} parent=1 // pred_fallthru
      _
    // Predicated region
    $region14: #{tpu_custom_call.1} parent=1 // pred_check
      _
    $region15: #{tpu_custom_call.1} parent=1 // pred_check_branch
      %53 = sbr.rel (0) target = $region17
    $region16: #{tpu_custom_call.1} parent=1 // pred_region
      %s55 = ssub.s32 32768, 32768
      %56 = vsyncadd [#allocation9], %s55
      %s57 = sshll.u32 [#allocation8], 4
      %s58 = int_to_ptr.vmem [resolvable:$true] %s57
      %63 = dma.hbm_to_vmem [thread:$0]  %s3, 32768, %s58, [#allocation9], 256, 256, 16
    $region17: #{tpu_custom_call.1} parent=1 // pred_fallthru
      _
    // Predicated region
    $region18: #{tpu_custom_call.1} parent=1 // pred_check
      _
    $region19: #{tpu_custom_call.1} parent=1 // pred_check_branch
      %65 = sbr.rel (0) target = $region21
    $region20: #{tpu_custom_call.1} parent=1 // pred_region
      %s67 = ssub.s32 64, 64
      %68 = vsyncadd [#allocation9], %s67
      %s70 = sshll.u32 [#allocation10], 4
      %s71 = int_to_ptr.vmem [resolvable:$true] %s70
      %73 = dma.hbm_to_vmem [thread:$0]  %s4, 64, %s71, [#allocation9]
    $region21: #{tpu_custom_call.1} parent=1 // pred_fallthru
      _
    // Predicated region
    $region22: #{tpu_custom_call.1} parent=1 // pred_check
      _
    $region23: #{tpu_custom_call.1} parent=1 // pred_check_branch
      %75 = sbr.rel (0) target = $region25
    $region24: #{tpu_custom_call.1} parent=1 // pred_region
      %s77 = ssub.s32 8192, 8192
      %78 = vsyncadd [#allocation12], %s77
      %s79 = sshll.u32 [#allocation11], 4
      %s80 = int_to_ptr.vmem [resolvable:$true] %s79
      %85 = dma.hbm_to_vmem [thread:$0]  %s5, 8192, %s80, [#allocation12], 128, 128, 8
    $region25: #{tpu_custom_call.1} parent=1 // pred_fallthru
      _
    // Predicated region
    $region26: #{tpu_custom_call.1} parent=1 // pred_check
      _
    $region27: #{tpu_custom_call.1} parent=1 // pred_check_branch
      %87 = sbr.rel (0) target = $region29
    $region28: #{tpu_custom_call.1} parent=1 // pred_region
      %s89 = ssub.s32 32, 32
      %90 = vsyncadd [#allocation12], %s89
      %s92 = sshll.u32 [#allocation13], 4
      %s93 = int_to_ptr.vmem [resolvable:$true] %s92
      %95 = dma.hbm_to_vmem [thread:$0]  %s6, 32, %s93, [#allocation12]
    $region29: #{tpu_custom_call.1} parent=1 // pred_fallthru
      _
    // Predicated region
    $region30: #{tpu_custom_call.1} parent=1 // pred_check
      _
    $region31: #{tpu_custom_call.1} parent=1 // pred_check_branch
      %97 = sbr.rel (0) target = $region33
    $region32: #{tpu_custom_call.1} parent=1 // pred_region
      %s99 = ssub.s32 32, 32
      %100 = vsyncadd [#allocation15], %s99
      %s102 = sshll.u32 [#allocation14], 4
      %s103 = int_to_ptr.vmem [resolvable:$true] %s102
      %105 = dma.hbm_to_vmem [thread:$0]  %s7, 32, %s103, [#allocation15]
    $region33: #{tpu_custom_call.1} parent=1 // pred_fallthru
      _
    // Predicated region
    $region34: #{tpu_custom_call.1} parent=1 // pred_check
      _
    $region35: #{tpu_custom_call.1} parent=1 // pred_check_branch
      %107 = sbr.rel (0) target = $region37
    $region36: #{tpu_custom_call.1} parent=1 // pred_region
      _
    $region37: #{tpu_custom_call.1} parent=1 // pred_fallthru
      _
    // Predicated region
    $region38: #{tpu_custom_call.1} parent=1 // pred_check
      _
    $region39: #{tpu_custom_call.1} parent=1 // pred_check_branch
      %109 = sbr.rel (0) target = $region41
    $region40: #{tpu_custom_call.1} parent=1 // pred_region
      %110 = dma.done [#allocation4], 896
    $region41: #{tpu_custom_call.1} parent=1 // pred_fallthru
      _
    // Predicated region
    $region42: #{tpu_custom_call.1} parent=1 // pred_check
      _
    $region43: #{tpu_custom_call.1} parent=1 // pred_check_branch
      %112 = sbr.rel (0) target = $region45
    $region44: #{tpu_custom_call.1} parent=1 // pred_region
      %113 = dma.done [#allocation6], 50176
    $region45: #{tpu_custom_call.1} parent=1 // pred_fallthru
      _
    // Predicated region
    $region46: #{tpu_custom_call.1} parent=1 // pred_check
      _
    $region47: #{tpu_custom_call.1} parent=1 // pred_check_branch
      %115 = sbr.rel (0) target = $region49
    $region48: #{tpu_custom_call.1} parent=1 // pred_region
      %116 = dma.done [#allocation6], 128
    $region49: #{tpu_custom_call.1} parent=1 // pred_fallthru
      _
    // Predicated region
    $region50: #{tpu_custom_call.1} parent=1 // pred_check
      _
    $region51: #{tpu_custom_call.1} parent=1 // pred_check_branch
      %118 = sbr.rel (0) target = $region53
    $region52: #{tpu_custom_call.1} parent=1 // pred_region
      %119 = dma.done [#allocation9], 32768
    $region53: #{tpu_custom_call.1} parent=1 // pred_fallthru
      _
    // Predicated region
    $region54: #{tpu_custom_call.1} parent=1 // pred_check
      _
    $region55: #{tpu_custom_call.1} parent=1 // pred_check_branch
      %121 = sbr.rel (0) target = $region57
    $region56: #{tpu_custom_call.1} parent=1 // pred_region
      %122 = dma.done [#allocation9], 64
    $region57: #{tpu_custom_call.1} parent=1 // pred_fallthru
      _
    // Predicated region
    $region58: #{tpu_custom_call.1} parent=1 // pred_check
      _
    $region59: #{tpu_custom_call.1} parent=1 // pred_check_branch
      %124 = sbr.rel (0) target = $region61
    $region60: #{tpu_custom_call.1} parent=1 // pred_region
      %125 = dma.done [#allocation12], 8192
    $region61: #{tpu_custom_call.1} parent=1 // pred_fallthru
      _
    // Predicated region
    $region62: #{tpu_custom_call.1} parent=1 // pred_check
      _
    $region63: #{tpu_custom_call.1} parent=1 // pred_check_branch
      %127 = sbr.rel (0) target = $region65
    $region64: #{tpu_custom_call.1} parent=1 // pred_region
      %128 = dma.done [#allocation12], 32
    $region65: #{tpu_custom_call.1} parent=1 // pred_fallthru
      _
    // Predicated region
    $region66: #{tpu_custom_call.1} parent=1 // pred_check
      _
    $region67: #{tpu_custom_call.1} parent=1 // pred_check_branch
      %130 = sbr.rel (0) target = $region69
    $region68: #{tpu_custom_call.1} parent=1 // pred_region
      %131 = dma.done [#allocation15], 32
    $region69: #{tpu_custom_call.1} parent=1 // pred_fallthru
      _
    %v133 = vld [vmem:[#allocation3] sm:$0xff]
    %v134 = vld [vmem:[#allocation3 + $0x8] sm:$0xff]
    %v135 = vld [vmem:[#allocation3 + $0x10] sm:$0xff]
    %v136 = vld [vmem:[#allocation3 + $0x18] sm:$0xff]
    %v137 = vld [vmem:[#allocation3 + $0x20] sm:$0xff]
    %v138 = vld [vmem:[#allocation3 + $0x28] sm:$0xff]
    %v139 = vld [vmem:[#allocation3 + $0x30] sm:$0xff]
    %v140 = vpack.c.bf16 %v133, %v133
    %v141 = vpack.c.bf16 %v134, %v134
    %v142 = vpack.c.bf16 %v135, %v135
    %v143 = vpack.c.bf16 %v136, %v136
    %v144 = vpack.c.bf16 %v137, %v137
    %v145 = vpack.c.bf16 %v138, %v138
    %v146 = vpack.c.bf16 %v139, %v139
    %v147 = vld [vmem:[#allocation5] sm:$0xff]
    %v148 = vld [vmem:[#allocation5 + $0x8] sm:$0xff]
    %v149 = vld [vmem:[#allocation5 + $0x10] sm:$0xff]
    %v150 = vld [vmem:[#allocation5 + $0x18] sm:$0xff]
    %v151 = vld [vmem:[#allocation5 + $0x20] sm:$0xff]
    %v152 = vld [vmem:[#allocation5 + $0x28] sm:$0xff]
    %v153 = vld [vmem:[#allocation5 + $0x30] sm:$0xff]
    %v154 = vld [vmem:[#allocation5 + $0x38] sm:$0xff]
    %v155 = vld [vmem:[#allocation5 + $0x40] sm:$0xff]
    %v156 = vld [vmem:[#allocation5 + $0x48] sm:$0xff]
    %v157 = vld [vmem:[#allocation5 + $0x50] sm:$0xff]
    %v158 = vld [vmem:[#allocation5 + $0x58] sm:$0xff]
    %v159 = vld [vmem:[#allocation5 + $0x60] sm:$0xff]
    %v160 = vld [vmem:[#allocation5 + $0x68] sm:$0xff]
    %v161 = vld [vmem:[#allocation5 + $0x70] sm:$0xff]
    %v162 = vld [vmem:[#allocation5 + $0x78] sm:$0xff]
    %v163 = vld [vmem:[#allocation5 + $0x80] sm:$0xff]
    %v164 = vld [vmem:[#allocation5 + $0x88] sm:$0xff]
    %v165 = vld [vmem:[#allocation5 + $0x90] sm:$0xff]
    %v166 = vld [vmem:[#allocation5 + $0x98] sm:$0xff]
    %v167 = vld [vmem:[#allocation5 + $0xa0] sm:$0xff]
    %v168 = vld [vmem:[#allocation5 + $0xa8] sm:$0xff]
    %v169 = vld [vmem:[#allocation5 + $0xb0] sm:$0xff]
    %v170 = vld [vmem:[#allocation5 + $0xb8] sm:$0xff]
    %v171 = vld [vmem:[#allocation5 + $0xc0] sm:$0xff]
    %v172 = vld [vmem:[#allocation5 + $0xc8] sm:$0xff]
    %v173 = vld [vmem:[#allocation5 + $0xd0] sm:$0xff]
    %v174 = vld [vmem:[#allocation5 + $0xd8] sm:$0xff]
    %v175 = vld [vmem:[#allocation5 + $0xe0] sm:$0xff]
    %v176 = vld [vmem:[#allocation5 + $0xe8] sm:$0xff]
    %v177 = vld [vmem:[#allocation5 + $0xf0] sm:$0xff]
    %v178 = vld [vmem:[#allocation5 + $0xf8] sm:$0xff]
    %v179 = vld [vmem:[#allocation5 + $0x100] sm:$0xff]
    %v180 = vld [vmem:[#allocation5 + $0x108] sm:$0xff]
    %v181 = vld [vmem:[#allocation5 + $0x110] sm:$0xff]
    %v182 = vld [vmem:[#allocation5 + $0x118] sm:$0xff]
    %v183 = vld [vmem:[#allocation5 + $0x120] sm:$0xff]
    %v184 = vld [vmem:[#allocation5 + $0x128] sm:$0xff]
    %v185 = vld [vmem:[#allocation5 + $0x130] sm:$0xff]
    %v186 = vld [vmem:[#allocation5 + $0x138] sm:$0xff]
    %v187 = vld [vmem:[#allocation5 + $0x140] sm:$0xff]
    %v188 = vld [vmem:[#allocation5 + $0x148] sm:$0xff]
    %v189 = vld [vmem:[#allocation5 + $0x150] sm:$0xff]
    %v190 = vld [vmem:[#allocation5 + $0x158] sm:$0xff]
    %v191 = vld [vmem:[#allocation5 + $0x160] sm:$0xff]
    %v192 = vld [vmem:[#allocation5 + $0x168] sm:$0xff]
    %v193 = vld [vmem:[#allocation5 + $0x170] sm:$0xff]
    %v194 = vld [vmem:[#allocation5 + $0x178] sm:$0xff]
    %v195 = vld [vmem:[#allocation5 + $0x180] sm:$0xff]
    %v196 = vld [vmem:[#allocation5 + $0x188] sm:$0xff]
    %v197 = vld [vmem:[#allocation5 + $0x190] sm:$0xff]
    %v198 = vld [vmem:[#allocation5 + $0x198] sm:$0xff]
    %v199 = vld [vmem:[#allocation5 + $0x1a0] sm:$0xff]
    %v200 = vld [vmem:[#allocation5 + $0x1a8] sm:$0xff]
    %v201 = vld [vmem:[#allocation5 + $0x1b0] sm:$0xff]
    %v202 = vld [vmem:[#allocation5 + $0x1b8] sm:$0xff]
    %v203 = vld [vmem:[#allocation5 + $0x1c0] sm:$0xff]
    %v204 = vld [vmem:[#allocation5 + $0x1c8] sm:$0xff]
    %v205 = vld [vmem:[#allocation5 + $0x1d0] sm:$0xff]
    %v206 = vld [vmem:[#allocation5 + $0x1d8] sm:$0xff]
    %v207 = vld [vmem:[#allocation5 + $0x1e0] sm:$0xff]
    %v208 = vld [vmem:[#allocation5 + $0x1e8] sm:$0xff]
    %v209 = vld [vmem:[#allocation5 + $0x1f0] sm:$0xff]
    %v210 = vld [vmem:[#allocation5 + $0x1f8] sm:$0xff]
    %v211 = vld [vmem:[#allocation5 + $0x200] sm:$0xff]
    %v212 = vld [vmem:[#allocation5 + $0x208] sm:$0xff]
    %v213 = vld [vmem:[#allocation5 + $0x210] sm:$0xff]
    %v214 = vld [vmem:[#allocation5 + $0x218] sm:$0xff]
    %v215 = vld [vmem:[#allocation5 + $0x220] sm:$0xff]
    %v216 = vld [vmem:[#allocation5 + $0x228] sm:$0xff]
    %v217 = vld [vmem:[#allocation5 + $0x230] sm:$0xff]
    %v218 = vld [vmem:[#allocation5 + $0x238] sm:$0xff]
    %v219 = vld [vmem:[#allocation5 + $0x240] sm:$0xff]
    %v220 = vld [vmem:[#allocation5 + $0x248] sm:$0xff]
    %v221 = vld [vmem:[#allocation5 + $0x250] sm:$0xff]
    %v222 = vld [vmem:[#allocation5 + $0x258] sm:$0xff]
    %v223 = vld [vmem:[#allocation5 + $0x260] sm:$0xff]
    %v224 = vld [vmem:[#allocation5 + $0x268] sm:$0xff]
    %v225 = vld [vmem:[#allocation5 + $0x270] sm:$0xff]
    %v226 = vld [vmem:[#allocation5 + $0x278] sm:$0xff]
    %v227 = vld [vmem:[#allocation5 + $0x280] sm:$0xff]
    %v228 = vld [vmem:[#allocation5 + $0x288] sm:$0xff]
    %v229 = vld [vmem:[#allocation5 + $0x290] sm:$0xff]
    %v230 = vld [vmem:[#allocation5 + $0x298] sm:$0xff]
    %v231 = vld [vmem:[#allocation5 + $0x2a0] sm:$0xff]
    %v232 = vld [vmem:[#allocation5 + $0x2a8] sm:$0xff]
    %v233 = vld [vmem:[#allocation5 + $0x2b0] sm:$0xff]
    %v234 = vld [vmem:[#allocation5 + $0x2b8] sm:$0xff]
    %v235 = vld [vmem:[#allocation5 + $0x2c0] sm:$0xff]
    %v236 = vld [vmem:[#allocation5 + $0x2c8] sm:$0xff]
    %v237 = vld [vmem:[#allocation5 + $0x2d0] sm:$0xff]
    %v238 = vld [vmem:[#allocation5 + $0x2d8] sm:$0xff]
    %v239 = vld [vmem:[#allocation5 + $0x2e0] sm:$0xff]
    %v240 = vld [vmem:[#allocation5 + $0x2e8] sm:$0xff]
    %v241 = vld [vmem:[#allocation5 + $0x2f0] sm:$0xff]
    %v242 = vld [vmem:[#allocation5 + $0x2f8] sm:$0xff]
    %v243 = vld [vmem:[#allocation5 + $0x300] sm:$0xff]
    %v244 = vld [vmem:[#allocation5 + $0x308] sm:$0xff]
    %v245 = vld [vmem:[#allocation5 + $0x310] sm:$0xff]
    %v246 = vld [vmem:[#allocation5 + $0x318] sm:$0xff]
    %v247 = vld [vmem:[#allocation5 + $0x320] sm:$0xff]
    %v248 = vld [vmem:[#allocation5 + $0x328] sm:$0xff]
    %v249 = vld [vmem:[#allocation5 + $0x330] sm:$0xff]
    %v250 = vld [vmem:[#allocation5 + $0x338] sm:$0xff]
    %v251 = vld [vmem:[#allocation5 + $0x340] sm:$0xff]
    %v252 = vld [vmem:[#allocation5 + $0x348] sm:$0xff]
    %v253 = vld [vmem:[#allocation5 + $0x350] sm:$0xff]
    %v254 = vld [vmem:[#allocation5 + $0x358] sm:$0xff]
    %v255 = vld [vmem:[#allocation5 + $0x360] sm:$0xff]
    %v256 = vld [vmem:[#allocation5 + $0x368] sm:$0xff]
    %v257 = vld [vmem:[#allocation5 + $0x370] sm:$0xff]
    %v258 = vld [vmem:[#allocation5 + $0x378] sm:$0xff]
    %v259 = vld [vmem:[#allocation5 + $0x380] sm:$0xff]
    %v260 = vld [vmem:[#allocation5 + $0x388] sm:$0xff]
    %v261 = vld [vmem:[#allocation5 + $0x390] sm:$0xff]
    %v262 = vld [vmem:[#allocation5 + $0x398] sm:$0xff]
    %v263 = vld [vmem:[#allocation5 + $0x3a0] sm:$0xff]
    %v264 = vld [vmem:[#allocation5 + $0x3a8] sm:$0xff]
    %v265 = vld [vmem:[#allocation5 + $0x3b0] sm:$0xff]
    %v266 = vld [vmem:[#allocation5 + $0x3b8] sm:$0xff]
    %v267 = vld [vmem:[#allocation5 + $0x3c0] sm:$0xff]
    %v268 = vld [vmem:[#allocation5 + $0x3c8] sm:$0xff]
    %v269 = vld [vmem:[#allocation5 + $0x3d0] sm:$0xff]
    %v270 = vld [vmem:[#allocation5 + $0x3d8] sm:$0xff]
    %v271 = vld [vmem:[#allocation5 + $0x3e0] sm:$0xff]
    %v272 = vld [vmem:[#allocation5 + $0x3e8] sm:$0xff]
    %v273 = vld [vmem:[#allocation5 + $0x3f0] sm:$0xff]
    %v274 = vld [vmem:[#allocation5 + $0x3f8] sm:$0xff]
    %v275 = vld [vmem:[#allocation5 + $0x400] sm:$0xff]
    %v276 = vld [vmem:[#allocation5 + $0x408] sm:$0xff]
    %v277 = vld [vmem:[#allocation5 + $0x410] sm:$0xff]
    %v278 = vld [vmem:[#allocation5 + $0x418] sm:$0xff]
    %v279 = vld [vmem:[#allocation5 + $0x420] sm:$0xff]
    %v280 = vld [vmem:[#allocation5 + $0x428] sm:$0xff]
    %v281 = vld [vmem:[#allocation5 + $0x430] sm:$0xff]
    %v282 = vld [vmem:[#allocation5 + $0x438] sm:$0xff]
    %v283 = vld [vmem:[#allocation5 + $0x440] sm:$0xff]
    %v284 = vld [vmem:[#allocation5 + $0x448] sm:$0xff]
    %v285 = vld [vmem:[#allocation5 + $0x450] sm:$0xff]
    %v286 = vld [vmem:[#allocation5 + $0x458] sm:$0xff]
    %v287 = vld [vmem:[#allocation5 + $0x460] sm:$0xff]
    %v288 = vld [vmem:[#allocation5 + $0x468] sm:$0xff]
    %v289 = vld [vmem:[#allocation5 + $0x470] sm:$0xff]
    %v290 = vld [vmem:[#allocation5 + $0x478] sm:$0xff]
    %v291 = vld [vmem:[#allocation5 + $0x480] sm:$0xff]
    %v292 = vld [vmem:[#allocation5 + $0x488] sm:$0xff]
    %v293 = vld [vmem:[#allocation5 + $0x490] sm:$0xff]
    %v294 = vld [vmem:[#allocation5 + $0x498] sm:$0xff]
    %v295 = vld [vmem:[#allocation5 + $0x4a0] sm:$0xff]
    %v296 = vld [vmem:[#allocation5 + $0x4a8] sm:$0xff]
    %v297 = vld [vmem:[#allocation5 + $0x4b0] sm:$0xff]
    %v298 = vld [vmem:[#allocation5 + $0x4b8] sm:$0xff]
    %v299 = vld [vmem:[#allocation5 + $0x4c0] sm:$0xff]
    %v300 = vld [vmem:[#allocation5 + $0x4c8] sm:$0xff]
    %v301 = vld [vmem:[#allocation5 + $0x4d0] sm:$0xff]
    %v302 = vld [vmem:[#allocation5 + $0x4d8] sm:$0xff]
    %v303 = vld [vmem:[#allocation5 + $0x4e0] sm:$0xff]
    %v304 = vld [vmem:[#allocation5 + $0x4e8] sm:$0xff]
    %v305 = vld [vmem:[#allocation5 + $0x4f0] sm:$0xff]
    %v306 = vld [vmem:[#allocation5 + $0x4f8] sm:$0xff]
    %v307 = vld [vmem:[#allocation5 + $0x500] sm:$0xff]
    %v308 = vld [vmem:[#allocation5 + $0x508] sm:$0xff]
    %v309 = vld [vmem:[#allocation5 + $0x510] sm:$0xff]
    %v310 = vld [vmem:[#allocation5 + $0x518] sm:$0xff]
    %v311 = vld [vmem:[#allocation5 + $0x520] sm:$0xff]
    %v312 = vld [vmem:[#allocation5 + $0x528] sm:$0xff]
    %v313 = vld [vmem:[#allocation5 + $0x530] sm:$0xff]
    %v314 = vld [vmem:[#allocation5 + $0x538] sm:$0xff]
    %v315 = vld [vmem:[#allocation5 + $0x540] sm:$0xff]
    %v316 = vld [vmem:[#allocation5 + $0x548] sm:$0xff]
    %v317 = vld [vmem:[#allocation5 + $0x550] sm:$0xff]
    %v318 = vld [vmem:[#allocation5 + $0x558] sm:$0xff]
    %v319 = vld [vmem:[#allocation5 + $0x560] sm:$0xff]
    %v320 = vld [vmem:[#allocation5 + $0x568] sm:$0xff]
    %v321 = vld [vmem:[#allocation5 + $0x570] sm:$0xff]
    %v322 = vld [vmem:[#allocation5 + $0x578] sm:$0xff]
    %v323 = vld [vmem:[#allocation5 + $0x580] sm:$0xff]
    %v324 = vld [vmem:[#allocation5 + $0x588] sm:$0xff]
    %v325 = vld [vmem:[#allocation5 + $0x590] sm:$0xff]
    %v326 = vld [vmem:[#allocation5 + $0x598] sm:$0xff]
    %v327 = vld [vmem:[#allocation5 + $0x5a0] sm:$0xff]
    %v328 = vld [vmem:[#allocation5 + $0x5a8] sm:$0xff]
    %v329 = vld [vmem:[#allocation5 + $0x5b0] sm:$0xff]
    %v330 = vld [vmem:[#allocation5 + $0x5b8] sm:$0xff]
    %v331 = vld [vmem:[#allocation5 + $0x5c0] sm:$0xff]
    %v332 = vld [vmem:[#allocation5 + $0x5c8] sm:$0xff]
    %v333 = vld [vmem:[#allocation5 + $0x5d0] sm:$0xff]
    %v334 = vld [vmem:[#allocation5 + $0x5d8] sm:$0xff]
    %v335 = vld [vmem:[#allocation5 + $0x5e0] sm:$0xff]
    %v336 = vld [vmem:[#allocation5 + $0x5e8] sm:$0xff]
    %v337 = vld [vmem:[#allocation5 + $0x5f0] sm:$0xff]
    %v338 = vld [vmem:[#allocation5 + $0x5f8] sm:$0xff]
    %v339 = vld [vmem:[#allocation5 + $0x600] sm:$0xff]
    %v340 = vld [vmem:[#allocation5 + $0x608] sm:$0xff]
    %v341 = vld [vmem:[#allocation5 + $0x610] sm:$0xff]
    %v342 = vld [vmem:[#allocation5 + $0x618] sm:$0xff]
    %v343 = vld [vmem:[#allocation5 + $0x620] sm:$0xff]
    %v344 = vld [vmem:[#allocation5 + $0x628] sm:$0xff]
    %v345 = vld [vmem:[#allocation5 + $0x630] sm:$0xff]
    %v346 = vld [vmem:[#allocation5 + $0x638] sm:$0xff]
    %v347 = vld [vmem:[#allocation5 + $0x640] sm:$0xff]
    %v348 = vld [vmem:[#allocation5 + $0x648] sm:$0xff]
    %v349 = vld [vmem:[#allocation5 + $0x650] sm:$0xff]
    %v350 = vld [vmem:[#allocation5 + $0x658] sm:$0xff]
    %v351 = vld [vmem:[#allocation5 + $0x660] sm:$0xff]
    %v352 = vld [vmem:[#allocation5 + $0x668] sm:$0xff]
    %v353 = vld [vmem:[#allocation5 + $0x670] sm:$0xff]
    %v354 = vld [vmem:[#allocation5 + $0x678] sm:$0xff]
    %v355 = vld [vmem:[#allocation5 + $0x680] sm:$0xff]
    %v356 = vld [vmem:[#allocation5 + $0x688] sm:$0xff]
    %v357 = vld [vmem:[#allocation5 + $0x690] sm:$0xff]
    %v358 = vld [vmem:[#allocation5 + $0x698] sm:$0xff]
    %v359 = vld [vmem:[#allocation5 + $0x6a0] sm:$0xff]
    %v360 = vld [vmem:[#allocation5 + $0x6a8] sm:$0xff]
    %v361 = vld [vmem:[#allocation5 + $0x6b0] sm:$0xff]
    %v362 = vld [vmem:[#allocation5 + $0x6b8] sm:$0xff]
    %v363 = vld [vmem:[#allocation5 + $0x6c0] sm:$0xff]
    %v364 = vld [vmem:[#allocation5 + $0x6c8] sm:$0xff]
    %v365 = vld [vmem:[#allocation5 + $0x6d0] sm:$0xff]
    %v366 = vld [vmem:[#allocation5 + $0x6d8] sm:$0xff]
    %v367 = vld [vmem:[#allocation5 + $0x6e0] sm:$0xff]
    %v368 = vld [vmem:[#allocation5 + $0x6e8] sm:$0xff]
    %v369 = vld [vmem:[#allocation5 + $0x6f0] sm:$0xff]
    %v370 = vld [vmem:[#allocation5 + $0x6f8] sm:$0xff]
    %v371 = vld [vmem:[#allocation5 + $0x700] sm:$0xff]
    %v372 = vld [vmem:[#allocation5 + $0x708] sm:$0xff]
    %v373 = vld [vmem:[#allocation5 + $0x710] sm:$0xff]
    %v374 = vld [vmem:[#allocation5 + $0x718] sm:$0xff]
    %v375 = vld [vmem:[#allocation5 + $0x720] sm:$0xff]
    %v376 = vld [vmem:[#allocation5 + $0x728] sm:$0xff]
    %v377 = vld [vmem:[#allocation5 + $0x730] sm:$0xff]
    %v378 = vld [vmem:[#allocation5 + $0x738] sm:$0xff]
    %v379 = vld [vmem:[#allocation5 + $0x740] sm:$0xff]
    %v380 = vld [vmem:[#allocation5 + $0x748] sm:$0xff]
    %v381 = vld [vmem:[#allocation5 + $0x750] sm:$0xff]
    %v382 = vld [vmem:[#allocation5 + $0x758] sm:$0xff]
    %v383 = vld [vmem:[#allocation5 + $0x760] sm:$0xff]
    %v384 = vld [vmem:[#allocation5 + $0x768] sm:$0xff]
    %v385 = vld [vmem:[#allocation5 + $0x770] sm:$0xff]
    %v386 = vld [vmem:[#allocation5 + $0x778] sm:$0xff]
    %v387 = vld [vmem:[#allocation5 + $0x780] sm:$0xff]
    %v388 = vld [vmem:[#allocation5 + $0x788] sm:$0xff]
    %v389 = vld [vmem:[#allocation5 + $0x790] sm:$0xff]
    %v390 = vld [vmem:[#allocation5 + $0x798] sm:$0xff]
    %v391 = vld [vmem:[#allocation5 + $0x7a0] sm:$0xff]
    %v392 = vld [vmem:[#allocation5 + $0x7a8] sm:$0xff]
    %v393 = vld [vmem:[#allocation5 + $0x7b0] sm:$0xff]
    %v394 = vld [vmem:[#allocation5 + $0x7b8] sm:$0xff]
    %v395 = vld [vmem:[#allocation5 + $0x7c0] sm:$0xff]
    %v396 = vld [vmem:[#allocation5 + $0x7c8] sm:$0xff]
    %v397 = vld [vmem:[#allocation5 + $0x7d0] sm:$0xff]
    %v398 = vld [vmem:[#allocation5 + $0x7d8] sm:$0xff]
    %v399 = vld [vmem:[#allocation5 + $0x7e0] sm:$0xff]
    %v400 = vld [vmem:[#allocation5 + $0x7e8] sm:$0xff]
    %v401 = vld [vmem:[#allocation5 + $0x7f0] sm:$0xff]
    %v402 = vld [vmem:[#allocation5 + $0x7f8] sm:$0xff]
    %v403 = vld [vmem:[#allocation5 + $0x800] sm:$0xff]
    %v404 = vld [vmem:[#allocation5 + $0x808] sm:$0xff]
    %v405 = vld [vmem:[#allocation5 + $0x810] sm:$0xff]
    %v406 = vld [vmem:[#allocation5 + $0x818] sm:$0xff]
    %v407 = vld [vmem:[#allocation5 + $0x820] sm:$0xff]
    %v408 = vld [vmem:[#allocation5 + $0x828] sm:$0xff]
    %v409 = vld [vmem:[#allocation5 + $0x830] sm:$0xff]
    %v410 = vld [vmem:[#allocation5 + $0x838] sm:$0xff]
    %v411 = vld [vmem:[#allocation5 + $0x840] sm:$0xff]
    %v412 = vld [vmem:[#allocation5 + $0x848] sm:$0xff]
    %v413 = vld [vmem:[#allocation5 + $0x850] sm:$0xff]
    %v414 = vld [vmem:[#allocation5 + $0x858] sm:$0xff]
    %v415 = vld [vmem:[#allocation5 + $0x860] sm:$0xff]
    %v416 = vld [vmem:[#allocation5 + $0x868] sm:$0xff]
    %v417 = vld [vmem:[#allocation5 + $0x870] sm:$0xff]
    %v418 = vld [vmem:[#allocation5 + $0x878] sm:$0xff]
    %v419 = vld [vmem:[#allocation5 + $0x880] sm:$0xff]
    %v420 = vld [vmem:[#allocation5 + $0x888] sm:$0xff]
    %v421 = vld [vmem:[#allocation5 + $0x890] sm:$0xff]
    %v422 = vld [vmem:[#allocation5 + $0x898] sm:$0xff]
    %v423 = vld [vmem:[#allocation5 + $0x8a0] sm:$0xff]
    %v424 = vld [vmem:[#allocation5 + $0x8a8] sm:$0xff]
    %v425 = vld [vmem:[#allocation5 + $0x8b0] sm:$0xff]
    %v426 = vld [vmem:[#allocation5 + $0x8b8] sm:$0xff]
    %v427 = vld [vmem:[#allocation5 + $0x8c0] sm:$0xff]
    %v428 = vld [vmem:[#allocation5 + $0x8c8] sm:$0xff]
    %v429 = vld [vmem:[#allocation5 + $0x8d0] sm:$0xff]
    %v430 = vld [vmem:[#allocation5 + $0x8d8] sm:$0xff]
    %v431 = vld [vmem:[#allocation5 + $0x8e0] sm:$0xff]
    %v432 = vld [vmem:[#allocation5 + $0x8e8] sm:$0xff]
    %v433 = vld [vmem:[#allocation5 + $0x8f0] sm:$0xff]
    %v434 = vld [vmem:[#allocation5 + $0x8f8] sm:$0xff]
    %v435 = vld [vmem:[#allocation5 + $0x900] sm:$0xff]
    %v436 = vld [vmem:[#allocation5 + $0x908] sm:$0xff]
    %v437 = vld [vmem:[#allocation5 + $0x910] sm:$0xff]
    %v438 = vld [vmem:[#allocation5 + $0x918] sm:$0xff]
    %v439 = vld [vmem:[#allocation5 + $0x920] sm:$0xff]
    %v440 = vld [vmem:[#allocation5 + $0x928] sm:$0xff]
    %v441 = vld [vmem:[#allocation5 + $0x930] sm:$0xff]
    %v442 = vld [vmem:[#allocation5 + $0x938] sm:$0xff]
    %v443 = vld [vmem:[#allocation5 + $0x940] sm:$0xff]
    %v444 = vld [vmem:[#allocation5 + $0x948] sm:$0xff]
    %v445 = vld [vmem:[#allocation5 + $0x950] sm:$0xff]
    %v446 = vld [vmem:[#allocation5 + $0x958] sm:$0xff]
    %v447 = vld [vmem:[#allocation5 + $0x960] sm:$0xff]
    %v448 = vld [vmem:[#allocation5 + $0x968] sm:$0xff]
    %v449 = vld [vmem:[#allocation5 + $0x970] sm:$0xff]
    %v450 = vld [vmem:[#allocation5 + $0x978] sm:$0xff]
    %v451 = vld [vmem:[#allocation5 + $0x980] sm:$0xff]
    %v452 = vld [vmem:[#allocation5 + $0x988] sm:$0xff]
    %v453 = vld [vmem:[#allocation5 + $0x990] sm:$0xff]
    %v454 = vld [vmem:[#allocation5 + $0x998] sm:$0xff]
    %v455 = vld [vmem:[#allocation5 + $0x9a0] sm:$0xff]
    %v456 = vld [vmem:[#allocation5 + $0x9a8] sm:$0xff]
    %v457 = vld [vmem:[#allocation5 + $0x9b0] sm:$0xff]
    %v458 = vld [vmem:[#allocation5 + $0x9b8] sm:$0xff]
    %v459 = vld [vmem:[#allocation5 + $0x9c0] sm:$0xff]
    %v460 = vld [vmem:[#allocation5 + $0x9c8] sm:$0xff]
    %v461 = vld [vmem:[#allocation5 + $0x9d0] sm:$0xff]
    %v462 = vld [vmem:[#allocation5 + $0x9d8] sm:$0xff]
    %v463 = vld [vmem:[#allocation5 + $0x9e0] sm:$0xff]
    %v464 = vld [vmem:[#allocation5 + $0x9e8] sm:$0xff]
    %v465 = vld [vmem:[#allocation5 + $0x9f0] sm:$0xff]
    %v466 = vld [vmem:[#allocation5 + $0x9f8] sm:$0xff]
    %v467 = vld [vmem:[#allocation5 + $0xa00] sm:$0xff]
    %v468 = vld [vmem:[#allocation5 + $0xa08] sm:$0xff]
    %v469 = vld [vmem:[#allocation5 + $0xa10] sm:$0xff]
    %v470 = vld [vmem:[#allocation5 + $0xa18] sm:$0xff]
    %v471 = vld [vmem:[#allocation5 + $0xa20] sm:$0xff]
    %v472 = vld [vmem:[#allocation5 + $0xa28] sm:$0xff]
    %v473 = vld [vmem:[#allocation5 + $0xa30] sm:$0xff]
    %v474 = vld [vmem:[#allocation5 + $0xa38] sm:$0xff]
    %v475 = vld [vmem:[#allocation5 + $0xa40] sm:$0xff]
    %v476 = vld [vmem:[#allocation5 + $0xa48] sm:$0xff]
    %v477 = vld [vmem:[#allocation5 + $0xa50] sm:$0xff]
    %v478 = vld [vmem:[#allocation5 + $0xa58] sm:$0xff]
    %v479 = vld [vmem:[#allocation5 + $0xa60] sm:$0xff]
    %v480 = vld [vmem:[#allocation5 + $0xa68] sm:$0xff]
    %v481 = vld [vmem:[#allocation5 + $0xa70] sm:$0xff]
    %v482 = vld [vmem:[#allocation5 + $0xa78] sm:$0xff]
    %v483 = vld [vmem:[#allocation5 + $0xa80] sm:$0xff]
    %v484 = vld [vmem:[#allocation5 + $0xa88] sm:$0xff]
    %v485 = vld [vmem:[#allocation5 + $0xa90] sm:$0xff]
    %v486 = vld [vmem:[#allocation5 + $0xa98] sm:$0xff]
    %v487 = vld [vmem:[#allocation5 + $0xaa0] sm:$0xff]
    %v488 = vld [vmem:[#allocation5 + $0xaa8] sm:$0xff]
    %v489 = vld [vmem:[#allocation5 + $0xab0] sm:$0xff]
    %v490 = vld [vmem:[#allocation5 + $0xab8] sm:$0xff]
    %v491 = vld [vmem:[#allocation5 + $0xac0] sm:$0xff]
    %v492 = vld [vmem:[#allocation5 + $0xac8] sm:$0xff]
    %v493 = vld [vmem:[#allocation5 + $0xad0] sm:$0xff]
    %v494 = vld [vmem:[#allocation5 + $0xad8] sm:$0xff]
    %v495 = vld [vmem:[#allocation5 + $0xae0] sm:$0xff]
    %v496 = vld [vmem:[#allocation5 + $0xae8] sm:$0xff]
    %v497 = vld [vmem:[#allocation5 + $0xaf0] sm:$0xff]
    %v498 = vld [vmem:[#allocation5 + $0xaf8] sm:$0xff]
    %v499 = vld [vmem:[#allocation5 + $0xb00] sm:$0xff]
    %v500 = vld [vmem:[#allocation5 + $0xb08] sm:$0xff]
    %v501 = vld [vmem:[#allocation5 + $0xb10] sm:$0xff]
    %v502 = vld [vmem:[#allocation5 + $0xb18] sm:$0xff]
    %v503 = vld [vmem:[#allocation5 + $0xb20] sm:$0xff]
    %v504 = vld [vmem:[#allocation5 + $0xb28] sm:$0xff]
    %v505 = vld [vmem:[#allocation5 + $0xb30] sm:$0xff]
    %v506 = vld [vmem:[#allocation5 + $0xb38] sm:$0xff]
    %v507 = vld [vmem:[#allocation5 + $0xb40] sm:$0xff]
    %v508 = vld [vmem:[#allocation5 + $0xb48] sm:$0xff]
    %v509 = vld [vmem:[#allocation5 + $0xb50] sm:$0xff]
    %v510 = vld [vmem:[#allocation5 + $0xb58] sm:$0xff]
    %v511 = vld [vmem:[#allocation5 + $0xb60] sm:$0xff]
    %v512 = vld [vmem:[#allocation5 + $0xb68] sm:$0xff]
    %v513 = vld [vmem:[#allocation5 + $0xb70] sm:$0xff]
    %v514 = vld [vmem:[#allocation5 + $0xb78] sm:$0xff]
    %v515 = vld [vmem:[#allocation5 + $0xb80] sm:$0xff]
    %v516 = vld [vmem:[#allocation5 + $0xb88] sm:$0xff]
    %v517 = vld [vmem:[#allocation5 + $0xb90] sm:$0xff]
    %v518 = vld [vmem:[#allocation5 + $0xb98] sm:$0xff]
    %v519 = vld [vmem:[#allocation5 + $0xba0] sm:$0xff]
    %v520 = vld [vmem:[#allocation5 + $0xba8] sm:$0xff]
    %v521 = vld [vmem:[#allocation5 + $0xbb0] sm:$0xff]
    %v522 = vld [vmem:[#allocation5 + $0xbb8] sm:$0xff]
    %v523 = vld [vmem:[#allocation5 + $0xbc0] sm:$0xff]
    %v524 = vld [vmem:[#allocation5 + $0xbc8] sm:$0xff]
    %v525 = vld [vmem:[#allocation5 + $0xbd0] sm:$0xff]
    %v526 = vld [vmem:[#allocation5 + $0xbd8] sm:$0xff]
    %v527 = vld [vmem:[#allocation5 + $0xbe0] sm:$0xff]
    %v528 = vld [vmem:[#allocation5 + $0xbe8] sm:$0xff]
    %v529 = vld [vmem:[#allocation5 + $0xbf0] sm:$0xff]
    %v530 = vld [vmem:[#allocation5 + $0xbf8] sm:$0xff]
    %v531 = vld [vmem:[#allocation5 + $0xc00] sm:$0xff]
    %v532 = vld [vmem:[#allocation5 + $0xc08] sm:$0xff]
    %v533 = vld [vmem:[#allocation5 + $0xc10] sm:$0xff]
    %v534 = vld [vmem:[#allocation5 + $0xc18] sm:$0xff]
    %v535 = vld [vmem:[#allocation5 + $0xc20] sm:$0xff]
    %v536 = vld [vmem:[#allocation5 + $0xc28] sm:$0xff]
    %v537 = vld [vmem:[#allocation5 + $0xc30] sm:$0xff]
    %v538 = vld [vmem:[#allocation5 + $0xc38] sm:$0xff]
    %v539 = vld [vmem:[#allocation7] sm:$0xff]
    %v541 = vlaneseq
    %v542 = vshrl.u32 %v541, 7
    %v543 = vsub.s32 0, %v542
    %v544 = vrot.slane %v539, %v543
    %v545 = vlaneseq
    %v546 = vshrl.u32 %v545, 7
    %v547 = vsub.s32 1, %v546
    %v548 = vrot.slane %v539, %v547
    %v549 = vlaneseq
    %v550 = vshrl.u32 %v549, 7
    %v551 = vsub.s32 2, %v550
    %v552 = vrot.slane %v539, %v551
    %v553 = vlaneseq
    %v554 = vshrl.u32 %v553, 7
    %v555 = vsub.s32 3, %v554
    %v556 = vrot.slane %v539, %v555
    %v557 = vlaneseq
    %v558 = vshrl.u32 %v557, 7
    %v559 = vsub.s32 4, %v558
    %v560 = vrot.slane %v539, %v559
    %v561 = vlaneseq
    %v562 = vshrl.u32 %v561, 7
    %v563 = vsub.s32 5, %v562
    %v564 = vrot.slane %v539, %v563
    %v565 = vlaneseq
    %v566 = vshrl.u32 %v565, 7
    %v567 = vsub.s32 6, %v566
    %v568 = vrot.slane %v539, %v567
    %v569 = vlaneseq
    %v570 = vshrl.u32 %v569, 7
    %v571 = vsub.s32 7, %v570
    %v572 = vrot.slane %v539, %v571
    %v973 = vunpack.c.l.b16 %v147
    %v974 = vunpack.c.h.b16 %v147
    %v975 = vunpack.c.l.b16 %v148
    %v976 = vunpack.c.h.b16 %v148
    %v977 = vunpack.c.l.b16 %v149
    %v978 = vunpack.c.h.b16 %v149
    %v979 = vunpack.c.l.b16 %v150
    %v980 = vunpack.c.h.b16 %v150
    %v981 = vunpack.c.l.b16 %v151
    %v982 = vunpack.c.h.b16 %v151
    %v983 = vunpack.c.l.b16 %v152
    %v984 = vunpack.c.h.b16 %v152
    %v985 = vunpack.c.l.b16 %v153
    %v986 = vunpack.c.h.b16 %v153
    %v987 = vunpack.c.l.b16 %v154
    %v988 = vunpack.c.h.b16 %v154
    %v989 = vunpack.c.l.b16 %v155
    %v990 = vunpack.c.h.b16 %v155
    %v991 = vunpack.c.l.b16 %v156
    %v992 = vunpack.c.h.b16 %v156
    %v993 = vunpack.c.l.b16 %v157
    %v994 = vunpack.c.h.b16 %v157
    %v995 = vunpack.c.l.b16 %v158
    %v996 = vunpack.c.h.b16 %v158
    %v997 = vunpack.c.l.b16 %v159
    %v998 = vunpack.c.h.b16 %v159
    %v999 = vunpack.c.l.b16 %v160
    %v1000 = vunpack.c.h.b16 %v160
    %v1001 = vunpack.c.l.b16 %v161
    %v1002 = vunpack.c.h.b16 %v161
    %v1003 = vunpack.c.l.b16 %v162
    %v1004 = vunpack.c.h.b16 %v162
    %v1005 = vunpack.c.l.b16 %v163
    %v1006 = vunpack.c.h.b16 %v163
    %v1007 = vunpack.c.l.b16 %v164
    %v1008 = vunpack.c.h.b16 %v164
    %v1009 = vunpack.c.l.b16 %v165
    %v1010 = vunpack.c.h.b16 %v165
    %v1011 = vunpack.c.l.b16 %v166
    %v1012 = vunpack.c.h.b16 %v166
    %v1013 = vunpack.c.l.b16 %v167
    %v1014 = vunpack.c.h.b16 %v167
    %v1015 = vunpack.c.l.b16 %v168
    %v1016 = vunpack.c.h.b16 %v168
    %v1017 = vunpack.c.l.b16 %v169
    %v1018 = vunpack.c.h.b16 %v169
    %v1019 = vunpack.c.l.b16 %v170
    %v1020 = vunpack.c.h.b16 %v170
    %v1021 = vunpack.c.l.b16 %v171
    %v1022 = vunpack.c.h.b16 %v171
    %v1023 = vunpack.c.l.b16 %v172
    %v1024 = vunpack.c.h.b16 %v172
    %v1025 = vunpack.c.l.b16 %v173
    %v1026 = vunpack.c.h.b16 %v173
    %v1027 = vunpack.c.l.b16 %v174
    %v1028 = vunpack.c.h.b16 %v174
    %v1029 = vunpack.c.l.b16 %v175
    %v1030 = vunpack.c.h.b16 %v175
    %v1031 = vunpack.c.l.b16 %v176
    %v1032 = vunpack.c.h.b16 %v176
    %v1033 = vunpack.c.l.b16 %v177
    %v1034 = vunpack.c.h.b16 %v177
    %v1035 = vunpack.c.l.b16 %v178
    %v1036 = vunpack.c.h.b16 %v178
    %v1037 = vunpack.c.l.b16 %v179
    %v1038 = vunpack.c.h.b16 %v179
    %v1039 = vunpack.c.l.b16 %v180
    %v1040 = vunpack.c.h.b16 %v180
    %v1041 = vunpack.c.l.b16 %v181
    %v1042 = vunpack.c.h.b16 %v181
    %v1043 = vunpack.c.l.b16 %v182
    %v1044 = vunpack.c.h.b16 %v182
    %v1045 = vunpack.c.l.b16 %v183
    %v1046 = vunpack.c.h.b16 %v183
    %v1047 = vunpack.c.l.b16 %v184
    %v1048 = vunpack.c.h.b16 %v184
    %v1049 = vunpack.c.l.b16 %v185
    %v1050 = vunpack.c.h.b16 %v185
    %v1051 = vunpack.c.l.b16 %v186
    %v1052 = vunpack.c.h.b16 %v186
    %v1053 = vunpack.c.l.b16 %v187
    %v1054 = vunpack.c.h.b16 %v187
    %v1055 = vunpack.c.l.b16 %v188
    %v1056 = vunpack.c.h.b16 %v188
    %v1057 = vunpack.c.l.b16 %v189
    %v1058 = vunpack.c.h.b16 %v189
    %v1059 = vunpack.c.l.b16 %v190
    %v1060 = vunpack.c.h.b16 %v190
    %v1061 = vunpack.c.l.b16 %v191
    %v1062 = vunpack.c.h.b16 %v191
    %v1063 = vunpack.c.l.b16 %v192
    %v1064 = vunpack.c.h.b16 %v192
    %v1065 = vunpack.c.l.b16 %v193
    %v1066 = vunpack.c.h.b16 %v193
    %v1067 = vunpack.c.l.b16 %v194
    %v1068 = vunpack.c.h.b16 %v194
    %v1069 = vunpack.c.l.b16 %v195
    %v1070 = vunpack.c.h.b16 %v195
    %v1071 = vunpack.c.l.b16 %v196
    %v1072 = vunpack.c.h.b16 %v196
    %v1073 = vunpack.c.l.b16 %v197
    %v1074 = vunpack.c.h.b16 %v197
    %v1075 = vunpack.c.l.b16 %v198
    %v1076 = vunpack.c.h.b16 %v198
    %v1077 = vunpack.c.l.b16 %v199
    %v1078 = vunpack.c.h.b16 %v199
    %v1079 = vunpack.c.l.b16 %v200
    %v1080 = vunpack.c.h.b16 %v200
    %v1081 = vunpack.c.l.b16 %v201
    %v1082 = vunpack.c.h.b16 %v201
    %v1083 = vunpack.c.l.b16 %v202
    %v1084 = vunpack.c.h.b16 %v202
    %v1085 = vunpack.c.l.b16 %v203
    %v1086 = vunpack.c.h.b16 %v203
    %v1087 = vunpack.c.l.b16 %v204
    %v1088 = vunpack.c.h.b16 %v204
    %v1089 = vunpack.c.l.b16 %v205
    %v1090 = vunpack.c.h.b16 %v205
    %v1091 = vunpack.c.l.b16 %v206
    %v1092 = vunpack.c.h.b16 %v206
    %v1093 = vunpack.c.l.b16 %v207
    %v1094 = vunpack.c.h.b16 %v207
    %v1095 = vunpack.c.l.b16 %v208
    %v1096 = vunpack.c.h.b16 %v208
    %v1097 = vunpack.c.l.b16 %v209
    %v1098 = vunpack.c.h.b16 %v209
    %v1099 = vunpack.c.l.b16 %v210
    %v1100 = vunpack.c.h.b16 %v210
    %v1101 = vunpack.c.l.b16 %v211
    %v1102 = vunpack.c.h.b16 %v211
    %v1103 = vunpack.c.l.b16 %v212
    %v1104 = vunpack.c.h.b16 %v212
    %v1105 = vunpack.c.l.b16 %v213
    %v1106 = vunpack.c.h.b16 %v213
    %v1107 = vunpack.c.l.b16 %v214
    %v1108 = vunpack.c.h.b16 %v214
    %v1109 = vunpack.c.l.b16 %v215
    %v1110 = vunpack.c.h.b16 %v215
    %v1111 = vunpack.c.l.b16 %v216
    %v1112 = vunpack.c.h.b16 %v216
    %v1113 = vunpack.c.l.b16 %v217
    %v1114 = vunpack.c.h.b16 %v217
    %v1115 = vunpack.c.l.b16 %v218
    %v1116 = vunpack.c.h.b16 %v218
    %v1117 = vunpack.c.l.b16 %v219
    %v1118 = vunpack.c.h.b16 %v219
    %v1119 = vunpack.c.l.b16 %v220
    %v1120 = vunpack.c.h.b16 %v220
    %v1121 = vunpack.c.l.b16 %v221
    %v1122 = vunpack.c.h.b16 %v221
    %v1123 = vunpack.c.l.b16 %v222
    %v1124 = vunpack.c.h.b16 %v222
    %v1125 = vunpack.c.l.b16 %v223
    %v1126 = vunpack.c.h.b16 %v223
    %v1127 = vunpack.c.l.b16 %v224
    %v1128 = vunpack.c.h.b16 %v224
    %v1129 = vunpack.c.l.b16 %v225
    %v1130 = vunpack.c.h.b16 %v225
    %v1131 = vunpack.c.l.b16 %v226
    %v1132 = vunpack.c.h.b16 %v226
    %v1133 = vunpack.c.l.b16 %v227
    %v1134 = vunpack.c.h.b16 %v227
    %v1135 = vunpack.c.l.b16 %v228
    %v1136 = vunpack.c.h.b16 %v228
    %v1137 = vunpack.c.l.b16 %v229
    %v1138 = vunpack.c.h.b16 %v229
    %v1139 = vunpack.c.l.b16 %v230
    %v1140 = vunpack.c.h.b16 %v230
    %v1141 = vunpack.c.l.b16 %v231
    %v1142 = vunpack.c.h.b16 %v231
    %v1143 = vunpack.c.l.b16 %v232
    %v1144 = vunpack.c.h.b16 %v232
    %v1145 = vunpack.c.l.b16 %v233
    %v1146 = vunpack.c.h.b16 %v233
    %v1147 = vunpack.c.l.b16 %v234
    %v1148 = vunpack.c.h.b16 %v234
    %v1149 = vunpack.c.l.b16 %v235
    %v1150 = vunpack.c.h.b16 %v235
    %v1151 = vunpack.c.l.b16 %v236
    %v1152 = vunpack.c.h.b16 %v236
    %v1153 = vunpack.c.l.b16 %v237
    %v1154 = vunpack.c.h.b16 %v237
    %v1155 = vunpack.c.l.b16 %v238
    %v1156 = vunpack.c.h.b16 %v238
    %v1157 = vunpack.c.l.b16 %v239
    %v1158 = vunpack.c.h.b16 %v239
    %v1159 = vunpack.c.l.b16 %v240
    %v1160 = vunpack.c.h.b16 %v240
    %v1161 = vunpack.c.l.b16 %v241
    %v1162 = vunpack.c.h.b16 %v241
    %v1163 = vunpack.c.l.b16 %v242
    %v1164 = vunpack.c.h.b16 %v242
    %v1165 = vunpack.c.l.b16 %v243
    %v1166 = vunpack.c.h.b16 %v243
    %v1167 = vunpack.c.l.b16 %v244
    %v1168 = vunpack.c.h.b16 %v244
    %v1169 = vunpack.c.l.b16 %v245
    %v1170 = vunpack.c.h.b16 %v245
    %v1171 = vunpack.c.l.b16 %v246
    %v1172 = vunpack.c.h.b16 %v246
    %v1173 = vunpack.c.l.b16 %v247
    %v1174 = vunpack.c.h.b16 %v247
    %v1175 = vunpack.c.l.b16 %v248
    %v1176 = vunpack.c.h.b16 %v248
    %v1177 = vunpack.c.l.b16 %v249
    %v1178 = vunpack.c.h.b16 %v249
    %v1179 = vunpack.c.l.b16 %v250
    %v1180 = vunpack.c.h.b16 %v250
    %v1181 = vunpack.c.l.b16 %v251
    %v1182 = vunpack.c.h.b16 %v251
    %v1183 = vunpack.c.l.b16 %v252
    %v1184 = vunpack.c.h.b16 %v252
    %v1185 = vunpack.c.l.b16 %v253
    %v1186 = vunpack.c.h.b16 %v253
    %v1187 = vunpack.c.l.b16 %v254
    %v1188 = vunpack.c.h.b16 %v254
    %v1189 = vunpack.c.l.b16 %v255
    %v1190 = vunpack.c.h.b16 %v255
    %v1191 = vunpack.c.l.b16 %v256
    %v1192 = vunpack.c.h.b16 %v256
    %v1193 = vunpack.c.l.b16 %v257
    %v1194 = vunpack.c.h.b16 %v257
    %v1195 = vunpack.c.l.b16 %v258
    %v1196 = vunpack.c.h.b16 %v258
    %v1197 = vunpack.c.l.b16 %v259
    %v1198 = vunpack.c.h.b16 %v259
    %v1199 = vunpack.c.l.b16 %v260
    %v1200 = vunpack.c.h.b16 %v260
    %v1201 = vunpack.c.l.b16 %v261
    %v1202 = vunpack.c.h.b16 %v261
    %v1203 = vunpack.c.l.b16 %v262
    %v1204 = vunpack.c.h.b16 %v262
    %v1205 = vunpack.c.l.b16 %v263
    %v1206 = vunpack.c.h.b16 %v263
    %v1207 = vunpack.c.l.b16 %v264
    %v1208 = vunpack.c.h.b16 %v264
    %v1209 = vunpack.c.l.b16 %v265
    %v1210 = vunpack.c.h.b16 %v265
    %v1211 = vunpack.c.l.b16 %v266
    %v1212 = vunpack.c.h.b16 %v266
    %v1213 = vunpack.c.l.b16 %v267
    %v1214 = vunpack.c.h.b16 %v267
    %v1215 = vunpack.c.l.b16 %v268
    %v1216 = vunpack.c.h.b16 %v268
    %v1217 = vunpack.c.l.b16 %v269
    %v1218 = vunpack.c.h.b16 %v269
    %v1219 = vunpack.c.l.b16 %v270
    %v1220 = vunpack.c.h.b16 %v270
    %v1221 = vunpack.c.l.b16 %v271
    %v1222 = vunpack.c.h.b16 %v271
    %v1223 = vunpack.c.l.b16 %v272
    %v1224 = vunpack.c.h.b16 %v272
    %v1225 = vunpack.c.l.b16 %v273
    %v1226 = vunpack.c.h.b16 %v273
    %v1227 = vunpack.c.l.b16 %v274
    %v1228 = vunpack.c.h.b16 %v274
    %v1229 = vunpack.c.l.b16 %v275
    %v1230 = vunpack.c.h.b16 %v275
    %v1231 = vunpack.c.l.b16 %v276
    %v1232 = vunpack.c.h.b16 %v276
    %v1233 = vunpack.c.l.b16 %v277
    %v1234 = vunpack.c.h.b16 %v277
    %v1235 = vunpack.c.l.b16 %v278
    %v1236 = vunpack.c.h.b16 %v278
    %v1237 = vunpack.c.l.b16 %v279
    %v1238 = vunpack.c.h.b16 %v279
    %v1239 = vunpack.c.l.b16 %v280
    %v1240 = vunpack.c.h.b16 %v280
    %v1241 = vunpack.c.l.b16 %v281
    %v1242 = vunpack.c.h.b16 %v281
    %v1243 = vunpack.c.l.b16 %v282
    %v1244 = vunpack.c.h.b16 %v282
    %v1245 = vunpack.c.l.b16 %v283
    %v1246 = vunpack.c.h.b16 %v283
    %v1247 = vunpack.c.l.b16 %v284
    %v1248 = vunpack.c.h.b16 %v284
    %v1249 = vunpack.c.l.b16 %v285
    %v1250 = vunpack.c.h.b16 %v285
    %v1251 = vunpack.c.l.b16 %v286
    %v1252 = vunpack.c.h.b16 %v286
    %v1253 = vunpack.c.l.b16 %v287
    %v1254 = vunpack.c.h.b16 %v287
    %v1255 = vunpack.c.l.b16 %v288
    %v1256 = vunpack.c.h.b16 %v288
    %v1257 = vunpack.c.l.b16 %v289
    %v1258 = vunpack.c.h.b16 %v289
    %v1259 = vunpack.c.l.b16 %v290
    %v1260 = vunpack.c.h.b16 %v290
    %v1261 = vunpack.c.l.b16 %v291
    %v1262 = vunpack.c.h.b16 %v291
    %v1263 = vunpack.c.l.b16 %v292
    %v1264 = vunpack.c.h.b16 %v292
    %v1265 = vunpack.c.l.b16 %v293
    %v1266 = vunpack.c.h.b16 %v293
    %v1267 = vunpack.c.l.b16 %v294
    %v1268 = vunpack.c.h.b16 %v294
    %v1269 = vunpack.c.l.b16 %v295
    %v1270 = vunpack.c.h.b16 %v295
    %v1271 = vunpack.c.l.b16 %v296
    %v1272 = vunpack.c.h.b16 %v296
    %v1273 = vunpack.c.l.b16 %v297
    %v1274 = vunpack.c.h.b16 %v297
    %v1275 = vunpack.c.l.b16 %v298
    %v1276 = vunpack.c.h.b16 %v298
    %v1277 = vunpack.c.l.b16 %v299
    %v1278 = vunpack.c.h.b16 %v299
    %v1279 = vunpack.c.l.b16 %v300
    %v1280 = vunpack.c.h.b16 %v300
    %v1281 = vunpack.c.l.b16 %v301
    %v1282 = vunpack.c.h.b16 %v301
    %v1283 = vunpack.c.l.b16 %v302
    %v1284 = vunpack.c.h.b16 %v302
    %v1285 = vunpack.c.l.b16 %v303
    %v1286 = vunpack.c.h.b16 %v303
    %v1287 = vunpack.c.l.b16 %v304
    %v1288 = vunpack.c.h.b16 %v304
    %v1289 = vunpack.c.l.b16 %v305
    %v1290 = vunpack.c.h.b16 %v305
    %v1291 = vunpack.c.l.b16 %v306
    %v1292 = vunpack.c.h.b16 %v306
    %v1293 = vunpack.c.l.b16 %v307
    %v1294 = vunpack.c.h.b16 %v307
    %v1295 = vunpack.c.l.b16 %v308
    %v1296 = vunpack.c.h.b16 %v308
    %v1297 = vunpack.c.l.b16 %v309
    %v1298 = vunpack.c.h.b16 %v309
    %v1299 = vunpack.c.l.b16 %v310
    %v1300 = vunpack.c.h.b16 %v310
    %v1301 = vunpack.c.l.b16 %v311
    %v1302 = vunpack.c.h.b16 %v311
    %v1303 = vunpack.c.l.b16 %v312
    %v1304 = vunpack.c.h.b16 %v312
    %v1305 = vunpack.c.l.b16 %v313
    %v1306 = vunpack.c.h.b16 %v313
    %v1307 = vunpack.c.l.b16 %v314
    %v1308 = vunpack.c.h.b16 %v314
    %v1309 = vunpack.c.l.b16 %v315
    %v1310 = vunpack.c.h.b16 %v315
    %v1311 = vunpack.c.l.b16 %v316
    %v1312 = vunpack.c.h.b16 %v316
    %v1313 = vunpack.c.l.b16 %v317
    %v1314 = vunpack.c.h.b16 %v317
    %v1315 = vunpack.c.l.b16 %v318
    %v1316 = vunpack.c.h.b16 %v318
    %v1317 = vunpack.c.l.b16 %v319
    %v1318 = vunpack.c.h.b16 %v319
    %v1319 = vunpack.c.l.b16 %v320
    %v1320 = vunpack.c.h.b16 %v320
    %v1321 = vunpack.c.l.b16 %v321
    %v1322 = vunpack.c.h.b16 %v321
    %v1323 = vunpack.c.l.b16 %v322
    %v1324 = vunpack.c.h.b16 %v322
    %v1325 = vunpack.c.l.b16 %v323
    %v1326 = vunpack.c.h.b16 %v323
    %v1327 = vunpack.c.l.b16 %v324
    %v1328 = vunpack.c.h.b16 %v324
    %v1329 = vunpack.c.l.b16 %v325
    %v1330 = vunpack.c.h.b16 %v325
    %v1331 = vunpack.c.l.b16 %v326
    %v1332 = vunpack.c.h.b16 %v326
    %v1333 = vunpack.c.l.b16 %v327
    %v1334 = vunpack.c.h.b16 %v327
    %v1335 = vunpack.c.l.b16 %v328
    %v1336 = vunpack.c.h.b16 %v328
    %v1337 = vunpack.c.l.b16 %v329
    %v1338 = vunpack.c.h.b16 %v329
    %v1339 = vunpack.c.l.b16 %v330
    %v1340 = vunpack.c.h.b16 %v330
    %v1341 = vunpack.c.l.b16 %v331
    %v1342 = vunpack.c.h.b16 %v331
    %v1343 = vunpack.c.l.b16 %v332
    %v1344 = vunpack.c.h.b16 %v332
    %v1345 = vunpack.c.l.b16 %v333
    %v1346 = vunpack.c.h.b16 %v333
    %v1347 = vunpack.c.l.b16 %v334
    %v1348 = vunpack.c.h.b16 %v334
    %v1349 = vunpack.c.l.b16 %v335
    %v1350 = vunpack.c.h.b16 %v335
    %v1351 = vunpack.c.l.b16 %v336
    %v1352 = vunpack.c.h.b16 %v336
    %v1353 = vunpack.c.l.b16 %v337
    %v1354 = vunpack.c.h.b16 %v337
    %v1355 = vunpack.c.l.b16 %v338
    %v1356 = vunpack.c.h.b16 %v338
    %v1357 = vunpack.c.l.b16 %v339
    %v1358 = vunpack.c.h.b16 %v339
    %v1359 = vunpack.c.l.b16 %v340
    %v1360 = vunpack.c.h.b16 %v340
    %v1361 = vunpack.c.l.b16 %v341
    %v1362 = vunpack.c.h.b16 %v341
    %v1363 = vunpack.c.l.b16 %v342
    %v1364 = vunpack.c.h.b16 %v342
    %v1365 = vunpack.c.l.b16 %v343
    %v1366 = vunpack.c.h.b16 %v343
    %v1367 = vunpack.c.l.b16 %v344
    %v1368 = vunpack.c.h.b16 %v344
    %v1369 = vunpack.c.l.b16 %v345
    %v1370 = vunpack.c.h.b16 %v345
    %v1371 = vunpack.c.l.b16 %v346
    %v1372 = vunpack.c.h.b16 %v346
    %v1373 = vunpack.c.l.b16 %v347
    %v1374 = vunpack.c.h.b16 %v347
    %v1375 = vunpack.c.l.b16 %v348
    %v1376 = vunpack.c.h.b16 %v348
    %v1377 = vunpack.c.l.b16 %v349
    %v1378 = vunpack.c.h.b16 %v349
    %v1379 = vunpack.c.l.b16 %v350
    %v1380 = vunpack.c.h.b16 %v350
    %v1381 = vunpack.c.l.b16 %v351
    %v1382 = vunpack.c.h.b16 %v351
    %v1383 = vunpack.c.l.b16 %v352
    %v1384 = vunpack.c.h.b16 %v352
    %v1385 = vunpack.c.l.b16 %v353
    %v1386 = vunpack.c.h.b16 %v353
    %v1387 = vunpack.c.l.b16 %v354
    %v1388 = vunpack.c.h.b16 %v354
    %v1389 = vunpack.c.l.b16 %v355
    %v1390 = vunpack.c.h.b16 %v355
    %v1391 = vunpack.c.l.b16 %v356
    %v1392 = vunpack.c.h.b16 %v356
    %v1393 = vunpack.c.l.b16 %v357
    %v1394 = vunpack.c.h.b16 %v357
    %v1395 = vunpack.c.l.b16 %v358
    %v1396 = vunpack.c.h.b16 %v358
    %v1397 = vunpack.c.l.b16 %v359
    %v1398 = vunpack.c.h.b16 %v359
    %v1399 = vunpack.c.l.b16 %v360
    %v1400 = vunpack.c.h.b16 %v360
    %v1401 = vunpack.c.l.b16 %v361
    %v1402 = vunpack.c.h.b16 %v361
    %v1403 = vunpack.c.l.b16 %v362
    %v1404 = vunpack.c.h.b16 %v362
    %v1405 = vunpack.c.l.b16 %v363
    %v1406 = vunpack.c.h.b16 %v363
    %v1407 = vunpack.c.l.b16 %v364
    %v1408 = vunpack.c.h.b16 %v364
    %v1409 = vunpack.c.l.b16 %v365
    %v1410 = vunpack.c.h.b16 %v365
    %v1411 = vunpack.c.l.b16 %v366
    %v1412 = vunpack.c.h.b16 %v366
    %v1413 = vunpack.c.l.b16 %v367
    %v1414 = vunpack.c.h.b16 %v367
    %v1415 = vunpack.c.l.b16 %v368
    %v1416 = vunpack.c.h.b16 %v368
    %v1417 = vunpack.c.l.b16 %v369
    %v1418 = vunpack.c.h.b16 %v369
    %v1419 = vunpack.c.l.b16 %v370
    %v1420 = vunpack.c.h.b16 %v370
    %v1421 = vunpack.c.l.b16 %v371
    %v1422 = vunpack.c.h.b16 %v371
    %v1423 = vunpack.c.l.b16 %v372
    %v1424 = vunpack.c.h.b16 %v372
    %v1425 = vunpack.c.l.b16 %v373
    %v1426 = vunpack.c.h.b16 %v373
    %v1427 = vunpack.c.l.b16 %v374
    %v1428 = vunpack.c.h.b16 %v374
    %v1429 = vunpack.c.l.b16 %v375
    %v1430 = vunpack.c.h.b16 %v375
    %v1431 = vunpack.c.l.b16 %v376
    %v1432 = vunpack.c.h.b16 %v376
    %v1433 = vunpack.c.l.b16 %v377
    %v1434 = vunpack.c.h.b16 %v377
    %v1435 = vunpack.c.l.b16 %v378
    %v1436 = vunpack.c.h.b16 %v378
    %v1437 = vunpack.c.l.b16 %v379
    %v1438 = vunpack.c.h.b16 %v379
    %v1439 = vunpack.c.l.b16 %v380
    %v1440 = vunpack.c.h.b16 %v380
    %v1441 = vunpack.c.l.b16 %v381
    %v1442 = vunpack.c.h.b16 %v381
    %v1443 = vunpack.c.l.b16 %v382
    %v1444 = vunpack.c.h.b16 %v382
    %v1445 = vunpack.c.l.b16 %v383
    %v1446 = vunpack.c.h.b16 %v383
    %v1447 = vunpack.c.l.b16 %v384
    %v1448 = vunpack.c.h.b16 %v384
    %v1449 = vunpack.c.l.b16 %v385
    %v1450 = vunpack.c.h.b16 %v385
    %v1451 = vunpack.c.l.b16 %v386
    %v1452 = vunpack.c.h.b16 %v386
    %v1453 = vunpack.c.l.b16 %v387
    %v1454 = vunpack.c.h.b16 %v387
    %v1455 = vunpack.c.l.b16 %v388
    %v1456 = vunpack.c.h.b16 %v388
    %v1457 = vunpack.c.l.b16 %v389
    %v1458 = vunpack.c.h.b16 %v389
    %v1459 = vunpack.c.l.b16 %v390
    %v1460 = vunpack.c.h.b16 %v390
    %v1461 = vunpack.c.l.b16 %v391
    %v1462 = vunpack.c.h.b16 %v391
    %v1463 = vunpack.c.l.b16 %v392
    %v1464 = vunpack.c.h.b16 %v392
    %v1465 = vunpack.c.l.b16 %v393
    %v1466 = vunpack.c.h.b16 %v393
    %v1467 = vunpack.c.l.b16 %v394
    %v1468 = vunpack.c.h.b16 %v394
    %v1469 = vunpack.c.l.b16 %v395
    %v1470 = vunpack.c.h.b16 %v395
    %v1471 = vunpack.c.l.b16 %v396
    %v1472 = vunpack.c.h.b16 %v396
    %v1473 = vunpack.c.l.b16 %v397
    %v1474 = vunpack.c.h.b16 %v397
    %v1475 = vunpack.c.l.b16 %v398
    %v1476 = vunpack.c.h.b16 %v398
    %v1477 = vunpack.c.l.b16 %v399
    %v1478 = vunpack.c.h.b16 %v399
    %v1479 = vunpack.c.l.b16 %v400
    %v1480 = vunpack.c.h.b16 %v400
    %v1481 = vunpack.c.l.b16 %v401
    %v1482 = vunpack.c.h.b16 %v401
    %v1483 = vunpack.c.l.b16 %v402
    %v1484 = vunpack.c.h.b16 %v402
    %v1485 = vunpack.c.l.b16 %v403
    %v1486 = vunpack.c.h.b16 %v403
    %v1487 = vunpack.c.l.b16 %v404
    %v1488 = vunpack.c.h.b16 %v404
    %v1489 = vunpack.c.l.b16 %v405
    %v1490 = vunpack.c.h.b16 %v405
    %v1491 = vunpack.c.l.b16 %v406
    %v1492 = vunpack.c.h.b16 %v406
    %v1493 = vunpack.c.l.b16 %v407
    %v1494 = vunpack.c.h.b16 %v407
    %v1495 = vunpack.c.l.b16 %v408
    %v1496 = vunpack.c.h.b16 %v408
    %v1497 = vunpack.c.l.b16 %v409
    %v1498 = vunpack.c.h.b16 %v409
    %v1499 = vunpack.c.l.b16 %v410
    %v1500 = vunpack.c.h.b16 %v410
    %v1501 = vunpack.c.l.b16 %v411
    %v1502 = vunpack.c.h.b16 %v411
    %v1503 = vunpack.c.l.b16 %v412
    %v1504 = vunpack.c.h.b16 %v412
    %v1505 = vunpack.c.l.b16 %v413
    %v1506 = vunpack.c.h.b16 %v413
    %v1507 = vunpack.c.l.b16 %v414
    %v1508 = vunpack.c.h.b16 %v414
    %v1509 = vunpack.c.l.b16 %v415
    %v1510 = vunpack.c.h.b16 %v415
    %v1511 = vunpack.c.l.b16 %v416
    %v1512 = vunpack.c.h.b16 %v416
    %v1513 = vunpack.c.l.b16 %v417
    %v1514 = vunpack.c.h.b16 %v417
    %v1515 = vunpack.c.l.b16 %v418
    %v1516 = vunpack.c.h.b16 %v418
    %v1517 = vunpack.c.l.b16 %v419
    %v1518 = vunpack.c.h.b16 %v419
    %v1519 = vunpack.c.l.b16 %v420
    %v1520 = vunpack.c.h.b16 %v420
    %v1521 = vunpack.c.l.b16 %v421
    %v1522 = vunpack.c.h.b16 %v421
    %v1523 = vunpack.c.l.b16 %v422
    %v1524 = vunpack.c.h.b16 %v422
    %v1525 = vunpack.c.l.b16 %v423
    %v1526 = vunpack.c.h.b16 %v423
    %v1527 = vunpack.c.l.b16 %v424
    %v1528 = vunpack.c.h.b16 %v424
    %v1529 = vunpack.c.l.b16 %v425
    %v1530 = vunpack.c.h.b16 %v425
    %v1531 = vunpack.c.l.b16 %v426
    %v1532 = vunpack.c.h.b16 %v426
    %v1533 = vunpack.c.l.b16 %v427
    %v1534 = vunpack.c.h.b16 %v427
    %v1535 = vunpack.c.l.b16 %v428
    %v1536 = vunpack.c.h.b16 %v428
    %v1537 = vunpack.c.l.b16 %v429
    %v1538 = vunpack.c.h.b16 %v429
    %v1539 = vunpack.c.l.b16 %v430
    %v1540 = vunpack.c.h.b16 %v430
    %v1541 = vunpack.c.l.b16 %v431
    %v1542 = vunpack.c.h.b16 %v431
    %v1543 = vunpack.c.l.b16 %v432
    %v1544 = vunpack.c.h.b16 %v432
    %v1545 = vunpack.c.l.b16 %v433
    %v1546 = vunpack.c.h.b16 %v433
    %v1547 = vunpack.c.l.b16 %v434
    %v1548 = vunpack.c.h.b16 %v434
    %v1549 = vunpack.c.l.b16 %v435
    %v1550 = vunpack.c.h.b16 %v435
    %v1551 = vunpack.c.l.b16 %v436
    %v1552 = vunpack.c.h.b16 %v436
    %v1553 = vunpack.c.l.b16 %v437
    %v1554 = vunpack.c.h.b16 %v437
    %v1555 = vunpack.c.l.b16 %v438
    %v1556 = vunpack.c.h.b16 %v438
    %v1557 = vunpack.c.l.b16 %v439
    %v1558 = vunpack.c.h.b16 %v439
    %v1559 = vunpack.c.l.b16 %v440
    %v1560 = vunpack.c.h.b16 %v440
    %v1561 = vunpack.c.l.b16 %v441
    %v1562 = vunpack.c.h.b16 %v441
    %v1563 = vunpack.c.l.b16 %v442
    %v1564 = vunpack.c.h.b16 %v442
    %v1565 = vunpack.c.l.b16 %v443
    %v1566 = vunpack.c.h.b16 %v443
    %v1567 = vunpack.c.l.b16 %v444
    %v1568 = vunpack.c.h.b16 %v444
    %v1569 = vunpack.c.l.b16 %v445
    %v1570 = vunpack.c.h.b16 %v445
    %v1571 = vunpack.c.l.b16 %v446
    %v1572 = vunpack.c.h.b16 %v446
    %v1573 = vunpack.c.l.b16 %v447
    %v1574 = vunpack.c.h.b16 %v447
    %v1575 = vunpack.c.l.b16 %v448
    %v1576 = vunpack.c.h.b16 %v448
    %v1577 = vunpack.c.l.b16 %v449
    %v1578 = vunpack.c.h.b16 %v449
    %v1579 = vunpack.c.l.b16 %v450
    %v1580 = vunpack.c.h.b16 %v450
    %v1581 = vunpack.c.l.b16 %v451
    %v1582 = vunpack.c.h.b16 %v451
    %v1583 = vunpack.c.l.b16 %v452
    %v1584 = vunpack.c.h.b16 %v452
    %v1585 = vunpack.c.l.b16 %v453
    %v1586 = vunpack.c.h.b16 %v453
    %v1587 = vunpack.c.l.b16 %v454
    %v1588 = vunpack.c.h.b16 %v454
    %v1589 = vunpack.c.l.b16 %v455
    %v1590 = vunpack.c.h.b16 %v455
    %v1591 = vunpack.c.l.b16 %v456
    %v1592 = vunpack.c.h.b16 %v456
    %v1593 = vunpack.c.l.b16 %v457
    %v1594 = vunpack.c.h.b16 %v457
    %v1595 = vunpack.c.l.b16 %v458
    %v1596 = vunpack.c.h.b16 %v458
    %v1597 = vunpack.c.l.b16 %v459
    %v1598 = vunpack.c.h.b16 %v459
    %v1599 = vunpack.c.l.b16 %v460
    %v1600 = vunpack.c.h.b16 %v460
    %v1601 = vunpack.c.l.b16 %v461
    %v1602 = vunpack.c.h.b16 %v461
    %v1603 = vunpack.c.l.b16 %v462
    %v1604 = vunpack.c.h.b16 %v462
    %v1605 = vunpack.c.l.b16 %v463
    %v1606 = vunpack.c.h.b16 %v463
    %v1607 = vunpack.c.l.b16 %v464
    %v1608 = vunpack.c.h.b16 %v464
    %v1609 = vunpack.c.l.b16 %v465
    %v1610 = vunpack.c.h.b16 %v465
    %v1611 = vunpack.c.l.b16 %v466
    %v1612 = vunpack.c.h.b16 %v466
    %v1613 = vunpack.c.l.b16 %v467
    %v1614 = vunpack.c.h.b16 %v467
    %v1615 = vunpack.c.l.b16 %v468
    %v1616 = vunpack.c.h.b16 %v468
    %v1617 = vunpack.c.l.b16 %v469
    %v1618 = vunpack.c.h.b16 %v469
    %v1619 = vunpack.c.l.b16 %v470
    %v1620 = vunpack.c.h.b16 %v470
    %v1621 = vunpack.c.l.b16 %v471
    %v1622 = vunpack.c.h.b16 %v471
    %v1623 = vunpack.c.l.b16 %v472
    %v1624 = vunpack.c.h.b16 %v472
    %v1625 = vunpack.c.l.b16 %v473
    %v1626 = vunpack.c.h.b16 %v473
    %v1627 = vunpack.c.l.b16 %v474
    %v1628 = vunpack.c.h.b16 %v474
    %v1629 = vunpack.c.l.b16 %v475
    %v1630 = vunpack.c.h.b16 %v475
    %v1631 = vunpack.c.l.b16 %v476
    %v1632 = vunpack.c.h.b16 %v476
    %v1633 = vunpack.c.l.b16 %v477
    %v1634 = vunpack.c.h.b16 %v477
    %v1635 = vunpack.c.l.b16 %v478
    %v1636 = vunpack.c.h.b16 %v478
    %v1637 = vunpack.c.l.b16 %v479
    %v1638 = vunpack.c.h.b16 %v479
    %v1639 = vunpack.c.l.b16 %v480
    %v1640 = vunpack.c.h.b16 %v480
    %v1641 = vunpack.c.l.b16 %v481
    %v1642 = vunpack.c.h.b16 %v481
    %v1643 = vunpack.c.l.b16 %v482
    %v1644 = vunpack.c.h.b16 %v482
    %v1645 = vunpack.c.l.b16 %v483
    %v1646 = vunpack.c.h.b16 %v483
    %v1647 = vunpack.c.l.b16 %v484
    %v1648 = vunpack.c.h.b16 %v484
    %v1649 = vunpack.c.l.b16 %v485
    %v1650 = vunpack.c.h.b16 %v485
    %v1651 = vunpack.c.l.b16 %v486
    %v1652 = vunpack.c.h.b16 %v486
    %v1653 = vunpack.c.l.b16 %v487
    %v1654 = vunpack.c.h.b16 %v487
    %v1655 = vunpack.c.l.b16 %v488
    %v1656 = vunpack.c.h.b16 %v488
    %v1657 = vunpack.c.l.b16 %v489
    %v1658 = vunpack.c.h.b16 %v489
    %v1659 = vunpack.c.l.b16 %v490
    %v1660 = vunpack.c.h.b16 %v490
    %v1661 = vunpack.c.l.b16 %v491
    %v1662 = vunpack.c.h.b16 %v491
    %v1663 = vunpack.c.l.b16 %v492
    %v1664 = vunpack.c.h.b16 %v492
    %v1665 = vunpack.c.l.b16 %v493
    %v1666 = vunpack.c.h.b16 %v493
    %v1667 = vunpack.c.l.b16 %v494
    %v1668 = vunpack.c.h.b16 %v494
    %v1669 = vunpack.c.l.b16 %v495
    %v1670 = vunpack.c.h.b16 %v495
    %v1671 = vunpack.c.l.b16 %v496
    %v1672 = vunpack.c.h.b16 %v496
    %v1673 = vunpack.c.l.b16 %v497
    %v1674 = vunpack.c.h.b16 %v497
    %v1675 = vunpack.c.l.b16 %v498
    %v1676 = vunpack.c.h.b16 %v498
    %v1677 = vunpack.c.l.b16 %v499
    %v1678 = vunpack.c.h.b16 %v499
    %v1679 = vunpack.c.l.b16 %v500
    %v1680 = vunpack.c.h.b16 %v500
    %v1681 = vunpack.c.l.b16 %v501
    %v1682 = vunpack.c.h.b16 %v501
    %v1683 = vunpack.c.l.b16 %v502
    %v1684 = vunpack.c.h.b16 %v502
    %v1685 = vunpack.c.l.b16 %v503
    %v1686 = vunpack.c.h.b16 %v503
    %v1687 = vunpack.c.l.b16 %v504
    %v1688 = vunpack.c.h.b16 %v504
    %v1689 = vunpack.c.l.b16 %v505
    %v1690 = vunpack.c.h.b16 %v505
    %v1691 = vunpack.c.l.b16 %v506
    %v1692 = vunpack.c.h.b16 %v506
    %v1693 = vunpack.c.l.b16 %v507
    %v1694 = vunpack.c.h.b16 %v507
    %v1695 = vunpack.c.l.b16 %v508
    %v1696 = vunpack.c.h.b16 %v508
    %v1697 = vunpack.c.l.b16 %v509
    %v1698 = vunpack.c.h.b16 %v509
    %v1699 = vunpack.c.l.b16 %v510
    %v1700 = vunpack.c.h.b16 %v510
    %v1701 = vunpack.c.l.b16 %v511
    %v1702 = vunpack.c.h.b16 %v511
    %v1703 = vunpack.c.l.b16 %v512
    %v1704 = vunpack.c.h.b16 %v512
    %v1705 = vunpack.c.l.b16 %v513
    %v1706 = vunpack.c.h.b16 %v513
    %v1707 = vunpack.c.l.b16 %v514
    %v1708 = vunpack.c.h.b16 %v514
    %v1709 = vunpack.c.l.b16 %v515
    %v1710 = vunpack.c.h.b16 %v515
    %v1711 = vunpack.c.l.b16 %v516
    %v1712 = vunpack.c.h.b16 %v516
    %v1713 = vunpack.c.l.b16 %v517
    %v1714 = vunpack.c.h.b16 %v517
    %v1715 = vunpack.c.l.b16 %v518
    %v1716 = vunpack.c.h.b16 %v518
    %v1717 = vunpack.c.l.b16 %v519
    %v1718 = vunpack.c.h.b16 %v519
    %v1719 = vunpack.c.l.b16 %v520
    %v1720 = vunpack.c.h.b16 %v520
    %v1721 = vunpack.c.l.b16 %v521
    %v1722 = vunpack.c.h.b16 %v521
    %v1723 = vunpack.c.l.b16 %v522
    %v1724 = vunpack.c.h.b16 %v522
    %v1725 = vunpack.c.l.b16 %v523
    %v1726 = vunpack.c.h.b16 %v523
    %v1727 = vunpack.c.l.b16 %v524
    %v1728 = vunpack.c.h.b16 %v524
    %v1729 = vunpack.c.l.b16 %v525
    %v1730 = vunpack.c.h.b16 %v525
    %v1731 = vunpack.c.l.b16 %v526
    %v1732 = vunpack.c.h.b16 %v526
    %v1733 = vunpack.c.l.b16 %v527
    %v1734 = vunpack.c.h.b16 %v527
    %v1735 = vunpack.c.l.b16 %v528
    %v1736 = vunpack.c.h.b16 %v528
    %v1737 = vunpack.c.l.b16 %v529
    %v1738 = vunpack.c.h.b16 %v529
    %v1739 = vunpack.c.l.b16 %v530
    %v1740 = vunpack.c.h.b16 %v530
    %v1741 = vunpack.c.l.b16 %v531
    %v1742 = vunpack.c.h.b16 %v531
    %v1743 = vunpack.c.l.b16 %v532
    %v1744 = vunpack.c.h.b16 %v532
    %v1745 = vunpack.c.l.b16 %v533
    %v1746 = vunpack.c.h.b16 %v533
    %v1747 = vunpack.c.l.b16 %v534
    %v1748 = vunpack.c.h.b16 %v534
    %v1749 = vunpack.c.l.b16 %v535
    %v1750 = vunpack.c.h.b16 %v535
    %v1751 = vunpack.c.l.b16 %v536
    %v1752 = vunpack.c.h.b16 %v536
    %v1753 = vunpack.c.l.b16 %v537
    %v1754 = vunpack.c.h.b16 %v537
    %v1755 = vunpack.c.l.b16 %v538
    %v1756 = vunpack.c.h.b16 %v538
    %v1757 = vpack.c.b16 %v981, %v973
    %v1758 = vpack.c.b16 %v982, %v974
    %v1759 = vpack.c.b16 %v983, %v975
    %v1760 = vpack.c.b16 %v984, %v976
    %v1761 = vpack.c.b16 %v985, %v977
    %v1762 = vpack.c.b16 %v986, %v978
    %v1763 = vpack.c.b16 %v987, %v979
    %v1764 = vpack.c.b16 %v988, %v980
    %v1765 = vpack.c.b16 %v997, %v989
    %v1766 = vpack.c.b16 %v998, %v990
    %v1767 = vpack.c.b16 %v999, %v991
    %v1768 = vpack.c.b16 %v1000, %v992
    %v1769 = vpack.c.b16 %v1001, %v993
    %v1770 = vpack.c.b16 %v1002, %v994
    %v1771 = vpack.c.b16 %v1003, %v995
    %v1772 = vpack.c.b16 %v1004, %v996
    %v1773 = vpack.c.b16 %v1013, %v1005
    %v1774 = vpack.c.b16 %v1014, %v1006
    %v1775 = vpack.c.b16 %v1015, %v1007
    %v1776 = vpack.c.b16 %v1016, %v1008
    %v1777 = vpack.c.b16 %v1017, %v1009
    %v1778 = vpack.c.b16 %v1018, %v1010
    %v1779 = vpack.c.b16 %v1019, %v1011
    %v1780 = vpack.c.b16 %v1020, %v1012
    %v1781 = vpack.c.b16 %v1029, %v1021
    %v1782 = vpack.c.b16 %v1030, %v1022
    %v1783 = vpack.c.b16 %v1031, %v1023
    %v1784 = vpack.c.b16 %v1032, %v1024
    %v1785 = vpack.c.b16 %v1033, %v1025
    %v1786 = vpack.c.b16 %v1034, %v1026
    %v1787 = vpack.c.b16 %v1035, %v1027
    %v1788 = vpack.c.b16 %v1036, %v1028
    %v1789 = vpack.c.b16 %v1045, %v1037
    %v1790 = vpack.c.b16 %v1046, %v1038
    %v1791 = vpack.c.b16 %v1047, %v1039
    %v1792 = vpack.c.b16 %v1048, %v1040
    %v1793 = vpack.c.b16 %v1049, %v1041
    %v1794 = vpack.c.b16 %v1050, %v1042
    %v1795 = vpack.c.b16 %v1051, %v1043
    %v1796 = vpack.c.b16 %v1052, %v1044
    %v1797 = vpack.c.b16 %v1061, %v1053
    %v1798 = vpack.c.b16 %v1062, %v1054
    %v1799 = vpack.c.b16 %v1063, %v1055
    %v1800 = vpack.c.b16 %v1064, %v1056
    %v1801 = vpack.c.b16 %v1065, %v1057
    %v1802 = vpack.c.b16 %v1066, %v1058
    %v1803 = vpack.c.b16 %v1067, %v1059
    %v1804 = vpack.c.b16 %v1068, %v1060
    %v1805 = vpack.c.b16 %v1077, %v1069
    %v1806 = vpack.c.b16 %v1078, %v1070
    %v1807 = vpack.c.b16 %v1079, %v1071
    %v1808 = vpack.c.b16 %v1080, %v1072
    %v1809 = vpack.c.b16 %v1081, %v1073
    %v1810 = vpack.c.b16 %v1082, %v1074
    %v1811 = vpack.c.b16 %v1083, %v1075
    %v1812 = vpack.c.b16 %v1084, %v1076
    %v1813 = vpack.c.b16 %v1093, %v1085
    %v1814 = vpack.c.b16 %v1094, %v1086
    %v1815 = vpack.c.b16 %v1095, %v1087
    %v1816 = vpack.c.b16 %v1096, %v1088
    %v1817 = vpack.c.b16 %v1097, %v1089
    %v1818 = vpack.c.b16 %v1098, %v1090
    %v1819 = vpack.c.b16 %v1099, %v1091
    %v1820 = vpack.c.b16 %v1100, %v1092
    %v1821 = vpack.c.b16 %v1109, %v1101
    %v1822 = vpack.c.b16 %v1110, %v1102
    %v1823 = vpack.c.b16 %v1111, %v1103
    %v1824 = vpack.c.b16 %v1112, %v1104
    %v1825 = vpack.c.b16 %v1113, %v1105
    %v1826 = vpack.c.b16 %v1114, %v1106
    %v1827 = vpack.c.b16 %v1115, %v1107
    %v1828 = vpack.c.b16 %v1116, %v1108
    %v1829 = vpack.c.b16 %v1125, %v1117
    %v1830 = vpack.c.b16 %v1126, %v1118
    %v1831 = vpack.c.b16 %v1127, %v1119
    %v1832 = vpack.c.b16 %v1128, %v1120
    %v1833 = vpack.c.b16 %v1129, %v1121
    %v1834 = vpack.c.b16 %v1130, %v1122
    %v1835 = vpack.c.b16 %v1131, %v1123
    %v1836 = vpack.c.b16 %v1132, %v1124
    %v1837 = vpack.c.b16 %v1141, %v1133
    %v1838 = vpack.c.b16 %v1142, %v1134
    %v1839 = vpack.c.b16 %v1143, %v1135
    %v1840 = vpack.c.b16 %v1144, %v1136
    %v1841 = vpack.c.b16 %v1145, %v1137
    %v1842 = vpack.c.b16 %v1146, %v1138
    %v1843 = vpack.c.b16 %v1147, %v1139
    %v1844 = vpack.c.b16 %v1148, %v1140
    %v1845 = vpack.c.b16 %v1157, %v1149
    %v1846 = vpack.c.b16 %v1158, %v1150
    %v1847 = vpack.c.b16 %v1159, %v1151
    %v1848 = vpack.c.b16 %v1160, %v1152
    %v1849 = vpack.c.b16 %v1161, %v1153
    %v1850 = vpack.c.b16 %v1162, %v1154
    %v1851 = vpack.c.b16 %v1163, %v1155
    %v1852 = vpack.c.b16 %v1164, %v1156
    %v1853 = vpack.c.b16 %v1173, %v1165
    %v1854 = vpack.c.b16 %v1174, %v1166
    %v1855 = vpack.c.b16 %v1175, %v1167
    %v1856 = vpack.c.b16 %v1176, %v1168
    %v1857 = vpack.c.b16 %v1177, %v1169
    %v1858 = vpack.c.b16 %v1178, %v1170
    %v1859 = vpack.c.b16 %v1179, %v1171
    %v1860 = vpack.c.b16 %v1180, %v1172
    %v1861 = vpack.c.b16 %v1189, %v1181
    %v1862 = vpack.c.b16 %v1190, %v1182
    %v1863 = vpack.c.b16 %v1191, %v1183
    %v1864 = vpack.c.b16 %v1192, %v1184
    %v1865 = vpack.c.b16 %v1193, %v1185
    %v1866 = vpack.c.b16 %v1194, %v1186
    %v1867 = vpack.c.b16 %v1195, %v1187
    %v1868 = vpack.c.b16 %v1196, %v1188
    %v1869 = vpack.c.b16 %v1205, %v1197
    %v1870 = vpack.c.b16 %v1206, %v1198
    %v1871 = vpack.c.b16 %v1207, %v1199
    %v1872 = vpack.c.b16 %v1208, %v1200
    %v1873 = vpack.c.b16 %v1209, %v1201
    %v1874 = vpack.c.b16 %v1210, %v1202
    %v1875 = vpack.c.b16 %v1211, %v1203
    %v1876 = vpack.c.b16 %v1212, %v1204
    %v1877 = vpack.c.b16 %v1221, %v1213
    %v1878 = vpack.c.b16 %v1222, %v1214
    %v1879 = vpack.c.b16 %v1223, %v1215
    %v1880 = vpack.c.b16 %v1224, %v1216
    %v1881 = vpack.c.b16 %v1225, %v1217
    %v1882 = vpack.c.b16 %v1226, %v1218
    %v1883 = vpack.c.b16 %v1227, %v1219
    %v1884 = vpack.c.b16 %v1228, %v1220
    %v1885 = vpack.c.b16 %v1237, %v1229
    %v1886 = vpack.c.b16 %v1238, %v1230
    %v1887 = vpack.c.b16 %v1239, %v1231
    %v1888 = vpack.c.b16 %v1240, %v1232
    %v1889 = vpack.c.b16 %v1241, %v1233
    %v1890 = vpack.c.b16 %v1242, %v1234
    %v1891 = vpack.c.b16 %v1243, %v1235
    %v1892 = vpack.c.b16 %v1244, %v1236
    %v1893 = vpack.c.b16 %v1253, %v1245
    %v1894 = vpack.c.b16 %v1254, %v1246
    %v1895 = vpack.c.b16 %v1255, %v1247
    %v1896 = vpack.c.b16 %v1256, %v1248
    %v1897 = vpack.c.b16 %v1257, %v1249
    %v1898 = vpack.c.b16 %v1258, %v1250
    %v1899 = vpack.c.b16 %v1259, %v1251
    %v1900 = vpack.c.b16 %v1260, %v1252
    %v1901 = vpack.c.b16 %v1269, %v1261
    %v1902 = vpack.c.b16 %v1270, %v1262
    %v1903 = vpack.c.b16 %v1271, %v1263
    %v1904 = vpack.c.b16 %v1272, %v1264
    %v1905 = vpack.c.b16 %v1273, %v1265
    %v1906 = vpack.c.b16 %v1274, %v1266
    %v1907 = vpack.c.b16 %v1275, %v1267
    %v1908 = vpack.c.b16 %v1276, %v1268
    %v1909 = vpack.c.b16 %v1285, %v1277
    %v1910 = vpack.c.b16 %v1286, %v1278
    %v1911 = vpack.c.b16 %v1287, %v1279
    %v1912 = vpack.c.b16 %v1288, %v1280
    %v1913 = vpack.c.b16 %v1289, %v1281
    %v1914 = vpack.c.b16 %v1290, %v1282
    %v1915 = vpack.c.b16 %v1291, %v1283
    %v1916 = vpack.c.b16 %v1292, %v1284
    %v1917 = vpack.c.b16 %v1301, %v1293
    %v1918 = vpack.c.b16 %v1302, %v1294
    %v1919 = vpack.c.b16 %v1303, %v1295
    %v1920 = vpack.c.b16 %v1304, %v1296
    %v1921 = vpack.c.b16 %v1305, %v1297
    %v1922 = vpack.c.b16 %v1306, %v1298
    %v1923 = vpack.c.b16 %v1307, %v1299
    %v1924 = vpack.c.b16 %v1308, %v1300
    %v1925 = vpack.c.b16 %v1317, %v1309
    %v1926 = vpack.c.b16 %v1318, %v1310
    %v1927 = vpack.c.b16 %v1319, %v1311
    %v1928 = vpack.c.b16 %v1320, %v1312
    %v1929 = vpack.c.b16 %v1321, %v1313
    %v1930 = vpack.c.b16 %v1322, %v1314
    %v1931 = vpack.c.b16 %v1323, %v1315
    %v1932 = vpack.c.b16 %v1324, %v1316
    %v1933 = vpack.c.b16 %v1333, %v1325
    %v1934 = vpack.c.b16 %v1334, %v1326
    %v1935 = vpack.c.b16 %v1335, %v1327
    %v1936 = vpack.c.b16 %v1336, %v1328
    %v1937 = vpack.c.b16 %v1337, %v1329
    %v1938 = vpack.c.b16 %v1338, %v1330
    %v1939 = vpack.c.b16 %v1339, %v1331
    %v1940 = vpack.c.b16 %v1340, %v1332
    %v1941 = vpack.c.b16 %v1349, %v1341
    %v1942 = vpack.c.b16 %v1350, %v1342
    %v1943 = vpack.c.b16 %v1351, %v1343
    %v1944 = vpack.c.b16 %v1352, %v1344
    %v1945 = vpack.c.b16 %v1353, %v1345
    %v1946 = vpack.c.b16 %v1354, %v1346
    %v1947 = vpack.c.b16 %v1355, %v1347
    %v1948 = vpack.c.b16 %v1356, %v1348
    %v1949 = vpack.c.b16 %v1365, %v1357
    %v1950 = vpack.c.b16 %v1366, %v1358
    %v1951 = vpack.c.b16 %v1367, %v1359
    %v1952 = vpack.c.b16 %v1368, %v1360
    %v1953 = vpack.c.b16 %v1369, %v1361
    %v1954 = vpack.c.b16 %v1370, %v1362
    %v1955 = vpack.c.b16 %v1371, %v1363
    %v1956 = vpack.c.b16 %v1372, %v1364
    %v1957 = vpack.c.b16 %v1381, %v1373
    %v1958 = vpack.c.b16 %v1382, %v1374
    %v1959 = vpack.c.b16 %v1383, %v1375
    %v1960 = vpack.c.b16 %v1384, %v1376
    %v1961 = vpack.c.b16 %v1385, %v1377
    %v1962 = vpack.c.b16 %v1386, %v1378
    %v1963 = vpack.c.b16 %v1387, %v1379
    %v1964 = vpack.c.b16 %v1388, %v1380
    %v1965 = vpack.c.b16 %v1397, %v1389
    %v1966 = vpack.c.b16 %v1398, %v1390
    %v1967 = vpack.c.b16 %v1399, %v1391
    %v1968 = vpack.c.b16 %v1400, %v1392
    %v1969 = vpack.c.b16 %v1401, %v1393
    %v1970 = vpack.c.b16 %v1402, %v1394
    %v1971 = vpack.c.b16 %v1403, %v1395
    %v1972 = vpack.c.b16 %v1404, %v1396
    %v1973 = vpack.c.b16 %v1413, %v1405
    %v1974 = vpack.c.b16 %v1414, %v1406
    %v1975 = vpack.c.b16 %v1415, %v1407
    %v1976 = vpack.c.b16 %v1416, %v1408
    %v1977 = vpack.c.b16 %v1417, %v1409
    %v1978 = vpack.c.b16 %v1418, %v1410
    %v1979 = vpack.c.b16 %v1419, %v1411
    %v1980 = vpack.c.b16 %v1420, %v1412
    %v1981 = vpack.c.b16 %v1429, %v1421
    %v1982 = vpack.c.b16 %v1430, %v1422
    %v1983 = vpack.c.b16 %v1431, %v1423
    %v1984 = vpack.c.b16 %v1432, %v1424
    %v1985 = vpack.c.b16 %v1433, %v1425
    %v1986 = vpack.c.b16 %v1434, %v1426
    %v1987 = vpack.c.b16 %v1435, %v1427
    %v1988 = vpack.c.b16 %v1436, %v1428
    %v1989 = vpack.c.b16 %v1445, %v1437
    %v1990 = vpack.c.b16 %v1446, %v1438
    %v1991 = vpack.c.b16 %v1447, %v1439
    %v1992 = vpack.c.b16 %v1448, %v1440
    %v1993 = vpack.c.b16 %v1449, %v1441
    %v1994 = vpack.c.b16 %v1450, %v1442
    %v1995 = vpack.c.b16 %v1451, %v1443
    %v1996 = vpack.c.b16 %v1452, %v1444
    %v1997 = vpack.c.b16 %v1461, %v1453
    %v1998 = vpack.c.b16 %v1462, %v1454
    %v1999 = vpack.c.b16 %v1463, %v1455
    %v2000 = vpack.c.b16 %v1464, %v1456
    %v2001 = vpack.c.b16 %v1465, %v1457
    %v2002 = vpack.c.b16 %v1466, %v1458
    %v2003 = vpack.c.b16 %v1467, %v1459
    %v2004 = vpack.c.b16 %v1468, %v1460
    %v2005 = vpack.c.b16 %v1477, %v1469
    %v2006 = vpack.c.b16 %v1478, %v1470
    %v2007 = vpack.c.b16 %v1479, %v1471
    %v2008 = vpack.c.b16 %v1480, %v1472
    %v2009 = vpack.c.b16 %v1481, %v1473
    %v2010 = vpack.c.b16 %v1482, %v1474
    %v2011 = vpack.c.b16 %v1483, %v1475
    %v2012 = vpack.c.b16 %v1484, %v1476
    %v2013 = vpack.c.b16 %v1493, %v1485
    %v2014 = vpack.c.b16 %v1494, %v1486
    %v2015 = vpack.c.b16 %v1495, %v1487
    %v2016 = vpack.c.b16 %v1496, %v1488
    %v2017 = vpack.c.b16 %v1497, %v1489
    %v2018 = vpack.c.b16 %v1498, %v1490
    %v2019 = vpack.c.b16 %v1499, %v1491
    %v2020 = vpack.c.b16 %v1500, %v1492
    %v2021 = vpack.c.b16 %v1509, %v1501
    %v2022 = vpack.c.b16 %v1510, %v1502
    %v2023 = vpack.c.b16 %v1511, %v1503
    %v2024 = vpack.c.b16 %v1512, %v1504
    %v2025 = vpack.c.b16 %v1513, %v1505
    %v2026 = vpack.c.b16 %v1514, %v1506
    %v2027 = vpack.c.b16 %v1515, %v1507
    %v2028 = vpack.c.b16 %v1516, %v1508
    %v2029 = vpack.c.b16 %v1525, %v1517
    %v2030 = vpack.c.b16 %v1526, %v1518
    %v2031 = vpack.c.b16 %v1527, %v1519
    %v2032 = vpack.c.b16 %v1528, %v1520
    %v2033 = vpack.c.b16 %v1529, %v1521
    %v2034 = vpack.c.b16 %v1530, %v1522
    %v2035 = vpack.c.b16 %v1531, %v1523
    %v2036 = vpack.c.b16 %v1532, %v1524
    %v2037 = vpack.c.b16 %v1541, %v1533
    %v2038 = vpack.c.b16 %v1542, %v1534
    %v2039 = vpack.c.b16 %v1543, %v1535
    %v2040 = vpack.c.b16 %v1544, %v1536
    %v2041 = vpack.c.b16 %v1545, %v1537
    %v2042 = vpack.c.b16 %v1546, %v1538
    %v2043 = vpack.c.b16 %v1547, %v1539
    %v2044 = vpack.c.b16 %v1548, %v1540
    %v2045 = vpack.c.b16 %v1557, %v1549
    %v2046 = vpack.c.b16 %v1558, %v1550
    %v2047 = vpack.c.b16 %v1559, %v1551
    %v2048 = vpack.c.b16 %v1560, %v1552
    %v2049 = vpack.c.b16 %v1561, %v1553
    %v2050 = vpack.c.b16 %v1562, %v1554
    %v2051 = vpack.c.b16 %v1563, %v1555
    %v2052 = vpack.c.b16 %v1564, %v1556
    %v2053 = vpack.c.b16 %v1573, %v1565
    %v2054 = vpack.c.b16 %v1574, %v1566
    %v2055 = vpack.c.b16 %v1575, %v1567
    %v2056 = vpack.c.b16 %v1576, %v1568
    %v2057 = vpack.c.b16 %v1577, %v1569
    %v2058 = vpack.c.b16 %v1578, %v1570
    %v2059 = vpack.c.b16 %v1579, %v1571
    %v2060 = vpack.c.b16 %v1580, %v1572
    %v2061 = vpack.c.b16 %v1589, %v1581
    %v2062 = vpack.c.b16 %v1590, %v1582
    %v2063 = vpack.c.b16 %v1591, %v1583
    %v2064 = vpack.c.b16 %v1592, %v1584
    %v2065 = vpack.c.b16 %v1593, %v1585
    %v2066 = vpack.c.b16 %v1594, %v1586
    %v2067 = vpack.c.b16 %v1595, %v1587
    %v2068 = vpack.c.b16 %v1596, %v1588
    %v2069 = vpack.c.b16 %v1605, %v1597
    %v2070 = vpack.c.b16 %v1606, %v1598
    %v2071 = vpack.c.b16 %v1607, %v1599
    %v2072 = vpack.c.b16 %v1608, %v1600
    %v2073 = vpack.c.b16 %v1609, %v1601
    %v2074 = vpack.c.b16 %v1610, %v1602
    %v2075 = vpack.c.b16 %v1611, %v1603
    %v2076 = vpack.c.b16 %v1612, %v1604
    %v2077 = vpack.c.b16 %v1621, %v1613
    %v2078 = vpack.c.b16 %v1622, %v1614
    %v2079 = vpack.c.b16 %v1623, %v1615
    %v2080 = vpack.c.b16 %v1624, %v1616
    %v2081 = vpack.c.b16 %v1625, %v1617
    %v2082 = vpack.c.b16 %v1626, %v1618
    %v2083 = vpack.c.b16 %v1627, %v1619
    %v2084 = vpack.c.b16 %v1628, %v1620
    %v2085 = vpack.c.b16 %v1637, %v1629
    %v2086 = vpack.c.b16 %v1638, %v1630
    %v2087 = vpack.c.b16 %v1639, %v1631
    %v2088 = vpack.c.b16 %v1640, %v1632
    %v2089 = vpack.c.b16 %v1641, %v1633
    %v2090 = vpack.c.b16 %v1642, %v1634
    %v2091 = vpack.c.b16 %v1643, %v1635
    %v2092 = vpack.c.b16 %v1644, %v1636
    %v2093 = vpack.c.b16 %v1653, %v1645
    %v2094 = vpack.c.b16 %v1654, %v1646
    %v2095 = vpack.c.b16 %v1655, %v1647
    %v2096 = vpack.c.b16 %v1656, %v1648
    %v2097 = vpack.c.b16 %v1657, %v1649
    %v2098 = vpack.c.b16 %v1658, %v1650
    %v2099 = vpack.c.b16 %v1659, %v1651
    %v2100 = vpack.c.b16 %v1660, %v1652
    %v2101 = vpack.c.b16 %v1669, %v1661
    %v2102 = vpack.c.b16 %v1670, %v1662
    %v2103 = vpack.c.b16 %v1671, %v1663
    %v2104 = vpack.c.b16 %v1672, %v1664
    %v2105 = vpack.c.b16 %v1673, %v1665
    %v2106 = vpack.c.b16 %v1674, %v1666
    %v2107 = vpack.c.b16 %v1675, %v1667
    %v2108 = vpack.c.b16 %v1676, %v1668
    %v2109 = vpack.c.b16 %v1685, %v1677
    %v2110 = vpack.c.b16 %v1686, %v1678
    %v2111 = vpack.c.b16 %v1687, %v1679
    %v2112 = vpack.c.b16 %v1688, %v1680
    %v2113 = vpack.c.b16 %v1689, %v1681
    %v2114 = vpack.c.b16 %v1690, %v1682
    %v2115 = vpack.c.b16 %v1691, %v1683
    %v2116 = vpack.c.b16 %v1692, %v1684
    %v2117 = vpack.c.b16 %v1701, %v1693
    %v2118 = vpack.c.b16 %v1702, %v1694
    %v2119 = vpack.c.b16 %v1703, %v1695
    %v2120 = vpack.c.b16 %v1704, %v1696
    %v2121 = vpack.c.b16 %v1705, %v1697
    %v2122 = vpack.c.b16 %v1706, %v1698
    %v2123 = vpack.c.b16 %v1707, %v1699
    %v2124 = vpack.c.b16 %v1708, %v1700
    %v2125 = vpack.c.b16 %v1717, %v1709
    %v2126 = vpack.c.b16 %v1718, %v1710
    %v2127 = vpack.c.b16 %v1719, %v1711
    %v2128 = vpack.c.b16 %v1720, %v1712
    %v2129 = vpack.c.b16 %v1721, %v1713
    %v2130 = vpack.c.b16 %v1722, %v1714
    %v2131 = vpack.c.b16 %v1723, %v1715
    %v2132 = vpack.c.b16 %v1724, %v1716
    %v2133 = vpack.c.b16 %v1733, %v1725
    %v2134 = vpack.c.b16 %v1734, %v1726
    %v2135 = vpack.c.b16 %v1735, %v1727
    %v2136 = vpack.c.b16 %v1736, %v1728
    %v2137 = vpack.c.b16 %v1737, %v1729
    %v2138 = vpack.c.b16 %v1738, %v1730
    %v2139 = vpack.c.b16 %v1739, %v1731
    %v2140 = vpack.c.b16 %v1740, %v1732
    %v2141 = vpack.c.b16 %v1749, %v1741
    %v2142 = vpack.c.b16 %v1750, %v1742
    %v2143 = vpack.c.b16 %v1751, %v1743
    %v2144 = vpack.c.b16 %v1752, %v1744
    %v2145 = vpack.c.b16 %v1753, %v1745
    %v2146 = vpack.c.b16 %v1754, %v1746
    %v2147 = vpack.c.b16 %v1755, %v1747
    %v2148 = vpack.c.b16 %v1756, %v1748
    %vm2541 = vcmask 130048
    %v2543 = vsel %vm2541, %v146, 0
    %2545 = vmatprep.subr.bf16.mxu0 %v1758
    %2546 = vmatpush1.bf16.msra.mxu0 %v1757
    %2547 = vmatprep.subr.bf16.mxu0 %v1766
    %2548 = vmatpush1.bf16.msra.mxu0 %v1765
    %2549 = vmatprep.subr.bf16.mxu0 %v1774
    %2550 = vmatpush1.bf16.msra.mxu0 %v1773
    %2551 = vmatprep.subr.bf16.mxu0 %v1782
    %2552 = vmatpush1.bf16.msra.mxu0 %v1781
    %2553 = vmatprep.subr.bf16.mxu0 %v1790
    %2554 = vmatpush1.bf16.msra.mxu0 %v1789
    %2555 = vmatprep.subr.bf16.mxu0 %v1798
    %2556 = vmatpush1.bf16.msra.mxu0 %v1797
    %2557 = vmatprep.subr.bf16.mxu0 %v1806
    %2558 = vmatpush1.bf16.msra.mxu0 %v1805
    %2559 = vmatprep.subr.bf16.mxu0 %v1814
    %2560 = vmatpush1.bf16.msra.mxu0 %v1813
    %2561 = vmatprep.subr.bf16.mxu0 %v1822
    %2562 = vmatpush1.bf16.msra.mxu0 %v1821
    %2563 = vmatprep.subr.bf16.mxu0 %v1830
    %2564 = vmatpush1.bf16.msra.mxu0 %v1829
    %2565 = vmatprep.subr.bf16.mxu0 %v1838
    %2566 = vmatpush1.bf16.msra.mxu0 %v1837
    %2567 = vmatprep.subr.bf16.mxu0 %v1846
    %2568 = vmatpush1.bf16.msra.mxu0 %v1845
    %2569 = vmatprep.subr.bf16.mxu0 %v1854
    %2570 = vmatpush1.bf16.msra.mxu0 %v1853
    %2571 = vmatprep.subr.bf16.mxu0 %v1862
    %2572 = vmatpush1.bf16.msra.mxu0 %v1861
    %2573 = vmatprep.subr.bf16.mxu0 %v1870
    %2574 = vmatpush1.bf16.msra.mxu0 %v1869
    %2575 = vmatprep.subr.bf16.mxu0 %v1878
    %2576 = vmatpush1.bf16.msra.mxu0 %v1877
    %2577 = vmatprep.mubr.bf16.mxu0 %v141
    %2578 = vmatmul.mubr.bf16.gmra.mrb[0].mxu0 %v140
    %v2579 = vpop.f32.mrb[0].mxu0
    %v2580 = vadd.f32 %v544, %v2579
    %v2581 = vpop.f32.mrb[0].mxu0
    %v2582 = vadd.f32 %v548, %v2581
    %v2583 = vpop.f32.mrb[0].mxu0
    %v2584 = vpop.f32.mrb[0].mxu0
    %2585 = vdwg.mxu0
    %2586 = vmatprep.subr.bf16.mxu0 %v1886
    %2587 = vmatpush1.bf16.msra.mxu0 %v1885
    %2588 = vmatprep.subr.bf16.mxu0 %v1894
    %2589 = vmatpush1.bf16.msra.mxu0 %v1893
    %2590 = vmatprep.subr.bf16.mxu0 %v1902
    %2591 = vmatpush1.bf16.msra.mxu0 %v1901
    %2592 = vmatprep.subr.bf16.mxu0 %v1910
    %2593 = vmatpush1.bf16.msra.mxu0 %v1909
    %2594 = vmatprep.subr.bf16.mxu0 %v1918
    %2595 = vmatpush1.bf16.msra.mxu0 %v1917
    %2596 = vmatprep.subr.bf16.mxu0 %v1926
    %2597 = vmatpush1.bf16.msra.mxu0 %v1925
    %2598 = vmatprep.subr.bf16.mxu0 %v1934
    %2599 = vmatpush1.bf16.msra.mxu0 %v1933
    %2600 = vmatprep.subr.bf16.mxu0 %v1942
    %2601 = vmatpush1.bf16.msra.mxu0 %v1941
    %2602 = vmatprep.subr.bf16.mxu0 %v1950
    %2603 = vmatpush1.bf16.msra.mxu0 %v1949
    %2604 = vmatprep.subr.bf16.mxu0 %v1958
    %2605 = vmatpush1.bf16.msra.mxu0 %v1957
    %2606 = vmatprep.subr.bf16.mxu0 %v1966
    %2607 = vmatpush1.bf16.msra.mxu0 %v1965
    %2608 = vmatprep.subr.bf16.mxu0 %v1974
    %2609 = vmatpush1.bf16.msra.mxu0 %v1973
    %2610 = vmatprep.subr.bf16.mxu0 %v1982
    %2611 = vmatpush1.bf16.msra.mxu0 %v1981
    %2612 = vmatprep.subr.bf16.mxu0 %v1990
    %2613 = vmatpush1.bf16.msra.mxu0 %v1989
    %2614 = vmatprep.subr.bf16.mxu0 %v1998
    %2615 = vmatpush1.bf16.msra.mxu0 %v1997
    %2616 = vmatprep.subr.bf16.mxu0 %v2006
    %2617 = vmatpush1.bf16.msra.mxu0 %v2005
    %2618 = vmatprep.mubr.bf16.mxu0 %v143
    %2619 = vmatmul.mubr.bf16.gmra.mrb[0].mxu0 %v142
    %v2620 = vpop.f32.mrb[0].mxu0
    %v2621 = vadd.f32 %v2580, %v2620
    %v2622 = vpop.f32.mrb[0].mxu0
    %v2623 = vadd.f32 %v2582, %v2622
    %v2624 = vpop.f32.mrb[0].mxu0
    %v2625 = vpop.f32.mrb[0].mxu0
    %2626 = vdwg.mxu0
    %2627 = vmatprep.subr.bf16.mxu0 %v2014
    %2628 = vmatpush1.bf16.msra.mxu0 %v2013
    %2629 = vmatprep.subr.bf16.mxu0 %v2022
    %2630 = vmatpush1.bf16.msra.mxu0 %v2021
    %2631 = vmatprep.subr.bf16.mxu0 %v2030
    %2632 = vmatpush1.bf16.msra.mxu0 %v2029
    %2633 = vmatprep.subr.bf16.mxu0 %v2038
    %2634 = vmatpush1.bf16.msra.mxu0 %v2037
    %2635 = vmatprep.subr.bf16.mxu0 %v2046
    %2636 = vmatpush1.bf16.msra.mxu0 %v2045
    %2637 = vmatprep.subr.bf16.mxu0 %v2054
    %2638 = vmatpush1.bf16.msra.mxu0 %v2053
    %2639 = vmatprep.subr.bf16.mxu0 %v2062
    %2640 = vmatpush1.bf16.msra.mxu0 %v2061
    %2641 = vmatprep.subr.bf16.mxu0 %v2070
    %2642 = vmatpush1.bf16.msra.mxu0 %v2069
    %2643 = vmatprep.subr.bf16.mxu0 %v2078
    %2644 = vmatpush1.bf16.msra.mxu0 %v2077
    %2645 = vmatprep.subr.bf16.mxu0 %v2086
    %2646 = vmatpush1.bf16.msra.mxu0 %v2085
    %2647 = vmatprep.subr.bf16.mxu0 %v2094
    %2648 = vmatpush1.bf16.msra.mxu0 %v2093
    %2649 = vmatprep.subr.bf16.mxu0 %v2102
    %2650 = vmatpush1.bf16.msra.mxu0 %v2101
    %2651 = vmatprep.subr.bf16.mxu0 %v2110
    %2652 = vmatpush1.bf16.msra.mxu0 %v2109
    %2653 = vmatprep.subr.bf16.mxu0 %v2118
    %2654 = vmatpush1.bf16.msra.mxu0 %v2117
    %2655 = vmatprep.subr.bf16.mxu0 %v2126
    %2656 = vmatpush1.bf16.msra.mxu0 %v2125
    %2657 = vmatprep.subr.bf16.mxu0 %v2134
    %2658 = vmatpush1.bf16.msra.mxu0 %v2133
    %2659 = vmatprep.mubr.bf16.mxu0 %v145
    %2660 = vmatmul.mubr.bf16.gmra.mrb[0].mxu0 %v144
    %v2661 = vpop.f32.mrb[0].mxu0
    %v2662 = vadd.f32 %v2621, %v2661
    %v2663 = vpop.f32.mrb[0].mxu0
    %v2664 = vadd.f32 %v2623, %v2663
    %v2665 = vpop.f32.mrb[0].mxu0
    %v2666 = vpop.f32.mrb[0].mxu0
    %2667 = vdwg.mxu0
    %2668 = vmatprep.subr.bf16.mxu0 %v2142
    %2669 = vmatpush1.bf16.msra.mxu0 %v2141
    %2670 = vmatprep.subr.bf16.mxu0 0
    %2671 = vmatpush1.bf16.msra.mxu0 0
    %2672 = vmatprep.subr.bf16.mxu0 0
    %2673 = vmatpush1.bf16.msra.mxu0 0
    %2674 = vmatprep.subr.bf16.mxu0 0
    %2675 = vmatpush1.bf16.msra.mxu0 0
    %2676 = vmatprep.subr.bf16.mxu0 0
    %2677 = vmatpush1.bf16.msra.mxu0 0
    %2678 = vmatprep.subr.bf16.mxu0 0
    %2679 = vmatpush1.bf16.msra.mxu0 0
    %2680 = vmatprep.subr.bf16.mxu0 0
    %2681 = vmatpush1.bf16.msra.mxu0 0
    %2682 = vmatprep.subr.bf16.mxu0 0
    %2683 = vmatpush1.bf16.msra.mxu0 0
    %2684 = vmatprep.subr.bf16.mxu0 0
    %2685 = vmatpush1.bf16.msra.mxu0 0
    %2686 = vmatprep.subr.bf16.mxu0 0
    %2687 = vmatpush1.bf16.msra.mxu0 0
    %2688 = vmatprep.subr.bf16.mxu0 0
    %2689 = vmatpush1.bf16.msra.mxu0 0
    %2690 = vmatprep.subr.bf16.mxu0 0
    %2691 = vmatpush1.bf16.msra.mxu0 0
    %2692 = vmatprep.subr.bf16.mxu0 0
    %2693 = vmatpush1.bf16.msra.mxu0 0
    %2694 = vmatprep.subr.bf16.mxu0 0
    %2695 = vmatpush1.bf16.msra.mxu0 0
    %2696 = vmatprep.subr.bf16.mxu0 0
    %2697 = vmatpush1.bf16.msra.mxu0 0
    %2698 = vmatprep.subr.bf16.mxu0 0
    %2699 = vmatpush1.bf16.msra.mxu0 0
    %2700 = vmatprep.mubr.bf16.mxu0 0
    %2701 = vmatmul.mubr.bf16.gmra.mrb[0].mxu0 %v2543
    %v2702 = vpop.f32.mrb[0].mxu0
    %v2703 = vadd.f32 %v2662, %v2702
    %v2704 = vpop.f32.mrb[0].mxu0
    %v2705 = vadd.f32 %v2664, %v2704
    %v2706 = vpop.f32.mrb[0].mxu0
    %v2707 = vpop.f32.mrb[0].mxu0
    %2708 = vdwg.mxu0
    %2709 = vmatprep.subr.bf16.mxu0 %v1760
    %2710 = vmatpush1.bf16.msra.mxu0 %v1759
    %2711 = vmatprep.subr.bf16.mxu0 %v1768
    %2712 = vmatpush1.bf16.msra.mxu0 %v1767
    %2713 = vmatprep.subr.bf16.mxu0 %v1776
    %2714 = vmatpush1.bf16.msra.mxu0 %v1775
    %2715 = vmatprep.subr.bf16.mxu0 %v1784
    %2716 = vmatpush1.bf16.msra.mxu0 %v1783
    %2717 = vmatprep.subr.bf16.mxu0 %v1792
    %2718 = vmatpush1.bf16.msra.mxu0 %v1791
    %2719 = vmatprep.subr.bf16.mxu0 %v1800
    %2720 = vmatpush1.bf16.msra.mxu0 %v1799
    %2721 = vmatprep.subr.bf16.mxu0 %v1808
    %2722 = vmatpush1.bf16.msra.mxu0 %v1807
    %2723 = vmatprep.subr.bf16.mxu0 %v1816
    %2724 = vmatpush1.bf16.msra.mxu0 %v1815
    %2725 = vmatprep.subr.bf16.mxu0 %v1824
    %2726 = vmatpush1.bf16.msra.mxu0 %v1823
    %2727 = vmatprep.subr.bf16.mxu0 %v1832
    %2728 = vmatpush1.bf16.msra.mxu0 %v1831
    %2729 = vmatprep.subr.bf16.mxu0 %v1840
    %2730 = vmatpush1.bf16.msra.mxu0 %v1839
    %2731 = vmatprep.subr.bf16.mxu0 %v1848
    %2732 = vmatpush1.bf16.msra.mxu0 %v1847
    %2733 = vmatprep.subr.bf16.mxu0 %v1856
    %2734 = vmatpush1.bf16.msra.mxu0 %v1855
    %2735 = vmatprep.subr.bf16.mxu0 %v1864
    %2736 = vmatpush1.bf16.msra.mxu0 %v1863
    %2737 = vmatprep.subr.bf16.mxu0 %v1872
    %2738 = vmatpush1.bf16.msra.mxu0 %v1871
    %2739 = vmatprep.subr.bf16.mxu0 %v1880
    %2740 = vmatpush1.bf16.msra.mxu0 %v1879
    %2741 = vmatprep.mubr.bf16.mxu0 %v141
    %2742 = vmatmul.mubr.bf16.gmra.mrb[0].mxu0 %v140
    %v2743 = vpop.f32.mrb[0].mxu0
    %v2744 = vadd.f32 %v552, %v2743
    %v2745 = vpop.f32.mrb[0].mxu0
    %v2746 = vadd.f32 %v556, %v2745
    %v2747 = vpop.f32.mrb[0].mxu0
    %v2748 = vpop.f32.mrb[0].mxu0
    %2749 = vdwg.mxu0
    %2750 = vmatprep.subr.bf16.mxu0 %v1888
    %2751 = vmatpush1.bf16.msra.mxu0 %v1887
    %2752 = vmatprep.subr.bf16.mxu0 %v1896
    %2753 = vmatpush1.bf16.msra.mxu0 %v1895
    %2754 = vmatprep.subr.bf16.mxu0 %v1904
    %2755 = vmatpush1.bf16.msra.mxu0 %v1903
    %2756 = vmatprep.subr.bf16.mxu0 %v1912
    %2757 = vmatpush1.bf16.msra.mxu0 %v1911
    %2758 = vmatprep.subr.bf16.mxu0 %v1920
    %2759 = vmatpush1.bf16.msra.mxu0 %v1919
    %2760 = vmatprep.subr.bf16.mxu0 %v1928
    %2761 = vmatpush1.bf16.msra.mxu0 %v1927
    %2762 = vmatprep.subr.bf16.mxu0 %v1936
    %2763 = vmatpush1.bf16.msra.mxu0 %v1935
    %2764 = vmatprep.subr.bf16.mxu0 %v1944
    %2765 = vmatpush1.bf16.msra.mxu0 %v1943
    %2766 = vmatprep.subr.bf16.mxu0 %v1952
    %2767 = vmatpush1.bf16.msra.mxu0 %v1951
    %2768 = vmatprep.subr.bf16.mxu0 %v1960
    %2769 = vmatpush1.bf16.msra.mxu0 %v1959
    %2770 = vmatprep.subr.bf16.mxu0 %v1968
    %2771 = vmatpush1.bf16.msra.mxu0 %v1967
    %2772 = vmatprep.subr.bf16.mxu0 %v1976
    %2773 = vmatpush1.bf16.msra.mxu0 %v1975
    %2774 = vmatprep.subr.bf16.mxu0 %v1984
    %2775 = vmatpush1.bf16.msra.mxu0 %v1983
    %2776 = vmatprep.subr.bf16.mxu0 %v1992
    %2777 = vmatpush1.bf16.msra.mxu0 %v1991
    %2778 = vmatprep.subr.bf16.mxu0 %v2000
    %2779 = vmatpush1.bf16.msra.mxu0 %v1999
    %2780 = vmatprep.subr.bf16.mxu0 %v2008
    %2781 = vmatpush1.bf16.msra.mxu0 %v2007
    %2782 = vmatprep.mubr.bf16.mxu0 %v143
    %2783 = vmatmul.mubr.bf16.gmra.mrb[0].mxu0 %v142
    %v2784 = vpop.f32.mrb[0].mxu0
    %v2785 = vadd.f32 %v2744, %v2784
    %v2786 = vpop.f32.mrb[0].mxu0
    %v2787 = vadd.f32 %v2746, %v2786
    %v2788 = vpop.f32.mrb[0].mxu0
    %v2789 = vpop.f32.mrb[0].mxu0
    %2790 = vdwg.mxu0
    %2791 = vmatprep.subr.bf16.mxu0 %v2016
    %2792 = vmatpush1.bf16.msra.mxu0 %v2015
    %2793 = vmatprep.subr.bf16.mxu0 %v2024
    %2794 = vmatpush1.bf16.msra.mxu0 %v2023
    %2795 = vmatprep.subr.bf16.mxu0 %v2032
    %2796 = vmatpush1.bf16.msra.mxu0 %v2031
    %2797 = vmatprep.subr.bf16.mxu0 %v2040
    %2798 = vmatpush1.bf16.msra.mxu0 %v2039
    %2799 = vmatprep.subr.bf16.mxu0 %v2048
    %2800 = vmatpush1.bf16.msra.mxu0 %v2047
    %2801 = vmatprep.subr.bf16.mxu0 %v2056
    %2802 = vmatpush1.bf16.msra.mxu0 %v2055
    %2803 = vmatprep.subr.bf16.mxu0 %v2064
    %2804 = vmatpush1.bf16.msra.mxu0 %v2063
    %2805 = vmatprep.subr.bf16.mxu0 %v2072
    %2806 = vmatpush1.bf16.msra.mxu0 %v2071
    %2807 = vmatprep.subr.bf16.mxu0 %v2080
    %2808 = vmatpush1.bf16.msra.mxu0 %v2079
    %2809 = vmatprep.subr.bf16.mxu0 %v2088
    %2810 = vmatpush1.bf16.msra.mxu0 %v2087
    %2811 = vmatprep.subr.bf16.mxu0 %v2096
    %2812 = vmatpush1.bf16.msra.mxu0 %v2095
    %2813 = vmatprep.subr.bf16.mxu0 %v2104
    %2814 = vmatpush1.bf16.msra.mxu0 %v2103
    %2815 = vmatprep.subr.bf16.mxu0 %v2112
    %2816 = vmatpush1.bf16.msra.mxu0 %v2111
    %2817 = vmatprep.subr.bf16.mxu0 %v2120
    %2818 = vmatpush1.bf16.msra.mxu0 %v2119
    %2819 = vmatprep.subr.bf16.mxu0 %v2128
    %2820 = vmatpush1.bf16.msra.mxu0 %v2127
    %2821 = vmatprep.subr.bf16.mxu0 %v2136
    %2822 = vmatpush1.bf16.msra.mxu0 %v2135
    %2823 = vmatprep.mubr.bf16.mxu0 %v145
    %2824 = vmatmul.mubr.bf16.gmra.mrb[0].mxu0 %v144
    %v2825 = vpop.f32.mrb[0].mxu0
    %v2826 = vadd.f32 %v2785, %v2825
    %v2827 = vpop.f32.mrb[0].mxu0
    %v2828 = vadd.f32 %v2787, %v2827
    %v2829 = vpop.f32.mrb[0].mxu0
    %v2830 = vpop.f32.mrb[0].mxu0
    %2831 = vdwg.mxu0
    %2832 = vmatprep.subr.bf16.mxu0 %v2144
    %2833 = vmatpush1.bf16.msra.mxu0 %v2143
    %2834 = vmatprep.subr.bf16.mxu0 0
    %2835 = vmatpush1.bf16.msra.mxu0 0
    %2836 = vmatprep.subr.bf16.mxu0 0
    %2837 = vmatpush1.bf16.msra.mxu0 0
    %2838 = vmatprep.subr.bf16.mxu0 0
    %2839 = vmatpush1.bf16.msra.mxu0 0
    %2840 = vmatprep.subr.bf16.mxu0 0
    %2841 = vmatpush1.bf16.msra.mxu0 0
    %2842 = vmatprep.subr.bf16.mxu0 0
    %2843 = vmatpush1.bf16.msra.mxu0 0
    %2844 = vmatprep.subr.bf16.mxu0 0
    %2845 = vmatpush1.bf16.msra.mxu0 0
    %2846 = vmatprep.subr.bf16.mxu0 0
    %2847 = vmatpush1.bf16.msra.mxu0 0
    %2848 = vmatprep.subr.bf16.mxu0 0
    %2849 = vmatpush1.bf16.msra.mxu0 0
    %2850 = vmatprep.subr.bf16.mxu0 0
    %2851 = vmatpush1.bf16.msra.mxu0 0
    %2852 = vmatprep.subr.bf16.mxu0 0
    %2853 = vmatpush1.bf16.msra.mxu0 0
    %2854 = vmatprep.subr.bf16.mxu0 0
    %2855 = vmatpush1.bf16.msra.mxu0 0
    %2856 = vmatprep.subr.bf16.mxu0 0
    %2857 = vmatpush1.bf16.msra.mxu0 0
    %2858 = vmatprep.subr.bf16.mxu0 0
    %2859 = vmatpush1.bf16.msra.mxu0 0
    %2860 = vmatprep.subr.bf16.mxu0 0
    %2861 = vmatpush1.bf16.msra.mxu0 0
    %2862 = vmatprep.subr.bf16.mxu0 0
    %2863 = vmatpush1.bf16.msra.mxu0 0
    %2864 = vmatprep.mubr.bf16.mxu0 0
    %2865 = vmatmul.mubr.bf16.gmra.mrb[0].mxu0 %v2543
    %v2866 = vpop.f32.mrb[0].mxu0
    %v2867 = vadd.f32 %v2826, %v2866
    %v2868 = vpop.f32.mrb[0].mxu0
    %v2869 = vadd.f32 %v2828, %v2868
    %v2870 = vpop.f32.mrb[0].mxu0
    %v2871 = vpop.f32.mrb[0].mxu0
    %2872 = vdwg.mxu0
    %2873 = vmatprep.subr.bf16.mxu0 %v1762
    %2874 = vmatpush1.bf16.msra.mxu0 %v1761
    %2875 = vmatprep.subr.bf16.mxu0 %v1770
    %2876 = vmatpush1.bf16.msra.mxu0 %v1769
    %2877 = vmatprep.subr.bf16.mxu0 %v1778
    %2878 = vmatpush1.bf16.msra.mxu0 %v1777
    %2879 = vmatprep.subr.bf16.mxu0 %v1786
    %2880 = vmatpush1.bf16.msra.mxu0 %v1785
    %2881 = vmatprep.subr.bf16.mxu0 %v1794
    %2882 = vmatpush1.bf16.msra.mxu0 %v1793
    %2883 = vmatprep.subr.bf16.mxu0 %v1802
    %2884 = vmatpush1.bf16.msra.mxu0 %v1801
    %2885 = vmatprep.subr.bf16.mxu0 %v1810
    %2886 = vmatpush1.bf16.msra.mxu0 %v1809
    %2887 = vmatprep.subr.bf16.mxu0 %v1818
    %2888 = vmatpush1.bf16.msra.mxu0 %v1817
    %2889 = vmatprep.subr.bf16.mxu0 %v1826
    %2890 = vmatpush1.bf16.msra.mxu0 %v1825
    %2891 = vmatprep.subr.bf16.mxu0 %v1834
    %2892 = vmatpush1.bf16.msra.mxu0 %v1833
    %2893 = vmatprep.subr.bf16.mxu0 %v1842
    %2894 = vmatpush1.bf16.msra.mxu0 %v1841
    %2895 = vmatprep.subr.bf16.mxu0 %v1850
    %2896 = vmatpush1.bf16.msra.mxu0 %v1849
    %2897 = vmatprep.subr.bf16.mxu0 %v1858
    %2898 = vmatpush1.bf16.msra.mxu0 %v1857
    %2899 = vmatprep.subr.bf16.mxu0 %v1866
    %2900 = vmatpush1.bf16.msra.mxu0 %v1865
    %2901 = vmatprep.subr.bf16.mxu0 %v1874
    %2902 = vmatpush1.bf16.msra.mxu0 %v1873
    %2903 = vmatprep.subr.bf16.mxu0 %v1882
    %2904 = vmatpush1.bf16.msra.mxu0 %v1881
    %2905 = vmatprep.mubr.bf16.mxu0 %v141
    %2906 = vmatmul.mubr.bf16.gmra.mrb[0].mxu0 %v140
    %v2907 = vpop.f32.mrb[0].mxu0
    %v2908 = vadd.f32 %v560, %v2907
    %v2909 = vpop.f32.mrb[0].mxu0
    %v2910 = vadd.f32 %v564, %v2909
    %v2911 = vpop.f32.mrb[0].mxu0
    %v2912 = vpop.f32.mrb[0].mxu0
    %2913 = vdwg.mxu0
    %2914 = vmatprep.subr.bf16.mxu0 %v1890
    %2915 = vmatpush1.bf16.msra.mxu0 %v1889
    %2916 = vmatprep.subr.bf16.mxu0 %v1898
    %2917 = vmatpush1.bf16.msra.mxu0 %v1897
    %2918 = vmatprep.subr.bf16.mxu0 %v1906
    %2919 = vmatpush1.bf16.msra.mxu0 %v1905
    %2920 = vmatprep.subr.bf16.mxu0 %v1914
    %2921 = vmatpush1.bf16.msra.mxu0 %v1913
    %2922 = vmatprep.subr.bf16.mxu0 %v1922
    %2923 = vmatpush1.bf16.msra.mxu0 %v1921
    %2924 = vmatprep.subr.bf16.mxu0 %v1930
    %2925 = vmatpush1.bf16.msra.mxu0 %v1929
    %2926 = vmatprep.subr.bf16.mxu0 %v1938
    %2927 = vmatpush1.bf16.msra.mxu0 %v1937
    %2928 = vmatprep.subr.bf16.mxu0 %v1946
    %2929 = vmatpush1.bf16.msra.mxu0 %v1945
    %2930 = vmatprep.subr.bf16.mxu0 %v1954
    %2931 = vmatpush1.bf16.msra.mxu0 %v1953
    %2932 = vmatprep.subr.bf16.mxu0 %v1962
    %2933 = vmatpush1.bf16.msra.mxu0 %v1961
    %2934 = vmatprep.subr.bf16.mxu0 %v1970
    %2935 = vmatpush1.bf16.msra.mxu0 %v1969
    %2936 = vmatprep.subr.bf16.mxu0 %v1978
    %2937 = vmatpush1.bf16.msra.mxu0 %v1977
    %2938 = vmatprep.subr.bf16.mxu0 %v1986
    %2939 = vmatpush1.bf16.msra.mxu0 %v1985
    %2940 = vmatprep.subr.bf16.mxu0 %v1994
    %2941 = vmatpush1.bf16.msra.mxu0 %v1993
    %2942 = vmatprep.subr.bf16.mxu0 %v2002
    %2943 = vmatpush1.bf16.msra.mxu0 %v2001
    %2944 = vmatprep.subr.bf16.mxu0 %v2010
    %2945 = vmatpush1.bf16.msra.mxu0 %v2009
    %2946 = vmatprep.mubr.bf16.mxu0 %v143
    %2947 = vmatmul.mubr.bf16.gmra.mrb[0].mxu0 %v142
    %v2948 = vpop.f32.mrb[0].mxu0
    %v2949 = vadd.f32 %v2908, %v2948
    %v2950 = vpop.f32.mrb[0].mxu0
    %v2951 = vadd.f32 %v2910, %v2950
    %v2952 = vpop.f32.mrb[0].mxu0
    %v2953 = vpop.f32.mrb[0].mxu0
    %2954 = vdwg.mxu0
    %2955 = vmatprep.subr.bf16.mxu0 %v2018
    %2956 = vmatpush1.bf16.msra.mxu0 %v2017
    %2957 = vmatprep.subr.bf16.mxu0 %v2026
    %2958 = vmatpush1.bf16.msra.mxu0 %v2025
    %2959 = vmatprep.subr.bf16.mxu0 %v2034
    %2960 = vmatpush1.bf16.msra.mxu0 %v2033
    %2961 = vmatprep.subr.bf16.mxu0 %v2042
    %2962 = vmatpush1.bf16.msra.mxu0 %v2041
    %2963 = vmatprep.subr.bf16.mxu0 %v2050
    %2964 = vmatpush1.bf16.msra.mxu0 %v2049
    %2965 = vmatprep.subr.bf16.mxu0 %v2058
    %2966 = vmatpush1.bf16.msra.mxu0 %v2057
    %2967 = vmatprep.subr.bf16.mxu0 %v2066
    %2968 = vmatpush1.bf16.msra.mxu0 %v2065
    %2969 = vmatprep.subr.bf16.mxu0 %v2074
    %2970 = vmatpush1.bf16.msra.mxu0 %v2073
    %2971 = vmatprep.subr.bf16.mxu0 %v2082
    %2972 = vmatpush1.bf16.msra.mxu0 %v2081
    %2973 = vmatprep.subr.bf16.mxu0 %v2090
    %2974 = vmatpush1.bf16.msra.mxu0 %v2089
    %2975 = vmatprep.subr.bf16.mxu0 %v2098
    %2976 = vmatpush1.bf16.msra.mxu0 %v2097
    %2977 = vmatprep.subr.bf16.mxu0 %v2106
    %2978 = vmatpush1.bf16.msra.mxu0 %v2105
    %2979 = vmatprep.subr.bf16.mxu0 %v2114
    %2980 = vmatpush1.bf16.msra.mxu0 %v2113
    %2981 = vmatprep.subr.bf16.mxu0 %v2122
    %2982 = vmatpush1.bf16.msra.mxu0 %v2121
    %2983 = vmatprep.subr.bf16.mxu0 %v2130
    %2984 = vmatpush1.bf16.msra.mxu0 %v2129
    %2985 = vmatprep.subr.bf16.mxu0 %v2138
    %2986 = vmatpush1.bf16.msra.mxu0 %v2137
    %2987 = vmatprep.mubr.bf16.mxu0 %v145
    %2988 = vmatmul.mubr.bf16.gmra.mrb[0].mxu0 %v144
    %v2989 = vpop.f32.mrb[0].mxu0
    %v2990 = vadd.f32 %v2949, %v2989
    %v2991 = vpop.f32.mrb[0].mxu0
    %v2992 = vadd.f32 %v2951, %v2991
    %v2993 = vpop.f32.mrb[0].mxu0
    %v2994 = vpop.f32.mrb[0].mxu0
    %2995 = vdwg.mxu0
    %2996 = vmatprep.subr.bf16.mxu0 %v2146
    %2997 = vmatpush1.bf16.msra.mxu0 %v2145
    %2998 = vmatprep.subr.bf16.mxu0 0
    %2999 = vmatpush1.bf16.msra.mxu0 0
    %3000 = vmatprep.subr.bf16.mxu0 0
    %3001 = vmatpush1.bf16.msra.mxu0 0
    %3002 = vmatprep.subr.bf16.mxu0 0
    %3003 = vmatpush1.bf16.msra.mxu0 0
    %3004 = vmatprep.subr.bf16.mxu0 0
    %3005 = vmatpush1.bf16.msra.mxu0 0
    %3006 = vmatprep.subr.bf16.mxu0 0
    %3007 = vmatpush1.bf16.msra.mxu0 0
    %3008 = vmatprep.subr.bf16.mxu0 0
    %3009 = vmatpush1.bf16.msra.mxu0 0
    %3010 = vmatprep.subr.bf16.mxu0 0
    %3011 = vmatpush1.bf16.msra.mxu0 0
    %3012 = vmatprep.subr.bf16.mxu0 0
    %3013 = vmatpush1.bf16.msra.mxu0 0
    %3014 = vmatprep.subr.bf16.mxu0 0
    %3015 = vmatpush1.bf16.msra.mxu0 0
    %3016 = vmatprep.subr.bf16.mxu0 0
    %3017 = vmatpush1.bf16.msra.mxu0 0
    %3018 = vmatprep.subr.bf16.mxu0 0
    %3019 = vmatpush1.bf16.msra.mxu0 0
    %3020 = vmatprep.subr.bf16.mxu0 0
    %3021 = vmatpush1.bf16.msra.mxu0 0
    %3022 = vmatprep.subr.bf16.mxu0 0
    %3023 = vmatpush1.bf16.msra.mxu0 0
    %3024 = vmatprep.subr.bf16.mxu0 0
    %3025 = vmatpush1.bf16.msra.mxu0 0
    %3026 = vmatprep.subr.bf16.mxu0 0
    %3027 = vmatpush1.bf16.msra.mxu0 0
    %3028 = vmatprep.mubr.bf16.mxu0 0
    %3029 = vmatmul.mubr.bf16.gmra.mrb[0].mxu0 %v2543
    %v3030 = vpop.f32.mrb[0].mxu0
    %v3031 = vadd.f32 %v2990, %v3030
    %v3032 = vpop.f32.mrb[0].mxu0
    %v3033 = vadd.f32 %v2992, %v3032
    %v3034 = vpop.f32.mrb[0].mxu0
    %v3035 = vpop.f32.mrb[0].mxu0
    %3036 = vdwg.mxu0
    %3037 = vmatprep.subr.bf16.mxu0 %v1764
    %3038 = vmatpush1.bf16.msra.mxu0 %v1763
    %3039 = vmatprep.subr.bf16.mxu0 %v1772
    %3040 = vmatpush1.bf16.msra.mxu0 %v1771
    %3041 = vmatprep.subr.bf16.mxu0 %v1780
    %3042 = vmatpush1.bf16.msra.mxu0 %v1779
    %3043 = vmatprep.subr.bf16.mxu0 %v1788
    %3044 = vmatpush1.bf16.msra.mxu0 %v1787
    %3045 = vmatprep.subr.bf16.mxu0 %v1796
    %3046 = vmatpush1.bf16.msra.mxu0 %v1795
    %3047 = vmatprep.subr.bf16.mxu0 %v1804
    %3048 = vmatpush1.bf16.msra.mxu0 %v1803
    %3049 = vmatprep.subr.bf16.mxu0 %v1812
    %3050 = vmatpush1.bf16.msra.mxu0 %v1811
    %3051 = vmatprep.subr.bf16.mxu0 %v1820
    %3052 = vmatpush1.bf16.msra.mxu0 %v1819
    %3053 = vmatprep.subr.bf16.mxu0 %v1828
    %3054 = vmatpush1.bf16.msra.mxu0 %v1827
    %3055 = vmatprep.subr.bf16.mxu0 %v1836
    %3056 = vmatpush1.bf16.msra.mxu0 %v1835
    %3057 = vmatprep.subr.bf16.mxu0 %v1844
    %3058 = vmatpush1.bf16.msra.mxu0 %v1843
    %3059 = vmatprep.subr.bf16.mxu0 %v1852
    %3060 = vmatpush1.bf16.msra.mxu0 %v1851
    %3061 = vmatprep.subr.bf16.mxu0 %v1860
    %3062 = vmatpush1.bf16.msra.mxu0 %v1859
    %3063 = vmatprep.subr.bf16.mxu0 %v1868
    %3064 = vmatpush1.bf16.msra.mxu0 %v1867
    %3065 = vmatprep.subr.bf16.mxu0 %v1876
    %3066 = vmatpush1.bf16.msra.mxu0 %v1875
    %3067 = vmatprep.subr.bf16.mxu0 %v1884
    %3068 = vmatpush1.bf16.msra.mxu0 %v1883
    %3069 = vmatprep.mubr.bf16.mxu0 %v141
    %3070 = vmatmul.mubr.bf16.gmra.mrb[0].mxu0 %v140
    %v3071 = vpop.f32.mrb[0].mxu0
    %v3072 = vadd.f32 %v568, %v3071
    %v3073 = vpop.f32.mrb[0].mxu0
    %v3074 = vadd.f32 %v572, %v3073
    %v3075 = vpop.f32.mrb[0].mxu0
    %v3076 = vpop.f32.mrb[0].mxu0
    %3077 = vdwg.mxu0
    %3078 = vmatprep.subr.bf16.mxu0 %v1892
    %3079 = vmatpush1.bf16.msra.mxu0 %v1891
    %3080 = vmatprep.subr.bf16.mxu0 %v1900
    %3081 = vmatpush1.bf16.msra.mxu0 %v1899
    %3082 = vmatprep.subr.bf16.mxu0 %v1908
    %3083 = vmatpush1.bf16.msra.mxu0 %v1907
    %3084 = vmatprep.subr.bf16.mxu0 %v1916
    %3085 = vmatpush1.bf16.msra.mxu0 %v1915
    %3086 = vmatprep.subr.bf16.mxu0 %v1924
    %3087 = vmatpush1.bf16.msra.mxu0 %v1923
    %3088 = vmatprep.subr.bf16.mxu0 %v1932
    %3089 = vmatpush1.bf16.msra.mxu0 %v1931
    %3090 = vmatprep.subr.bf16.mxu0 %v1940
    %3091 = vmatpush1.bf16.msra.mxu0 %v1939
    %3092 = vmatprep.subr.bf16.mxu0 %v1948
    %3093 = vmatpush1.bf16.msra.mxu0 %v1947
    %3094 = vmatprep.subr.bf16.mxu0 %v1956
    %3095 = vmatpush1.bf16.msra.mxu0 %v1955
    %3096 = vmatprep.subr.bf16.mxu0 %v1964
    %3097 = vmatpush1.bf16.msra.mxu0 %v1963
    %3098 = vmatprep.subr.bf16.mxu0 %v1972
    %3099 = vmatpush1.bf16.msra.mxu0 %v1971
    %3100 = vmatprep.subr.bf16.mxu0 %v1980
    %3101 = vmatpush1.bf16.msra.mxu0 %v1979
    %3102 = vmatprep.subr.bf16.mxu0 %v1988
    %3103 = vmatpush1.bf16.msra.mxu0 %v1987
    %3104 = vmatprep.subr.bf16.mxu0 %v1996
    %3105 = vmatpush1.bf16.msra.mxu0 %v1995
    %3106 = vmatprep.subr.bf16.mxu0 %v2004
    %3107 = vmatpush1.bf16.msra.mxu0 %v2003
    %3108 = vmatprep.subr.bf16.mxu0 %v2012
    %3109 = vmatpush1.bf16.msra.mxu0 %v2011
    %3110 = vmatprep.mubr.bf16.mxu0 %v143
    %3111 = vmatmul.mubr.bf16.gmra.mrb[0].mxu0 %v142
    %v3112 = vpop.f32.mrb[0].mxu0
    %v3113 = vadd.f32 %v3072, %v3112
    %v3114 = vpop.f32.mrb[0].mxu0
    %v3115 = vadd.f32 %v3074, %v3114
    %v3116 = vpop.f32.mrb[0].mxu0
    %v3117 = vpop.f32.mrb[0].mxu0
    %3118 = vdwg.mxu0
    %3119 = vmatprep.subr.bf16.mxu0 %v2020
    %3120 = vmatpush1.bf16.msra.mxu0 %v2019
    %3121 = vmatprep.subr.bf16.mxu0 %v2028
    %3122 = vmatpush1.bf16.msra.mxu0 %v2027
    %3123 = vmatprep.subr.bf16.mxu0 %v2036
    %3124 = vmatpush1.bf16.msra.mxu0 %v2035
    %3125 = vmatprep.subr.bf16.mxu0 %v2044
    %3126 = vmatpush1.bf16.msra.mxu0 %v2043
    %3127 = vmatprep.subr.bf16.mxu0 %v2052
    %3128 = vmatpush1.bf16.msra.mxu0 %v2051
    %3129 = vmatprep.subr.bf16.mxu0 %v2060
    %3130 = vmatpush1.bf16.msra.mxu0 %v2059
    %3131 = vmatprep.subr.bf16.mxu0 %v2068
    %3132 = vmatpush1.bf16.msra.mxu0 %v2067
    %3133 = vmatprep.subr.bf16.mxu0 %v2076
    %3134 = vmatpush1.bf16.msra.mxu0 %v2075
    %3135 = vmatprep.subr.bf16.mxu0 %v2084
    %3136 = vmatpush1.bf16.msra.mxu0 %v2083
    %3137 = vmatprep.subr.bf16.mxu0 %v2092
    %3138 = vmatpush1.bf16.msra.mxu0 %v2091
    %3139 = vmatprep.subr.bf16.mxu0 %v2100
    %3140 = vmatpush1.bf16.msra.mxu0 %v2099
    %3141 = vmatprep.subr.bf16.mxu0 %v2108
    %3142 = vmatpush1.bf16.msra.mxu0 %v2107
    %3143 = vmatprep.subr.bf16.mxu0 %v2116
    %3144 = vmatpush1.bf16.msra.mxu0 %v2115
    %3145 = vmatprep.subr.bf16.mxu0 %v2124
    %3146 = vmatpush1.bf16.msra.mxu0 %v2123
    %3147 = vmatprep.subr.bf16.mxu0 %v2132
    %3148 = vmatpush1.bf16.msra.mxu0 %v2131
    %3149 = vmatprep.subr.bf16.mxu0 %v2140
    %3150 = vmatpush1.bf16.msra.mxu0 %v2139
    %3151 = vmatprep.mubr.bf16.mxu0 %v145
    %3152 = vmatmul.mubr.bf16.gmra.mrb[0].mxu0 %v144
    %v3153 = vpop.f32.mrb[0].mxu0
    %v3154 = vadd.f32 %v3113, %v3153
    %v3155 = vpop.f32.mrb[0].mxu0
    %v3156 = vadd.f32 %v3115, %v3155
    %v3157 = vpop.f32.mrb[0].mxu0
    %v3158 = vpop.f32.mrb[0].mxu0
    %3159 = vdwg.mxu0
    %3160 = vmatprep.subr.bf16.mxu0 %v2148
    %3161 = vmatpush1.bf16.msra.mxu0 %v2147
    %3162 = vmatprep.subr.bf16.mxu0 0
    %3163 = vmatpush1.bf16.msra.mxu0 0
    %3164 = vmatprep.subr.bf16.mxu0 0
    %3165 = vmatpush1.bf16.msra.mxu0 0
    %3166 = vmatprep.subr.bf16.mxu0 0
    %3167 = vmatpush1.bf16.msra.mxu0 0
    %3168 = vmatprep.subr.bf16.mxu0 0
    %3169 = vmatpush1.bf16.msra.mxu0 0
    %3170 = vmatprep.subr.bf16.mxu0 0
    %3171 = vmatpush1.bf16.msra.mxu0 0
    %3172 = vmatprep.subr.bf16.mxu0 0
    %3173 = vmatpush1.bf16.msra.mxu0 0
    %3174 = vmatprep.subr.bf16.mxu0 0
    %3175 = vmatpush1.bf16.msra.mxu0 0
    %3176 = vmatprep.subr.bf16.mxu0 0
    %3177 = vmatpush1.bf16.msra.mxu0 0
    %3178 = vmatprep.subr.bf16.mxu0 0
    %3179 = vmatpush1.bf16.msra.mxu0 0
    %3180 = vmatprep.subr.bf16.mxu0 0
    %3181 = vmatpush1.bf16.msra.mxu0 0
    %3182 = vmatprep.subr.bf16.mxu0 0
    %3183 = vmatpush1.bf16.msra.mxu0 0
    %3184 = vmatprep.subr.bf16.mxu0 0
    %3185 = vmatpush1.bf16.msra.mxu0 0
    %3186 = vmatprep.subr.bf16.mxu0 0
    %3187 = vmatpush1.bf16.msra.mxu0 0
    %3188 = vmatprep.subr.bf16.mxu0 0
    %3189 = vmatpush1.bf16.msra.mxu0 0
    %3190 = vmatprep.subr.bf16.mxu0 0
    %3191 = vmatpush1.bf16.msra.mxu0 0
    %3192 = vmatprep.mubr.bf16.mxu0 0
    %3193 = vmatmul.mubr.bf16.gmra.mrb[0].mxu0 %v2543
    %v3194 = vpop.f32.mrb[0].mxu0
    %v3195 = vadd.f32 %v3154, %v3194
    %v3196 = vpop.f32.mrb[0].mxu0
    %v3197 = vadd.f32 %v3156, %v3196
    %v3198 = vpop.f32.mrb[0].mxu0
    %v3199 = vpop.f32.mrb[0].mxu0
    %3200 = vdwg.mxu0
    %v3201 = vmul.f32 %v2703, 0.2
    %v3202 = vmul.f32 %v2705, 0.2
    %v3203 = vmul.f32 %v2867, 0.2
    %v3204 = vmul.f32 %v2869, 0.2
    %v3205 = vmul.f32 %v3031, 0.2
    %v3206 = vmul.f32 %v3033, 0.2
    %v3207 = vmul.f32 %v3195, 0.2
    %v3208 = vmul.f32 %v3197, 0.2
    %v3209 = vmax.f32 %v2703, %v3201
    %v3210 = vmax.f32 %v2705, %v3202
    %v3211 = vmax.f32 %v2867, %v3203
    %v3212 = vmax.f32 %v2869, %v3204
    %v3213 = vmax.f32 %v3031, %v3205
    %v3214 = vmax.f32 %v3033, %v3206
    %v3215 = vmax.f32 %v3195, %v3207
    %v3216 = vmax.f32 %v3197, %v3208
    %v3217 = vpack.c.bf16 %v3209, %v3209
    %v3218 = vpack.c.bf16 %v3210, %v3210
    %v3219 = vpack.c.bf16 %v3211, %v3211
    %v3220 = vpack.c.bf16 %v3212, %v3212
    %v3221 = vpack.c.bf16 %v3213, %v3213
    %v3222 = vpack.c.bf16 %v3214, %v3214
    %v3223 = vpack.c.bf16 %v3215, %v3215
    %v3224 = vpack.c.bf16 %v3216, %v3216
    %v3225 = vld [vmem:[#allocation8] sm:$0xff]
    %v3226 = vld [vmem:[#allocation8 + $0x8] sm:$0xff]
    %v3227 = vld [vmem:[#allocation8 + $0x10] sm:$0xff]
    %v3228 = vld [vmem:[#allocation8 + $0x18] sm:$0xff]
    %v3229 = vld [vmem:[#allocation8 + $0x20] sm:$0xff]
    %v3230 = vld [vmem:[#allocation8 + $0x28] sm:$0xff]
    %v3231 = vld [vmem:[#allocation8 + $0x30] sm:$0xff]
    %v3232 = vld [vmem:[#allocation8 + $0x38] sm:$0xff]
    %v3233 = vld [vmem:[#allocation8 + $0x40] sm:$0xff]
    %v3234 = vld [vmem:[#allocation8 + $0x48] sm:$0xff]
    %v3235 = vld [vmem:[#allocation8 + $0x50] sm:$0xff]
    %v3236 = vld [vmem:[#allocation8 + $0x58] sm:$0xff]
    %v3237 = vld [vmem:[#allocation8 + $0x60] sm:$0xff]
    %v3238 = vld [vmem:[#allocation8 + $0x68] sm:$0xff]
    %v3239 = vld [vmem:[#allocation8 + $0x70] sm:$0xff]
    %v3240 = vld [vmem:[#allocation8 + $0x78] sm:$0xff]
    %v3241 = vld [vmem:[#allocation8 + $0x80] sm:$0xff]
    %v3242 = vld [vmem:[#allocation8 + $0x88] sm:$0xff]
    %v3243 = vld [vmem:[#allocation8 + $0x90] sm:$0xff]
    %v3244 = vld [vmem:[#allocation8 + $0x98] sm:$0xff]
    %v3245 = vld [vmem:[#allocation8 + $0xa0] sm:$0xff]
    %v3246 = vld [vmem:[#allocation8 + $0xa8] sm:$0xff]
    %v3247 = vld [vmem:[#allocation8 + $0xb0] sm:$0xff]
    %v3248 = vld [vmem:[#allocation8 + $0xb8] sm:$0xff]
    %v3249 = vld [vmem:[#allocation8 + $0xc0] sm:$0xff]
    %v3250 = vld [vmem:[#allocation8 + $0xc8] sm:$0xff]
    %v3251 = vld [vmem:[#allocation8 + $0xd0] sm:$0xff]
    %v3252 = vld [vmem:[#allocation8 + $0xd8] sm:$0xff]
    %v3253 = vld [vmem:[#allocation8 + $0xe0] sm:$0xff]
    %v3254 = vld [vmem:[#allocation8 + $0xe8] sm:$0xff]
    %v3255 = vld [vmem:[#allocation8 + $0xf0] sm:$0xff]
    %v3256 = vld [vmem:[#allocation8 + $0xf8] sm:$0xff]
    %v3257 = vld [vmem:[#allocation8 + $0x100] sm:$0xff]
    %v3258 = vld [vmem:[#allocation8 + $0x108] sm:$0xff]
    %v3259 = vld [vmem:[#allocation8 + $0x110] sm:$0xff]
    %v3260 = vld [vmem:[#allocation8 + $0x118] sm:$0xff]
    %v3261 = vld [vmem:[#allocation8 + $0x120] sm:$0xff]
    %v3262 = vld [vmem:[#allocation8 + $0x128] sm:$0xff]
    %v3263 = vld [vmem:[#allocation8 + $0x130] sm:$0xff]
    %v3264 = vld [vmem:[#allocation8 + $0x138] sm:$0xff]
    %v3265 = vld [vmem:[#allocation8 + $0x140] sm:$0xff]
    %v3266 = vld [vmem:[#allocation8 + $0x148] sm:$0xff]
    %v3267 = vld [vmem:[#allocation8 + $0x150] sm:$0xff]
    %v3268 = vld [vmem:[#allocation8 + $0x158] sm:$0xff]
    %v3269 = vld [vmem:[#allocation8 + $0x160] sm:$0xff]
    %v3270 = vld [vmem:[#allocation8 + $0x168] sm:$0xff]
    %v3271 = vld [vmem:[#allocation8 + $0x170] sm:$0xff]
    %v3272 = vld [vmem:[#allocation8 + $0x178] sm:$0xff]
    %v3273 = vld [vmem:[#allocation8 + $0x180] sm:$0xff]
    %v3274 = vld [vmem:[#allocation8 + $0x188] sm:$0xff]
    %v3275 = vld [vmem:[#allocation8 + $0x190] sm:$0xff]
    %v3276 = vld [vmem:[#allocation8 + $0x198] sm:$0xff]
    %v3277 = vld [vmem:[#allocation8 + $0x1a0] sm:$0xff]
    %v3278 = vld [vmem:[#allocation8 + $0x1a8] sm:$0xff]
    %v3279 = vld [vmem:[#allocation8 + $0x1b0] sm:$0xff]
    %v3280 = vld [vmem:[#allocation8 + $0x1b8] sm:$0xff]
    %v3281 = vld [vmem:[#allocation8 + $0x1c0] sm:$0xff]
    %v3282 = vld [vmem:[#allocation8 + $0x1c8] sm:$0xff]
    %v3283 = vld [vmem:[#allocation8 + $0x1d0] sm:$0xff]
    %v3284 = vld [vmem:[#allocation8 + $0x1d8] sm:$0xff]
    %v3285 = vld [vmem:[#allocation8 + $0x1e0] sm:$0xff]
    %v3286 = vld [vmem:[#allocation8 + $0x1e8] sm:$0xff]
    %v3287 = vld [vmem:[#allocation8 + $0x1f0] sm:$0xff]
    %v3288 = vld [vmem:[#allocation8 + $0x1f8] sm:$0xff]
    %v3289 = vld [vmem:[#allocation8 + $0x200] sm:$0xff]
    %v3290 = vld [vmem:[#allocation8 + $0x208] sm:$0xff]
    %v3291 = vld [vmem:[#allocation8 + $0x210] sm:$0xff]
    %v3292 = vld [vmem:[#allocation8 + $0x218] sm:$0xff]
    %v3293 = vld [vmem:[#allocation8 + $0x220] sm:$0xff]
    %v3294 = vld [vmem:[#allocation8 + $0x228] sm:$0xff]
    %v3295 = vld [vmem:[#allocation8 + $0x230] sm:$0xff]
    %v3296 = vld [vmem:[#allocation8 + $0x238] sm:$0xff]
    %v3297 = vld [vmem:[#allocation8 + $0x240] sm:$0xff]
    %v3298 = vld [vmem:[#allocation8 + $0x248] sm:$0xff]
    %v3299 = vld [vmem:[#allocation8 + $0x250] sm:$0xff]
    %v3300 = vld [vmem:[#allocation8 + $0x258] sm:$0xff]
    %v3301 = vld [vmem:[#allocation8 + $0x260] sm:$0xff]
    %v3302 = vld [vmem:[#allocation8 + $0x268] sm:$0xff]
    %v3303 = vld [vmem:[#allocation8 + $0x270] sm:$0xff]
    %v3304 = vld [vmem:[#allocation8 + $0x278] sm:$0xff]
    %v3305 = vld [vmem:[#allocation8 + $0x280] sm:$0xff]
    %v3306 = vld [vmem:[#allocation8 + $0x288] sm:$0xff]
    %v3307 = vld [vmem:[#allocation8 + $0x290] sm:$0xff]
    %v3308 = vld [vmem:[#allocation8 + $0x298] sm:$0xff]
    %v3309 = vld [vmem:[#allocation8 + $0x2a0] sm:$0xff]
    %v3310 = vld [vmem:[#allocation8 + $0x2a8] sm:$0xff]
    %v3311 = vld [vmem:[#allocation8 + $0x2b0] sm:$0xff]
    %v3312 = vld [vmem:[#allocation8 + $0x2b8] sm:$0xff]
    %v3313 = vld [vmem:[#allocation8 + $0x2c0] sm:$0xff]
    %v3314 = vld [vmem:[#allocation8 + $0x2c8] sm:$0xff]
    %v3315 = vld [vmem:[#allocation8 + $0x2d0] sm:$0xff]
    %v3316 = vld [vmem:[#allocation8 + $0x2d8] sm:$0xff]
    %v3317 = vld [vmem:[#allocation8 + $0x2e0] sm:$0xff]
    %v3318 = vld [vmem:[#allocation8 + $0x2e8] sm:$0xff]
    %v3319 = vld [vmem:[#allocation8 + $0x2f0] sm:$0xff]
    %v3320 = vld [vmem:[#allocation8 + $0x2f8] sm:$0xff]
    %v3321 = vld [vmem:[#allocation8 + $0x300] sm:$0xff]
    %v3322 = vld [vmem:[#allocation8 + $0x308] sm:$0xff]
    %v3323 = vld [vmem:[#allocation8 + $0x310] sm:$0xff]
    %v3324 = vld [vmem:[#allocation8 + $0x318] sm:$0xff]
    %v3325 = vld [vmem:[#allocation8 + $0x320] sm:$0xff]
    %v3326 = vld [vmem:[#allocation8 + $0x328] sm:$0xff]
    %v3327 = vld [vmem:[#allocation8 + $0x330] sm:$0xff]
    %v3328 = vld [vmem:[#allocation8 + $0x338] sm:$0xff]
    %v3329 = vld [vmem:[#allocation8 + $0x340] sm:$0xff]
    %v3330 = vld [vmem:[#allocation8 + $0x348] sm:$0xff]
    %v3331 = vld [vmem:[#allocation8 + $0x350] sm:$0xff]
    %v3332 = vld [vmem:[#allocation8 + $0x358] sm:$0xff]
    %v3333 = vld [vmem:[#allocation8 + $0x360] sm:$0xff]
    %v3334 = vld [vmem:[#allocation8 + $0x368] sm:$0xff]
    %v3335 = vld [vmem:[#allocation8 + $0x370] sm:$0xff]
    %v3336 = vld [vmem:[#allocation8 + $0x378] sm:$0xff]
    %v3337 = vld [vmem:[#allocation8 + $0x380] sm:$0xff]
    %v3338 = vld [vmem:[#allocation8 + $0x388] sm:$0xff]
    %v3339 = vld [vmem:[#allocation8 + $0x390] sm:$0xff]
    %v3340 = vld [vmem:[#allocation8 + $0x398] sm:$0xff]
    %v3341 = vld [vmem:[#allocation8 + $0x3a0] sm:$0xff]
    %v3342 = vld [vmem:[#allocation8 + $0x3a8] sm:$0xff]
    %v3343 = vld [vmem:[#allocation8 + $0x3b0] sm:$0xff]
    %v3344 = vld [vmem:[#allocation8 + $0x3b8] sm:$0xff]
    %v3345 = vld [vmem:[#allocation8 + $0x3c0] sm:$0xff]
    %v3346 = vld [vmem:[#allocation8 + $0x3c8] sm:$0xff]
    %v3347 = vld [vmem:[#allocation8 + $0x3d0] sm:$0xff]
    %v3348 = vld [vmem:[#allocation8 + $0x3d8] sm:$0xff]
    %v3349 = vld [vmem:[#allocation8 + $0x3e0] sm:$0xff]
    %v3350 = vld [vmem:[#allocation8 + $0x3e8] sm:$0xff]
    %v3351 = vld [vmem:[#allocation8 + $0x3f0] sm:$0xff]
    %v3352 = vld [vmem:[#allocation8 + $0x3f8] sm:$0xff]
    %v3353 = vld [vmem:[#allocation8 + $0x400] sm:$0xff]
    %v3354 = vld [vmem:[#allocation8 + $0x408] sm:$0xff]
    %v3355 = vld [vmem:[#allocation8 + $0x410] sm:$0xff]
    %v3356 = vld [vmem:[#allocation8 + $0x418] sm:$0xff]
    %v3357 = vld [vmem:[#allocation8 + $0x420] sm:$0xff]
    %v3358 = vld [vmem:[#allocation8 + $0x428] sm:$0xff]
    %v3359 = vld [vmem:[#allocation8 + $0x430] sm:$0xff]
    %v3360 = vld [vmem:[#allocation8 + $0x438] sm:$0xff]
    %v3361 = vld [vmem:[#allocation8 + $0x440] sm:$0xff]
    %v3362 = vld [vmem:[#allocation8 + $0x448] sm:$0xff]
    %v3363 = vld [vmem:[#allocation8 + $0x450] sm:$0xff]
    %v3364 = vld [vmem:[#allocation8 + $0x458] sm:$0xff]
    %v3365 = vld [vmem:[#allocation8 + $0x460] sm:$0xff]
    %v3366 = vld [vmem:[#allocation8 + $0x468] sm:$0xff]
    %v3367 = vld [vmem:[#allocation8 + $0x470] sm:$0xff]
    %v3368 = vld [vmem:[#allocation8 + $0x478] sm:$0xff]
    %v3369 = vld [vmem:[#allocation8 + $0x480] sm:$0xff]
    %v3370 = vld [vmem:[#allocation8 + $0x488] sm:$0xff]
    %v3371 = vld [vmem:[#allocation8 + $0x490] sm:$0xff]
    %v3372 = vld [vmem:[#allocation8 + $0x498] sm:$0xff]
    %v3373 = vld [vmem:[#allocation8 + $0x4a0] sm:$0xff]
    %v3374 = vld [vmem:[#allocation8 + $0x4a8] sm:$0xff]
    %v3375 = vld [vmem:[#allocation8 + $0x4b0] sm:$0xff]
    %v3376 = vld [vmem:[#allocation8 + $0x4b8] sm:$0xff]
    %v3377 = vld [vmem:[#allocation8 + $0x4c0] sm:$0xff]
    %v3378 = vld [vmem:[#allocation8 + $0x4c8] sm:$0xff]
    %v3379 = vld [vmem:[#allocation8 + $0x4d0] sm:$0xff]
    %v3380 = vld [vmem:[#allocation8 + $0x4d8] sm:$0xff]
    %v3381 = vld [vmem:[#allocation8 + $0x4e0] sm:$0xff]
    %v3382 = vld [vmem:[#allocation8 + $0x4e8] sm:$0xff]
    %v3383 = vld [vmem:[#allocation8 + $0x4f0] sm:$0xff]
    %v3384 = vld [vmem:[#allocation8 + $0x4f8] sm:$0xff]
    %v3385 = vld [vmem:[#allocation8 + $0x500] sm:$0xff]
    %v3386 = vld [vmem:[#allocation8 + $0x508] sm:$0xff]
    %v3387 = vld [vmem:[#allocation8 + $0x510] sm:$0xff]
    %v3388 = vld [vmem:[#allocation8 + $0x518] sm:$0xff]
    %v3389 = vld [vmem:[#allocation8 + $0x520] sm:$0xff]
    %v3390 = vld [vmem:[#allocation8 + $0x528] sm:$0xff]
    %v3391 = vld [vmem:[#allocation8 + $0x530] sm:$0xff]
    %v3392 = vld [vmem:[#allocation8 + $0x538] sm:$0xff]
    %v3393 = vld [vmem:[#allocation8 + $0x540] sm:$0xff]
    %v3394 = vld [vmem:[#allocation8 + $0x548] sm:$0xff]
    %v3395 = vld [vmem:[#allocation8 + $0x550] sm:$0xff]
    %v3396 = vld [vmem:[#allocation8 + $0x558] sm:$0xff]
    %v3397 = vld [vmem:[#allocation8 + $0x560] sm:$0xff]
    %v3398 = vld [vmem:[#allocation8 + $0x568] sm:$0xff]
    %v3399 = vld [vmem:[#allocation8 + $0x570] sm:$0xff]
    %v3400 = vld [vmem:[#allocation8 + $0x578] sm:$0xff]
    %v3401 = vld [vmem:[#allocation8 + $0x580] sm:$0xff]
    %v3402 = vld [vmem:[#allocation8 + $0x588] sm:$0xff]
    %v3403 = vld [vmem:[#allocation8 + $0x590] sm:$0xff]
    %v3404 = vld [vmem:[#allocation8 + $0x598] sm:$0xff]
    %v3405 = vld [vmem:[#allocation8 + $0x5a0] sm:$0xff]
    %v3406 = vld [vmem:[#allocation8 + $0x5a8] sm:$0xff]
    %v3407 = vld [vmem:[#allocation8 + $0x5b0] sm:$0xff]
    %v3408 = vld [vmem:[#allocation8 + $0x5b8] sm:$0xff]
    %v3409 = vld [vmem:[#allocation8 + $0x5c0] sm:$0xff]
    %v3410 = vld [vmem:[#allocation8 + $0x5c8] sm:$0xff]
    %v3411 = vld [vmem:[#allocation8 + $0x5d0] sm:$0xff]
    %v3412 = vld [vmem:[#allocation8 + $0x5d8] sm:$0xff]
    %v3413 = vld [vmem:[#allocation8 + $0x5e0] sm:$0xff]
    %v3414 = vld [vmem:[#allocation8 + $0x5e8] sm:$0xff]
    %v3415 = vld [vmem:[#allocation8 + $0x5f0] sm:$0xff]
    %v3416 = vld [vmem:[#allocation8 + $0x5f8] sm:$0xff]
    %v3417 = vld [vmem:[#allocation8 + $0x600] sm:$0xff]
    %v3418 = vld [vmem:[#allocation8 + $0x608] sm:$0xff]
    %v3419 = vld [vmem:[#allocation8 + $0x610] sm:$0xff]
    %v3420 = vld [vmem:[#allocation8 + $0x618] sm:$0xff]
    %v3421 = vld [vmem:[#allocation8 + $0x620] sm:$0xff]
    %v3422 = vld [vmem:[#allocation8 + $0x628] sm:$0xff]
    %v3423 = vld [vmem:[#allocation8 + $0x630] sm:$0xff]
    %v3424 = vld [vmem:[#allocation8 + $0x638] sm:$0xff]
    %v3425 = vld [vmem:[#allocation8 + $0x640] sm:$0xff]
    %v3426 = vld [vmem:[#allocation8 + $0x648] sm:$0xff]
    %v3427 = vld [vmem:[#allocation8 + $0x650] sm:$0xff]
    %v3428 = vld [vmem:[#allocation8 + $0x658] sm:$0xff]
    %v3429 = vld [vmem:[#allocation8 + $0x660] sm:$0xff]
    %v3430 = vld [vmem:[#allocation8 + $0x668] sm:$0xff]
    %v3431 = vld [vmem:[#allocation8 + $0x670] sm:$0xff]
    %v3432 = vld [vmem:[#allocation8 + $0x678] sm:$0xff]
    %v3433 = vld [vmem:[#allocation8 + $0x680] sm:$0xff]
    %v3434 = vld [vmem:[#allocation8 + $0x688] sm:$0xff]
    %v3435 = vld [vmem:[#allocation8 + $0x690] sm:$0xff]
    %v3436 = vld [vmem:[#allocation8 + $0x698] sm:$0xff]
    %v3437 = vld [vmem:[#allocation8 + $0x6a0] sm:$0xff]
    %v3438 = vld [vmem:[#allocation8 + $0x6a8] sm:$0xff]
    %v3439 = vld [vmem:[#allocation8 + $0x6b0] sm:$0xff]
    %v3440 = vld [vmem:[#allocation8 + $0x6b8] sm:$0xff]
    %v3441 = vld [vmem:[#allocation8 + $0x6c0] sm:$0xff]
    %v3442 = vld [vmem:[#allocation8 + $0x6c8] sm:$0xff]
    %v3443 = vld [vmem:[#allocation8 + $0x6d0] sm:$0xff]
    %v3444 = vld [vmem:[#allocation8 + $0x6d8] sm:$0xff]
    %v3445 = vld [vmem:[#allocation8 + $0x6e0] sm:$0xff]
    %v3446 = vld [vmem:[#allocation8 + $0x6e8] sm:$0xff]
    %v3447 = vld [vmem:[#allocation8 + $0x6f0] sm:$0xff]
    %v3448 = vld [vmem:[#allocation8 + $0x6f8] sm:$0xff]
    %v3449 = vld [vmem:[#allocation8 + $0x700] sm:$0xff]
    %v3450 = vld [vmem:[#allocation8 + $0x708] sm:$0xff]
    %v3451 = vld [vmem:[#allocation8 + $0x710] sm:$0xff]
    %v3452 = vld [vmem:[#allocation8 + $0x718] sm:$0xff]
    %v3453 = vld [vmem:[#allocation8 + $0x720] sm:$0xff]
    %v3454 = vld [vmem:[#allocation8 + $0x728] sm:$0xff]
    %v3455 = vld [vmem:[#allocation8 + $0x730] sm:$0xff]
    %v3456 = vld [vmem:[#allocation8 + $0x738] sm:$0xff]
    %v3457 = vld [vmem:[#allocation8 + $0x740] sm:$0xff]
    %v3458 = vld [vmem:[#allocation8 + $0x748] sm:$0xff]
    %v3459 = vld [vmem:[#allocation8 + $0x750] sm:$0xff]
    %v3460 = vld [vmem:[#allocation8 + $0x758] sm:$0xff]
    %v3461 = vld [vmem:[#allocation8 + $0x760] sm:$0xff]
    %v3462 = vld [vmem:[#allocation8 + $0x768] sm:$0xff]
    %v3463 = vld [vmem:[#allocation8 + $0x770] sm:$0xff]
    %v3464 = vld [vmem:[#allocation8 + $0x778] sm:$0xff]
    %v3465 = vld [vmem:[#allocation8 + $0x780] sm:$0xff]
    %v3466 = vld [vmem:[#allocation8 + $0x788] sm:$0xff]
    %v3467 = vld [vmem:[#allocation8 + $0x790] sm:$0xff]
    %v3468 = vld [vmem:[#allocation8 + $0x798] sm:$0xff]
    %v3469 = vld [vmem:[#allocation8 + $0x7a0] sm:$0xff]
    %v3470 = vld [vmem:[#allocation8 + $0x7a8] sm:$0xff]
    %v3471 = vld [vmem:[#allocation8 + $0x7b0] sm:$0xff]
    %v3472 = vld [vmem:[#allocation8 + $0x7b8] sm:$0xff]
    %v3473 = vld [vmem:[#allocation8 + $0x7c0] sm:$0xff]
    %v3474 = vld [vmem:[#allocation8 + $0x7c8] sm:$0xff]
    %v3475 = vld [vmem:[#allocation8 + $0x7d0] sm:$0xff]
    %v3476 = vld [vmem:[#allocation8 + $0x7d8] sm:$0xff]
    %v3477 = vld [vmem:[#allocation8 + $0x7e0] sm:$0xff]
    %v3478 = vld [vmem:[#allocation8 + $0x7e8] sm:$0xff]
    %v3479 = vld [vmem:[#allocation8 + $0x7f0] sm:$0xff]
    %v3480 = vld [vmem:[#allocation8 + $0x7f8] sm:$0xff]
    %v3481 = vld [vmem:[#allocation10] sm:$0xf]
    %v3483 = vlaneseq
    %v3484 = vshrl.u32 %v3483, 7
    %v3485 = vsub.s32 0, %v3484
    %v3486 = vrot.slane %v3481, %v3485
    %v3487 = vlaneseq
    %v3488 = vshrl.u32 %v3487, 7
    %v3489 = vsub.s32 1, %v3488
    %v3490 = vrot.slane %v3481, %v3489
    %v3491 = vlaneseq
    %v3492 = vshrl.u32 %v3491, 7
    %v3493 = vsub.s32 2, %v3492
    %v3494 = vrot.slane %v3481, %v3493
    %v3495 = vlaneseq
    %v3496 = vshrl.u32 %v3495, 7
    %v3497 = vsub.s32 3, %v3496
    %v3498 = vrot.slane %v3481, %v3497
    %v3759 = vunpack.c.l.b16 %v3225
    %v3760 = vunpack.c.h.b16 %v3225
    %v3761 = vunpack.c.l.b16 %v3226
    %v3762 = vunpack.c.h.b16 %v3226
    %v3763 = vunpack.c.l.b16 %v3227
    %v3764 = vunpack.c.h.b16 %v3227
    %v3765 = vunpack.c.l.b16 %v3228
    %v3766 = vunpack.c.h.b16 %v3228
    %v3767 = vunpack.c.l.b16 %v3229
    %v3768 = vunpack.c.h.b16 %v3229
    %v3769 = vunpack.c.l.b16 %v3230
    %v3770 = vunpack.c.h.b16 %v3230
    %v3771 = vunpack.c.l.b16 %v3231
    %v3772 = vunpack.c.h.b16 %v3231
    %v3773 = vunpack.c.l.b16 %v3232
    %v3774 = vunpack.c.h.b16 %v3232
    %v3775 = vunpack.c.l.b16 %v3233
    %v3776 = vunpack.c.h.b16 %v3233
    %v3777 = vunpack.c.l.b16 %v3234
    %v3778 = vunpack.c.h.b16 %v3234
    %v3779 = vunpack.c.l.b16 %v3235
    %v3780 = vunpack.c.h.b16 %v3235
    %v3781 = vunpack.c.l.b16 %v3236
    %v3782 = vunpack.c.h.b16 %v3236
    %v3783 = vunpack.c.l.b16 %v3237
    %v3784 = vunpack.c.h.b16 %v3237
    %v3785 = vunpack.c.l.b16 %v3238
    %v3786 = vunpack.c.h.b16 %v3238
    %v3787 = vunpack.c.l.b16 %v3239
    %v3788 = vunpack.c.h.b16 %v3239
    %v3789 = vunpack.c.l.b16 %v3240
    %v3790 = vunpack.c.h.b16 %v3240
    %v3791 = vunpack.c.l.b16 %v3241
    %v3792 = vunpack.c.h.b16 %v3241
    %v3793 = vunpack.c.l.b16 %v3242
    %v3794 = vunpack.c.h.b16 %v3242
    %v3795 = vunpack.c.l.b16 %v3243
    %v3796 = vunpack.c.h.b16 %v3243
    %v3797 = vunpack.c.l.b16 %v3244
    %v3798 = vunpack.c.h.b16 %v3244
    %v3799 = vunpack.c.l.b16 %v3245
    %v3800 = vunpack.c.h.b16 %v3245
    %v3801 = vunpack.c.l.b16 %v3246
    %v3802 = vunpack.c.h.b16 %v3246
    %v3803 = vunpack.c.l.b16 %v3247
    %v3804 = vunpack.c.h.b16 %v3247
    %v3805 = vunpack.c.l.b16 %v3248
    %v3806 = vunpack.c.h.b16 %v3248
    %v3807 = vunpack.c.l.b16 %v3249
    %v3808 = vunpack.c.h.b16 %v3249
    %v3809 = vunpack.c.l.b16 %v3250
    %v3810 = vunpack.c.h.b16 %v3250
    %v3811 = vunpack.c.l.b16 %v3251
    %v3812 = vunpack.c.h.b16 %v3251
    %v3813 = vunpack.c.l.b16 %v3252
    %v3814 = vunpack.c.h.b16 %v3252
    %v3815 = vunpack.c.l.b16 %v3253
    %v3816 = vunpack.c.h.b16 %v3253
    %v3817 = vunpack.c.l.b16 %v3254
    %v3818 = vunpack.c.h.b16 %v3254
    %v3819 = vunpack.c.l.b16 %v3255
    %v3820 = vunpack.c.h.b16 %v3255
    %v3821 = vunpack.c.l.b16 %v3256
    %v3822 = vunpack.c.h.b16 %v3256
    %v3823 = vunpack.c.l.b16 %v3257
    %v3824 = vunpack.c.h.b16 %v3257
    %v3825 = vunpack.c.l.b16 %v3258
    %v3826 = vunpack.c.h.b16 %v3258
    %v3827 = vunpack.c.l.b16 %v3259
    %v3828 = vunpack.c.h.b16 %v3259
    %v3829 = vunpack.c.l.b16 %v3260
    %v3830 = vunpack.c.h.b16 %v3260
    %v3831 = vunpack.c.l.b16 %v3261
    %v3832 = vunpack.c.h.b16 %v3261
    %v3833 = vunpack.c.l.b16 %v3262
    %v3834 = vunpack.c.h.b16 %v3262
    %v3835 = vunpack.c.l.b16 %v3263
    %v3836 = vunpack.c.h.b16 %v3263
    %v3837 = vunpack.c.l.b16 %v3264
    %v3838 = vunpack.c.h.b16 %v3264
    %v3839 = vunpack.c.l.b16 %v3265
    %v3840 = vunpack.c.h.b16 %v3265
    %v3841 = vunpack.c.l.b16 %v3266
    %v3842 = vunpack.c.h.b16 %v3266
    %v3843 = vunpack.c.l.b16 %v3267
    %v3844 = vunpack.c.h.b16 %v3267
    %v3845 = vunpack.c.l.b16 %v3268
    %v3846 = vunpack.c.h.b16 %v3268
    %v3847 = vunpack.c.l.b16 %v3269
    %v3848 = vunpack.c.h.b16 %v3269
    %v3849 = vunpack.c.l.b16 %v3270
    %v3850 = vunpack.c.h.b16 %v3270
    %v3851 = vunpack.c.l.b16 %v3271
    %v3852 = vunpack.c.h.b16 %v3271
    %v3853 = vunpack.c.l.b16 %v3272
    %v3854 = vunpack.c.h.b16 %v3272
    %v3855 = vunpack.c.l.b16 %v3273
    %v3856 = vunpack.c.h.b16 %v3273
    %v3857 = vunpack.c.l.b16 %v3274
    %v3858 = vunpack.c.h.b16 %v3274
    %v3859 = vunpack.c.l.b16 %v3275
    %v3860 = vunpack.c.h.b16 %v3275
    %v3861 = vunpack.c.l.b16 %v3276
    %v3862 = vunpack.c.h.b16 %v3276
    %v3863 = vunpack.c.l.b16 %v3277
    %v3864 = vunpack.c.h.b16 %v3277
    %v3865 = vunpack.c.l.b16 %v3278
    %v3866 = vunpack.c.h.b16 %v3278
    %v3867 = vunpack.c.l.b16 %v3279
    %v3868 = vunpack.c.h.b16 %v3279
    %v3869 = vunpack.c.l.b16 %v3280
    %v3870 = vunpack.c.h.b16 %v3280
    %v3871 = vunpack.c.l.b16 %v3281
    %v3872 = vunpack.c.h.b16 %v3281
    %v3873 = vunpack.c.l.b16 %v3282
    %v3874 = vunpack.c.h.b16 %v3282
    %v3875 = vunpack.c.l.b16 %v3283
    %v3876 = vunpack.c.h.b16 %v3283
    %v3877 = vunpack.c.l.b16 %v3284
    %v3878 = vunpack.c.h.b16 %v3284
    %v3879 = vunpack.c.l.b16 %v3285
    %v3880 = vunpack.c.h.b16 %v3285
    %v3881 = vunpack.c.l.b16 %v3286
    %v3882 = vunpack.c.h.b16 %v3286
    %v3883 = vunpack.c.l.b16 %v3287
    %v3884 = vunpack.c.h.b16 %v3287
    %v3885 = vunpack.c.l.b16 %v3288
    %v3886 = vunpack.c.h.b16 %v3288
    %v3887 = vunpack.c.l.b16 %v3289
    %v3888 = vunpack.c.h.b16 %v3289
    %v3889 = vunpack.c.l.b16 %v3290
    %v3890 = vunpack.c.h.b16 %v3290
    %v3891 = vunpack.c.l.b16 %v3291
    %v3892 = vunpack.c.h.b16 %v3291
    %v3893 = vunpack.c.l.b16 %v3292
    %v3894 = vunpack.c.h.b16 %v3292
    %v3895 = vunpack.c.l.b16 %v3293
    %v3896 = vunpack.c.h.b16 %v3293
    %v3897 = vunpack.c.l.b16 %v3294
    %v3898 = vunpack.c.h.b16 %v3294
    %v3899 = vunpack.c.l.b16 %v3295
    %v3900 = vunpack.c.h.b16 %v3295
    %v3901 = vunpack.c.l.b16 %v3296
    %v3902 = vunpack.c.h.b16 %v3296
    %v3903 = vunpack.c.l.b16 %v3297
    %v3904 = vunpack.c.h.b16 %v3297
    %v3905 = vunpack.c.l.b16 %v3298
    %v3906 = vunpack.c.h.b16 %v3298
    %v3907 = vunpack.c.l.b16 %v3299
    %v3908 = vunpack.c.h.b16 %v3299
    %v3909 = vunpack.c.l.b16 %v3300
    %v3910 = vunpack.c.h.b16 %v3300
    %v3911 = vunpack.c.l.b16 %v3301
    %v3912 = vunpack.c.h.b16 %v3301
    %v3913 = vunpack.c.l.b16 %v3302
    %v3914 = vunpack.c.h.b16 %v3302
    %v3915 = vunpack.c.l.b16 %v3303
    %v3916 = vunpack.c.h.b16 %v3303
    %v3917 = vunpack.c.l.b16 %v3304
    %v3918 = vunpack.c.h.b16 %v3304
    %v3919 = vunpack.c.l.b16 %v3305
    %v3920 = vunpack.c.h.b16 %v3305
    %v3921 = vunpack.c.l.b16 %v3306
    %v3922 = vunpack.c.h.b16 %v3306
    %v3923 = vunpack.c.l.b16 %v3307
    %v3924 = vunpack.c.h.b16 %v3307
    %v3925 = vunpack.c.l.b16 %v3308
    %v3926 = vunpack.c.h.b16 %v3308
    %v3927 = vunpack.c.l.b16 %v3309
    %v3928 = vunpack.c.h.b16 %v3309
    %v3929 = vunpack.c.l.b16 %v3310
    %v3930 = vunpack.c.h.b16 %v3310
    %v3931 = vunpack.c.l.b16 %v3311
    %v3932 = vunpack.c.h.b16 %v3311
    %v3933 = vunpack.c.l.b16 %v3312
    %v3934 = vunpack.c.h.b16 %v3312
    %v3935 = vunpack.c.l.b16 %v3313
    %v3936 = vunpack.c.h.b16 %v3313
    %v3937 = vunpack.c.l.b16 %v3314
    %v3938 = vunpack.c.h.b16 %v3314
    %v3939 = vunpack.c.l.b16 %v3315
    %v3940 = vunpack.c.h.b16 %v3315
    %v3941 = vunpack.c.l.b16 %v3316
    %v3942 = vunpack.c.h.b16 %v3316
    %v3943 = vunpack.c.l.b16 %v3317
    %v3944 = vunpack.c.h.b16 %v3317
    %v3945 = vunpack.c.l.b16 %v3318
    %v3946 = vunpack.c.h.b16 %v3318
    %v3947 = vunpack.c.l.b16 %v3319
    %v3948 = vunpack.c.h.b16 %v3319
    %v3949 = vunpack.c.l.b16 %v3320
    %v3950 = vunpack.c.h.b16 %v3320
    %v3951 = vunpack.c.l.b16 %v3321
    %v3952 = vunpack.c.h.b16 %v3321
    %v3953 = vunpack.c.l.b16 %v3322
    %v3954 = vunpack.c.h.b16 %v3322
    %v3955 = vunpack.c.l.b16 %v3323
    %v3956 = vunpack.c.h.b16 %v3323
    %v3957 = vunpack.c.l.b16 %v3324
    %v3958 = vunpack.c.h.b16 %v3324
    %v3959 = vunpack.c.l.b16 %v3325
    %v3960 = vunpack.c.h.b16 %v3325
    %v3961 = vunpack.c.l.b16 %v3326
    %v3962 = vunpack.c.h.b16 %v3326
    %v3963 = vunpack.c.l.b16 %v3327
    %v3964 = vunpack.c.h.b16 %v3327
    %v3965 = vunpack.c.l.b16 %v3328
    %v3966 = vunpack.c.h.b16 %v3328
    %v3967 = vunpack.c.l.b16 %v3329
    %v3968 = vunpack.c.h.b16 %v3329
    %v3969 = vunpack.c.l.b16 %v3330
    %v3970 = vunpack.c.h.b16 %v3330
    %v3971 = vunpack.c.l.b16 %v3331
    %v3972 = vunpack.c.h.b16 %v3331
    %v3973 = vunpack.c.l.b16 %v3332
    %v3974 = vunpack.c.h.b16 %v3332
    %v3975 = vunpack.c.l.b16 %v3333
    %v3976 = vunpack.c.h.b16 %v3333
    %v3977 = vunpack.c.l.b16 %v3334
    %v3978 = vunpack.c.h.b16 %v3334
    %v3979 = vunpack.c.l.b16 %v3335
    %v3980 = vunpack.c.h.b16 %v3335
    %v3981 = vunpack.c.l.b16 %v3336
    %v3982 = vunpack.c.h.b16 %v3336
    %v3983 = vunpack.c.l.b16 %v3337
    %v3984 = vunpack.c.h.b16 %v3337
    %v3985 = vunpack.c.l.b16 %v3338
    %v3986 = vunpack.c.h.b16 %v3338
    %v3987 = vunpack.c.l.b16 %v3339
    %v3988 = vunpack.c.h.b16 %v3339
    %v3989 = vunpack.c.l.b16 %v3340
    %v3990 = vunpack.c.h.b16 %v3340
    %v3991 = vunpack.c.l.b16 %v3341
    %v3992 = vunpack.c.h.b16 %v3341
    %v3993 = vunpack.c.l.b16 %v3342
    %v3994 = vunpack.c.h.b16 %v3342
    %v3995 = vunpack.c.l.b16 %v3343
    %v3996 = vunpack.c.h.b16 %v3343
    %v3997 = vunpack.c.l.b16 %v3344
    %v3998 = vunpack.c.h.b16 %v3344
    %v3999 = vunpack.c.l.b16 %v3345
    %v4000 = vunpack.c.h.b16 %v3345
    %v4001 = vunpack.c.l.b16 %v3346
    %v4002 = vunpack.c.h.b16 %v3346
    %v4003 = vunpack.c.l.b16 %v3347
    %v4004 = vunpack.c.h.b16 %v3347
    %v4005 = vunpack.c.l.b16 %v3348
    %v4006 = vunpack.c.h.b16 %v3348
    %v4007 = vunpack.c.l.b16 %v3349
    %v4008 = vunpack.c.h.b16 %v3349
    %v4009 = vunpack.c.l.b16 %v3350
    %v4010 = vunpack.c.h.b16 %v3350
    %v4011 = vunpack.c.l.b16 %v3351
    %v4012 = vunpack.c.h.b16 %v3351
    %v4013 = vunpack.c.l.b16 %v3352
    %v4014 = vunpack.c.h.b16 %v3352
    %v4015 = vunpack.c.l.b16 %v3353
    %v4016 = vunpack.c.h.b16 %v3353
    %v4017 = vunpack.c.l.b16 %v3354
    %v4018 = vunpack.c.h.b16 %v3354
    %v4019 = vunpack.c.l.b16 %v3355
    %v4020 = vunpack.c.h.b16 %v3355
    %v4021 = vunpack.c.l.b16 %v3356
    %v4022 = vunpack.c.h.b16 %v3356
    %v4023 = vunpack.c.l.b16 %v3357
    %v4024 = vunpack.c.h.b16 %v3357
    %v4025 = vunpack.c.l.b16 %v3358
    %v4026 = vunpack.c.h.b16 %v3358
    %v4027 = vunpack.c.l.b16 %v3359
    %v4028 = vunpack.c.h.b16 %v3359
    %v4029 = vunpack.c.l.b16 %v3360
    %v4030 = vunpack.c.h.b16 %v3360
    %v4031 = vunpack.c.l.b16 %v3361
    %v4032 = vunpack.c.h.b16 %v3361
    %v4033 = vunpack.c.l.b16 %v3362
    %v4034 = vunpack.c.h.b16 %v3362
    %v4035 = vunpack.c.l.b16 %v3363
    %v4036 = vunpack.c.h.b16 %v3363
    %v4037 = vunpack.c.l.b16 %v3364
    %v4038 = vunpack.c.h.b16 %v3364
    %v4039 = vunpack.c.l.b16 %v3365
    %v4040 = vunpack.c.h.b16 %v3365
    %v4041 = vunpack.c.l.b16 %v3366
    %v4042 = vunpack.c.h.b16 %v3366
    %v4043 = vunpack.c.l.b16 %v3367
    %v4044 = vunpack.c.h.b16 %v3367
    %v4045 = vunpack.c.l.b16 %v3368
    %v4046 = vunpack.c.h.b16 %v3368
    %v4047 = vunpack.c.l.b16 %v3369
    %v4048 = vunpack.c.h.b16 %v3369
    %v4049 = vunpack.c.l.b16 %v3370
    %v4050 = vunpack.c.h.b16 %v3370
    %v4051 = vunpack.c.l.b16 %v3371
    %v4052 = vunpack.c.h.b16 %v3371
    %v4053 = vunpack.c.l.b16 %v3372
    %v4054 = vunpack.c.h.b16 %v3372
    %v4055 = vunpack.c.l.b16 %v3373
    %v4056 = vunpack.c.h.b16 %v3373
    %v4057 = vunpack.c.l.b16 %v3374
    %v4058 = vunpack.c.h.b16 %v3374
    %v4059 = vunpack.c.l.b16 %v3375
    %v4060 = vunpack.c.h.b16 %v3375
    %v4061 = vunpack.c.l.b16 %v3376
    %v4062 = vunpack.c.h.b16 %v3376
    %v4063 = vunpack.c.l.b16 %v3377
    %v4064 = vunpack.c.h.b16 %v3377
    %v4065 = vunpack.c.l.b16 %v3378
    %v4066 = vunpack.c.h.b16 %v3378
    %v4067 = vunpack.c.l.b16 %v3379
    %v4068 = vunpack.c.h.b16 %v3379
    %v4069 = vunpack.c.l.b16 %v3380
    %v4070 = vunpack.c.h.b16 %v3380
    %v4071 = vunpack.c.l.b16 %v3381
    %v4072 = vunpack.c.h.b16 %v3381
    %v4073 = vunpack.c.l.b16 %v3382
    %v4074 = vunpack.c.h.b16 %v3382
    %v4075 = vunpack.c.l.b16 %v3383
    %v4076 = vunpack.c.h.b16 %v3383
    %v4077 = vunpack.c.l.b16 %v3384
    %v4078 = vunpack.c.h.b16 %v3384
    %v4079 = vunpack.c.l.b16 %v3385
    %v4080 = vunpack.c.h.b16 %v3385
    %v4081 = vunpack.c.l.b16 %v3386
    %v4082 = vunpack.c.h.b16 %v3386
    %v4083 = vunpack.c.l.b16 %v3387
    %v4084 = vunpack.c.h.b16 %v3387
    %v4085 = vunpack.c.l.b16 %v3388
    %v4086 = vunpack.c.h.b16 %v3388
    %v4087 = vunpack.c.l.b16 %v3389
    %v4088 = vunpack.c.h.b16 %v3389
    %v4089 = vunpack.c.l.b16 %v3390
    %v4090 = vunpack.c.h.b16 %v3390
    %v4091 = vunpack.c.l.b16 %v3391
    %v4092 = vunpack.c.h.b16 %v3391
    %v4093 = vunpack.c.l.b16 %v3392
    %v4094 = vunpack.c.h.b16 %v3392
    %v4095 = vunpack.c.l.b16 %v3393
    %v4096 = vunpack.c.h.b16 %v3393
    %v4097 = vunpack.c.l.b16 %v3394
    %v4098 = vunpack.c.h.b16 %v3394
    %v4099 = vunpack.c.l.b16 %v3395
    %v4100 = vunpack.c.h.b16 %v3395
    %v4101 = vunpack.c.l.b16 %v3396
    %v4102 = vunpack.c.h.b16 %v3396
    %v4103 = vunpack.c.l.b16 %v3397
    %v4104 = vunpack.c.h.b16 %v3397
    %v4105 = vunpack.c.l.b16 %v3398
    %v4106 = vunpack.c.h.b16 %v3398
    %v4107 = vunpack.c.l.b16 %v3399
    %v4108 = vunpack.c.h.b16 %v3399
    %v4109 = vunpack.c.l.b16 %v3400
    %v4110 = vunpack.c.h.b16 %v3400
    %v4111 = vunpack.c.l.b16 %v3401
    %v4112 = vunpack.c.h.b16 %v3401
    %v4113 = vunpack.c.l.b16 %v3402
    %v4114 = vunpack.c.h.b16 %v3402
    %v4115 = vunpack.c.l.b16 %v3403
    %v4116 = vunpack.c.h.b16 %v3403
    %v4117 = vunpack.c.l.b16 %v3404
    %v4118 = vunpack.c.h.b16 %v3404
    %v4119 = vunpack.c.l.b16 %v3405
    %v4120 = vunpack.c.h.b16 %v3405
    %v4121 = vunpack.c.l.b16 %v3406
    %v4122 = vunpack.c.h.b16 %v3406
    %v4123 = vunpack.c.l.b16 %v3407
    %v4124 = vunpack.c.h.b16 %v3407
    %v4125 = vunpack.c.l.b16 %v3408
    %v4126 = vunpack.c.h.b16 %v3408
    %v4127 = vunpack.c.l.b16 %v3409
    %v4128 = vunpack.c.h.b16 %v3409
    %v4129 = vunpack.c.l.b16 %v3410
    %v4130 = vunpack.c.h.b16 %v3410
    %v4131 = vunpack.c.l.b16 %v3411
    %v4132 = vunpack.c.h.b16 %v3411
    %v4133 = vunpack.c.l.b16 %v3412
    %v4134 = vunpack.c.h.b16 %v3412
    %v4135 = vunpack.c.l.b16 %v3413
    %v4136 = vunpack.c.h.b16 %v3413
    %v4137 = vunpack.c.l.b16 %v3414
    %v4138 = vunpack.c.h.b16 %v3414
    %v4139 = vunpack.c.l.b16 %v3415
    %v4140 = vunpack.c.h.b16 %v3415
    %v4141 = vunpack.c.l.b16 %v3416
    %v4142 = vunpack.c.h.b16 %v3416
    %v4143 = vunpack.c.l.b16 %v3417
    %v4144 = vunpack.c.h.b16 %v3417
    %v4145 = vunpack.c.l.b16 %v3418
    %v4146 = vunpack.c.h.b16 %v3418
    %v4147 = vunpack.c.l.b16 %v3419
    %v4148 = vunpack.c.h.b16 %v3419
    %v4149 = vunpack.c.l.b16 %v3420
    %v4150 = vunpack.c.h.b16 %v3420
    %v4151 = vunpack.c.l.b16 %v3421
    %v4152 = vunpack.c.h.b16 %v3421
    %v4153 = vunpack.c.l.b16 %v3422
    %v4154 = vunpack.c.h.b16 %v3422
    %v4155 = vunpack.c.l.b16 %v3423
    %v4156 = vunpack.c.h.b16 %v3423
    %v4157 = vunpack.c.l.b16 %v3424
    %v4158 = vunpack.c.h.b16 %v3424
    %v4159 = vunpack.c.l.b16 %v3425
    %v4160 = vunpack.c.h.b16 %v3425
    %v4161 = vunpack.c.l.b16 %v3426
    %v4162 = vunpack.c.h.b16 %v3426
    %v4163 = vunpack.c.l.b16 %v3427
    %v4164 = vunpack.c.h.b16 %v3427
    %v4165 = vunpack.c.l.b16 %v3428
    %v4166 = vunpack.c.h.b16 %v3428
    %v4167 = vunpack.c.l.b16 %v3429
    %v4168 = vunpack.c.h.b16 %v3429
    %v4169 = vunpack.c.l.b16 %v3430
    %v4170 = vunpack.c.h.b16 %v3430
    %v4171 = vunpack.c.l.b16 %v3431
    %v4172 = vunpack.c.h.b16 %v3431
    %v4173 = vunpack.c.l.b16 %v3432
    %v4174 = vunpack.c.h.b16 %v3432
    %v4175 = vunpack.c.l.b16 %v3433
    %v4176 = vunpack.c.h.b16 %v3433
    %v4177 = vunpack.c.l.b16 %v3434
    %v4178 = vunpack.c.h.b16 %v3434
    %v4179 = vunpack.c.l.b16 %v3435
    %v4180 = vunpack.c.h.b16 %v3435
    %v4181 = vunpack.c.l.b16 %v3436
    %v4182 = vunpack.c.h.b16 %v3436
    %v4183 = vunpack.c.l.b16 %v3437
    %v4184 = vunpack.c.h.b16 %v3437
    %v4185 = vunpack.c.l.b16 %v3438
    %v4186 = vunpack.c.h.b16 %v3438
    %v4187 = vunpack.c.l.b16 %v3439
    %v4188 = vunpack.c.h.b16 %v3439
    %v4189 = vunpack.c.l.b16 %v3440
    %v4190 = vunpack.c.h.b16 %v3440
    %v4191 = vunpack.c.l.b16 %v3441
    %v4192 = vunpack.c.h.b16 %v3441
    %v4193 = vunpack.c.l.b16 %v3442
    %v4194 = vunpack.c.h.b16 %v3442
    %v4195 = vunpack.c.l.b16 %v3443
    %v4196 = vunpack.c.h.b16 %v3443
    %v4197 = vunpack.c.l.b16 %v3444
    %v4198 = vunpack.c.h.b16 %v3444
    %v4199 = vunpack.c.l.b16 %v3445
    %v4200 = vunpack.c.h.b16 %v3445
    %v4201 = vunpack.c.l.b16 %v3446
    %v4202 = vunpack.c.h.b16 %v3446
    %v4203 = vunpack.c.l.b16 %v3447
    %v4204 = vunpack.c.h.b16 %v3447
    %v4205 = vunpack.c.l.b16 %v3448
    %v4206 = vunpack.c.h.b16 %v3448
    %v4207 = vunpack.c.l.b16 %v3449
    %v4208 = vunpack.c.h.b16 %v3449
    %v4209 = vunpack.c.l.b16 %v3450
    %v4210 = vunpack.c.h.b16 %v3450
    %v4211 = vunpack.c.l.b16 %v3451
    %v4212 = vunpack.c.h.b16 %v3451
    %v4213 = vunpack.c.l.b16 %v3452
    %v4214 = vunpack.c.h.b16 %v3452
    %v4215 = vunpack.c.l.b16 %v3453
    %v4216 = vunpack.c.h.b16 %v3453
    %v4217 = vunpack.c.l.b16 %v3454
    %v4218 = vunpack.c.h.b16 %v3454
    %v4219 = vunpack.c.l.b16 %v3455
    %v4220 = vunpack.c.h.b16 %v3455
    %v4221 = vunpack.c.l.b16 %v3456
    %v4222 = vunpack.c.h.b16 %v3456
    %v4223 = vunpack.c.l.b16 %v3457
    %v4224 = vunpack.c.h.b16 %v3457
    %v4225 = vunpack.c.l.b16 %v3458
    %v4226 = vunpack.c.h.b16 %v3458
    %v4227 = vunpack.c.l.b16 %v3459
    %v4228 = vunpack.c.h.b16 %v3459
    %v4229 = vunpack.c.l.b16 %v3460
    %v4230 = vunpack.c.h.b16 %v3460
    %v4231 = vunpack.c.l.b16 %v3461
    %v4232 = vunpack.c.h.b16 %v3461
    %v4233 = vunpack.c.l.b16 %v3462
    %v4234 = vunpack.c.h.b16 %v3462
    %v4235 = vunpack.c.l.b16 %v3463
    %v4236 = vunpack.c.h.b16 %v3463
    %v4237 = vunpack.c.l.b16 %v3464
    %v4238 = vunpack.c.h.b16 %v3464
    %v4239 = vunpack.c.l.b16 %v3465
    %v4240 = vunpack.c.h.b16 %v3465
    %v4241 = vunpack.c.l.b16 %v3466
    %v4242 = vunpack.c.h.b16 %v3466
    %v4243 = vunpack.c.l.b16 %v3467
    %v4244 = vunpack.c.h.b16 %v3467
    %v4245 = vunpack.c.l.b16 %v3468
    %v4246 = vunpack.c.h.b16 %v3468
    %v4247 = vunpack.c.l.b16 %v3469
    %v4248 = vunpack.c.h.b16 %v3469
    %v4249 = vunpack.c.l.b16 %v3470
    %v4250 = vunpack.c.h.b16 %v3470
    %v4251 = vunpack.c.l.b16 %v3471
    %v4252 = vunpack.c.h.b16 %v3471
    %v4253 = vunpack.c.l.b16 %v3472
    %v4254 = vunpack.c.h.b16 %v3472
    %v4255 = vunpack.c.l.b16 %v3473
    %v4256 = vunpack.c.h.b16 %v3473
    %v4257 = vunpack.c.l.b16 %v3474
    %v4258 = vunpack.c.h.b16 %v3474
    %v4259 = vunpack.c.l.b16 %v3475
    %v4260 = vunpack.c.h.b16 %v3475
    %v4261 = vunpack.c.l.b16 %v3476
    %v4262 = vunpack.c.h.b16 %v3476
    %v4263 = vunpack.c.l.b16 %v3477
    %v4264 = vunpack.c.h.b16 %v3477
    %v4265 = vunpack.c.l.b16 %v3478
    %v4266 = vunpack.c.h.b16 %v3478
    %v4267 = vunpack.c.l.b16 %v3479
    %v4268 = vunpack.c.h.b16 %v3479
    %v4269 = vunpack.c.l.b16 %v3480
    %v4270 = vunpack.c.h.b16 %v3480
    %v4271 = vpack.c.b16 %v3763, %v3759
    %v4272 = vpack.c.b16 %v3764, %v3760
    %v4273 = vpack.c.b16 %v3765, %v3761
    %v4274 = vpack.c.b16 %v3766, %v3762
    %v4275 = vpack.c.b16 %v3771, %v3767
    %v4276 = vpack.c.b16 %v3772, %v3768
    %v4277 = vpack.c.b16 %v3773, %v3769
    %v4278 = vpack.c.b16 %v3774, %v3770
    %v4279 = vpack.c.b16 %v3779, %v3775
    %v4280 = vpack.c.b16 %v3780, %v3776
    %v4281 = vpack.c.b16 %v3781, %v3777
    %v4282 = vpack.c.b16 %v3782, %v3778
    %v4283 = vpack.c.b16 %v3787, %v3783
    %v4284 = vpack.c.b16 %v3788, %v3784
    %v4285 = vpack.c.b16 %v3789, %v3785
    %v4286 = vpack.c.b16 %v3790, %v3786
    %v4287 = vpack.c.b16 %v3795, %v3791
    %v4288 = vpack.c.b16 %v3796, %v3792
    %v4289 = vpack.c.b16 %v3797, %v3793
    %v4290 = vpack.c.b16 %v3798, %v3794
    %v4291 = vpack.c.b16 %v3803, %v3799
    %v4292 = vpack.c.b16 %v3804, %v3800
    %v4293 = vpack.c.b16 %v3805, %v3801
    %v4294 = vpack.c.b16 %v3806, %v3802
    %v4295 = vpack.c.b16 %v3811, %v3807
    %v4296 = vpack.c.b16 %v3812, %v3808
    %v4297 = vpack.c.b16 %v3813, %v3809
    %v4298 = vpack.c.b16 %v3814, %v3810
    %v4299 = vpack.c.b16 %v3819, %v3815
    %v4300 = vpack.c.b16 %v3820, %v3816
    %v4301 = vpack.c.b16 %v3821, %v3817
    %v4302 = vpack.c.b16 %v3822, %v3818
    %v4303 = vpack.c.b16 %v3827, %v3823
    %v4304 = vpack.c.b16 %v3828, %v3824
    %v4305 = vpack.c.b16 %v3829, %v3825
    %v4306 = vpack.c.b16 %v3830, %v3826
    %v4307 = vpack.c.b16 %v3835, %v3831
    %v4308 = vpack.c.b16 %v3836, %v3832
    %v4309 = vpack.c.b16 %v3837, %v3833
    %v4310 = vpack.c.b16 %v3838, %v3834
    %v4311 = vpack.c.b16 %v3843, %v3839
    %v4312 = vpack.c.b16 %v3844, %v3840
    %v4313 = vpack.c.b16 %v3845, %v3841
    %v4314 = vpack.c.b16 %v3846, %v3842
    %v4315 = vpack.c.b16 %v3851, %v3847
    %v4316 = vpack.c.b16 %v3852, %v3848
    %v4317 = vpack.c.b16 %v3853, %v3849
    %v4318 = vpack.c.b16 %v3854, %v3850
    %v4319 = vpack.c.b16 %v3859, %v3855
    %v4320 = vpack.c.b16 %v3860, %v3856
    %v4321 = vpack.c.b16 %v3861, %v3857
    %v4322 = vpack.c.b16 %v3862, %v3858
    %v4323 = vpack.c.b16 %v3867, %v3863
    %v4324 = vpack.c.b16 %v3868, %v3864
    %v4325 = vpack.c.b16 %v3869, %v3865
    %v4326 = vpack.c.b16 %v3870, %v3866
    %v4327 = vpack.c.b16 %v3875, %v3871
    %v4328 = vpack.c.b16 %v3876, %v3872
    %v4329 = vpack.c.b16 %v3877, %v3873
    %v4330 = vpack.c.b16 %v3878, %v3874
    %v4331 = vpack.c.b16 %v3883, %v3879
    %v4332 = vpack.c.b16 %v3884, %v3880
    %v4333 = vpack.c.b16 %v3885, %v3881
    %v4334 = vpack.c.b16 %v3886, %v3882
    %v4335 = vpack.c.b16 %v3891, %v3887
    %v4336 = vpack.c.b16 %v3892, %v3888
    %v4337 = vpack.c.b16 %v3893, %v3889
    %v4338 = vpack.c.b16 %v3894, %v3890
    %v4339 = vpack.c.b16 %v3899, %v3895
    %v4340 = vpack.c.b16 %v3900, %v3896
    %v4341 = vpack.c.b16 %v3901, %v3897
    %v4342 = vpack.c.b16 %v3902, %v3898
    %v4343 = vpack.c.b16 %v3907, %v3903
    %v4344 = vpack.c.b16 %v3908, %v3904
    %v4345 = vpack.c.b16 %v3909, %v3905
    %v4346 = vpack.c.b16 %v3910, %v3906
    %v4347 = vpack.c.b16 %v3915, %v3911
    %v4348 = vpack.c.b16 %v3916, %v3912
    %v4349 = vpack.c.b16 %v3917, %v3913
    %v4350 = vpack.c.b16 %v3918, %v3914
    %v4351 = vpack.c.b16 %v3923, %v3919
    %v4352 = vpack.c.b16 %v3924, %v3920
    %v4353 = vpack.c.b16 %v3925, %v3921
    %v4354 = vpack.c.b16 %v3926, %v3922
    %v4355 = vpack.c.b16 %v3931, %v3927
    %v4356 = vpack.c.b16 %v3932, %v3928
    %v4357 = vpack.c.b16 %v3933, %v3929
    %v4358 = vpack.c.b16 %v3934, %v3930
    %v4359 = vpack.c.b16 %v3939, %v3935
    %v4360 = vpack.c.b16 %v3940, %v3936
    %v4361 = vpack.c.b16 %v3941, %v3937
    %v4362 = vpack.c.b16 %v3942, %v3938
    %v4363 = vpack.c.b16 %v3947, %v3943
    %v4364 = vpack.c.b16 %v3948, %v3944
    %v4365 = vpack.c.b16 %v3949, %v3945
    %v4366 = vpack.c.b16 %v3950, %v3946
    %v4367 = vpack.c.b16 %v3955, %v3951
    %v4368 = vpack.c.b16 %v3956, %v3952
    %v4369 = vpack.c.b16 %v3957, %v3953
    %v4370 = vpack.c.b16 %v3958, %v3954
    %v4371 = vpack.c.b16 %v3963, %v3959
    %v4372 = vpack.c.b16 %v3964, %v3960
    %v4373 = vpack.c.b16 %v3965, %v3961
    %v4374 = vpack.c.b16 %v3966, %v3962
    %v4375 = vpack.c.b16 %v3971, %v3967
    %v4376 = vpack.c.b16 %v3972, %v3968
    %v4377 = vpack.c.b16 %v3973, %v3969
    %v4378 = vpack.c.b16 %v3974, %v3970
    %v4379 = vpack.c.b16 %v3979, %v3975
    %v4380 = vpack.c.b16 %v3980, %v3976
    %v4381 = vpack.c.b16 %v3981, %v3977
    %v4382 = vpack.c.b16 %v3982, %v3978
    %v4383 = vpack.c.b16 %v3987, %v3983
    %v4384 = vpack.c.b16 %v3988, %v3984
    %v4385 = vpack.c.b16 %v3989, %v3985
    %v4386 = vpack.c.b16 %v3990, %v3986
    %v4387 = vpack.c.b16 %v3995, %v3991
    %v4388 = vpack.c.b16 %v3996, %v3992
    %v4389 = vpack.c.b16 %v3997, %v3993
    %v4390 = vpack.c.b16 %v3998, %v3994
    %v4391 = vpack.c.b16 %v4003, %v3999
    %v4392 = vpack.c.b16 %v4004, %v4000
    %v4393 = vpack.c.b16 %v4005, %v4001
    %v4394 = vpack.c.b16 %v4006, %v4002
    %v4395 = vpack.c.b16 %v4011, %v4007
    %v4396 = vpack.c.b16 %v4012, %v4008
    %v4397 = vpack.c.b16 %v4013, %v4009
    %v4398 = vpack.c.b16 %v4014, %v4010
    %v4399 = vpack.c.b16 %v4019, %v4015
    %v4400 = vpack.c.b16 %v4020, %v4016
    %v4401 = vpack.c.b16 %v4021, %v4017
    %v4402 = vpack.c.b16 %v4022, %v4018
    %v4403 = vpack.c.b16 %v4027, %v4023
    %v4404 = vpack.c.b16 %v4028, %v4024
    %v4405 = vpack.c.b16 %v4029, %v4025
    %v4406 = vpack.c.b16 %v4030, %v4026
    %v4407 = vpack.c.b16 %v4035, %v4031
    %v4408 = vpack.c.b16 %v4036, %v4032
    %v4409 = vpack.c.b16 %v4037, %v4033
    %v4410 = vpack.c.b16 %v4038, %v4034
    %v4411 = vpack.c.b16 %v4043, %v4039
    %v4412 = vpack.c.b16 %v4044, %v4040
    %v4413 = vpack.c.b16 %v4045, %v4041
    %v4414 = vpack.c.b16 %v4046, %v4042
    %v4415 = vpack.c.b16 %v4051, %v4047
    %v4416 = vpack.c.b16 %v4052, %v4048
    %v4417 = vpack.c.b16 %v4053, %v4049
    %v4418 = vpack.c.b16 %v4054, %v4050
    %v4419 = vpack.c.b16 %v4059, %v4055
    %v4420 = vpack.c.b16 %v4060, %v4056
    %v4421 = vpack.c.b16 %v4061, %v4057
    %v4422 = vpack.c.b16 %v4062, %v4058
    %v4423 = vpack.c.b16 %v4067, %v4063
    %v4424 = vpack.c.b16 %v4068, %v4064
    %v4425 = vpack.c.b16 %v4069, %v4065
    %v4426 = vpack.c.b16 %v4070, %v4066
    %v4427 = vpack.c.b16 %v4075, %v4071
    %v4428 = vpack.c.b16 %v4076, %v4072
    %v4429 = vpack.c.b16 %v4077, %v4073
    %v4430 = vpack.c.b16 %v4078, %v4074
    %v4431 = vpack.c.b16 %v4083, %v4079
    %v4432 = vpack.c.b16 %v4084, %v4080
    %v4433 = vpack.c.b16 %v4085, %v4081
    %v4434 = vpack.c.b16 %v4086, %v4082
    %v4435 = vpack.c.b16 %v4091, %v4087
    %v4436 = vpack.c.b16 %v4092, %v4088
    %v4437 = vpack.c.b16 %v4093, %v4089
    %v4438 = vpack.c.b16 %v4094, %v4090
    %v4439 = vpack.c.b16 %v4099, %v4095
    %v4440 = vpack.c.b16 %v4100, %v4096
    %v4441 = vpack.c.b16 %v4101, %v4097
    %v4442 = vpack.c.b16 %v4102, %v4098
    %v4443 = vpack.c.b16 %v4107, %v4103
    %v4444 = vpack.c.b16 %v4108, %v4104
    %v4445 = vpack.c.b16 %v4109, %v4105
    %v4446 = vpack.c.b16 %v4110, %v4106
    %v4447 = vpack.c.b16 %v4115, %v4111
    %v4448 = vpack.c.b16 %v4116, %v4112
    %v4449 = vpack.c.b16 %v4117, %v4113
    %v4450 = vpack.c.b16 %v4118, %v4114
    %v4451 = vpack.c.b16 %v4123, %v4119
    %v4452 = vpack.c.b16 %v4124, %v4120
    %v4453 = vpack.c.b16 %v4125, %v4121
    %v4454 = vpack.c.b16 %v4126, %v4122
    %v4455 = vpack.c.b16 %v4131, %v4127
    %v4456 = vpack.c.b16 %v4132, %v4128
    %v4457 = vpack.c.b16 %v4133, %v4129
    %v4458 = vpack.c.b16 %v4134, %v4130
    %v4459 = vpack.c.b16 %v4139, %v4135
    %v4460 = vpack.c.b16 %v4140, %v4136
    %v4461 = vpack.c.b16 %v4141, %v4137
    %v4462 = vpack.c.b16 %v4142, %v4138
    %v4463 = vpack.c.b16 %v4147, %v4143
    %v4464 = vpack.c.b16 %v4148, %v4144
    %v4465 = vpack.c.b16 %v4149, %v4145
    %v4466 = vpack.c.b16 %v4150, %v4146
    %v4467 = vpack.c.b16 %v4155, %v4151
    %v4468 = vpack.c.b16 %v4156, %v4152
    %v4469 = vpack.c.b16 %v4157, %v4153
    %v4470 = vpack.c.b16 %v4158, %v4154
    %v4471 = vpack.c.b16 %v4163, %v4159
    %v4472 = vpack.c.b16 %v4164, %v4160
    %v4473 = vpack.c.b16 %v4165, %v4161
    %v4474 = vpack.c.b16 %v4166, %v4162
    %v4475 = vpack.c.b16 %v4171, %v4167
    %v4476 = vpack.c.b16 %v4172, %v4168
    %v4477 = vpack.c.b16 %v4173, %v4169
    %v4478 = vpack.c.b16 %v4174, %v4170
    %v4479 = vpack.c.b16 %v4179, %v4175
    %v4480 = vpack.c.b16 %v4180, %v4176
    %v4481 = vpack.c.b16 %v4181, %v4177
    %v4482 = vpack.c.b16 %v4182, %v4178
    %v4483 = vpack.c.b16 %v4187, %v4183
    %v4484 = vpack.c.b16 %v4188, %v4184
    %v4485 = vpack.c.b16 %v4189, %v4185
    %v4486 = vpack.c.b16 %v4190, %v4186
    %v4487 = vpack.c.b16 %v4195, %v4191
    %v4488 = vpack.c.b16 %v4196, %v4192
    %v4489 = vpack.c.b16 %v4197, %v4193
    %v4490 = vpack.c.b16 %v4198, %v4194
    %v4491 = vpack.c.b16 %v4203, %v4199
    %v4492 = vpack.c.b16 %v4204, %v4200
    %v4493 = vpack.c.b16 %v4205, %v4201
    %v4494 = vpack.c.b16 %v4206, %v4202
    %v4495 = vpack.c.b16 %v4211, %v4207
    %v4496 = vpack.c.b16 %v4212, %v4208
    %v4497 = vpack.c.b16 %v4213, %v4209
    %v4498 = vpack.c.b16 %v4214, %v4210
    %v4499 = vpack.c.b16 %v4219, %v4215
    %v4500 = vpack.c.b16 %v4220, %v4216
    %v4501 = vpack.c.b16 %v4221, %v4217
    %v4502 = vpack.c.b16 %v4222, %v4218
    %v4503 = vpack.c.b16 %v4227, %v4223
    %v4504 = vpack.c.b16 %v4228, %v4224
    %v4505 = vpack.c.b16 %v4229, %v4225
    %v4506 = vpack.c.b16 %v4230, %v4226
    %v4507 = vpack.c.b16 %v4235, %v4231
    %v4508 = vpack.c.b16 %v4236, %v4232
    %v4509 = vpack.c.b16 %v4237, %v4233
    %v4510 = vpack.c.b16 %v4238, %v4234
    %v4511 = vpack.c.b16 %v4243, %v4239
    %v4512 = vpack.c.b16 %v4244, %v4240
    %v4513 = vpack.c.b16 %v4245, %v4241
    %v4514 = vpack.c.b16 %v4246, %v4242
    %v4515 = vpack.c.b16 %v4251, %v4247
    %v4516 = vpack.c.b16 %v4252, %v4248
    %v4517 = vpack.c.b16 %v4253, %v4249
    %v4518 = vpack.c.b16 %v4254, %v4250
    %v4519 = vpack.c.b16 %v4259, %v4255
    %v4520 = vpack.c.b16 %v4260, %v4256
    %v4521 = vpack.c.b16 %v4261, %v4257
    %v4522 = vpack.c.b16 %v4262, %v4258
    %v4523 = vpack.c.b16 %v4267, %v4263
    %v4524 = vpack.c.b16 %v4268, %v4264
    %v4525 = vpack.c.b16 %v4269, %v4265
    %v4526 = vpack.c.b16 %v4270, %v4266
    %4783 = vmatprep.subr.bf16.mxu0 %v4272
    %4784 = vmatpush1.bf16.msra.mxu0 %v4271
    %4785 = vmatprep.subr.bf16.mxu0 %v4276
    %4786 = vmatpush1.bf16.msra.mxu0 %v4275
    %4787 = vmatprep.subr.bf16.mxu0 %v4280
    %4788 = vmatpush1.bf16.msra.mxu0 %v4279
    %4789 = vmatprep.subr.bf16.mxu0 %v4284
    %4790 = vmatpush1.bf16.msra.mxu0 %v4283
    %4791 = vmatprep.subr.bf16.mxu0 %v4288
    %4792 = vmatpush1.bf16.msra.mxu0 %v4287
    %4793 = vmatprep.subr.bf16.mxu0 %v4292
    %4794 = vmatpush1.bf16.msra.mxu0 %v4291
    %4795 = vmatprep.subr.bf16.mxu0 %v4296
    %4796 = vmatpush1.bf16.msra.mxu0 %v4295
    %4797 = vmatprep.subr.bf16.mxu0 %v4300
    %4798 = vmatpush1.bf16.msra.mxu0 %v4299
    %4799 = vmatprep.subr.bf16.mxu0 %v4304
    %4800 = vmatpush1.bf16.msra.mxu0 %v4303
    %4801 = vmatprep.subr.bf16.mxu0 %v4308
    %4802 = vmatpush1.bf16.msra.mxu0 %v4307
    %4803 = vmatprep.subr.bf16.mxu0 %v4312
    %4804 = vmatpush1.bf16.msra.mxu0 %v4311
    %4805 = vmatprep.subr.bf16.mxu0 %v4316
    %4806 = vmatpush1.bf16.msra.mxu0 %v4315
    %4807 = vmatprep.subr.bf16.mxu0 %v4320
    %4808 = vmatpush1.bf16.msra.mxu0 %v4319
    %4809 = vmatprep.subr.bf16.mxu0 %v4324
    %4810 = vmatpush1.bf16.msra.mxu0 %v4323
    %4811 = vmatprep.subr.bf16.mxu0 %v4328
    %4812 = vmatpush1.bf16.msra.mxu0 %v4327
    %4813 = vmatprep.subr.bf16.mxu0 %v4332
    %4814 = vmatpush1.bf16.msra.mxu0 %v4331
    %4815 = vmatprep.mubr.bf16.mxu0 %v3218
    %4816 = vmatmul.mubr.bf16.gmra.mrb[0].mxu0 %v3217
    %v4817 = vpop.f32.mrb[0].mxu0
    %v4818 = vadd.f32 %v3486, %v4817
    %v4819 = vpop.f32.mrb[0].mxu0
    %v4820 = vadd.f32 %v3490, %v4819
    %v4821 = vpop.f32.mrb[0].mxu0
    %v4822 = vpop.f32.mrb[0].mxu0
    %4823 = vdwg.mxu0
    %4824 = vmatprep.subr.bf16.mxu0 %v4336
    %4825 = vmatpush1.bf16.msra.mxu0 %v4335
    %4826 = vmatprep.subr.bf16.mxu0 %v4340
    %4827 = vmatpush1.bf16.msra.mxu0 %v4339
    %4828 = vmatprep.subr.bf16.mxu0 %v4344
    %4829 = vmatpush1.bf16.msra.mxu0 %v4343
    %4830 = vmatprep.subr.bf16.mxu0 %v4348
    %4831 = vmatpush1.bf16.msra.mxu0 %v4347
    %4832 = vmatprep.subr.bf16.mxu0 %v4352
    %4833 = vmatpush1.bf16.msra.mxu0 %v4351
    %4834 = vmatprep.subr.bf16.mxu0 %v4356
    %4835 = vmatpush1.bf16.msra.mxu0 %v4355
    %4836 = vmatprep.subr.bf16.mxu0 %v4360
    %4837 = vmatpush1.bf16.msra.mxu0 %v4359
    %4838 = vmatprep.subr.bf16.mxu0 %v4364
    %4839 = vmatpush1.bf16.msra.mxu0 %v4363
    %4840 = vmatprep.subr.bf16.mxu0 %v4368
    %4841 = vmatpush1.bf16.msra.mxu0 %v4367
    %4842 = vmatprep.subr.bf16.mxu0 %v4372
    %4843 = vmatpush1.bf16.msra.mxu0 %v4371
    %4844 = vmatprep.subr.bf16.mxu0 %v4376
    %4845 = vmatpush1.bf16.msra.mxu0 %v4375
    %4846 = vmatprep.subr.bf16.mxu0 %v4380
    %4847 = vmatpush1.bf16.msra.mxu0 %v4379
    %4848 = vmatprep.subr.bf16.mxu0 %v4384
    %4849 = vmatpush1.bf16.msra.mxu0 %v4383
    %4850 = vmatprep.subr.bf16.mxu0 %v4388
    %4851 = vmatpush1.bf16.msra.mxu0 %v4387
    %4852 = vmatprep.subr.bf16.mxu0 %v4392
    %4853 = vmatpush1.bf16.msra.mxu0 %v4391
    %4854 = vmatprep.subr.bf16.mxu0 %v4396
    %4855 = vmatpush1.bf16.msra.mxu0 %v4395
    %4856 = vmatprep.mubr.bf16.mxu0 %v3220
    %4857 = vmatmul.mubr.bf16.gmra.mrb[0].mxu0 %v3219
    %v4858 = vpop.f32.mrb[0].mxu0
    %v4859 = vadd.f32 %v4818, %v4858
    %v4860 = vpop.f32.mrb[0].mxu0
    %v4861 = vadd.f32 %v4820, %v4860
    %v4862 = vpop.f32.mrb[0].mxu0
    %v4863 = vpop.f32.mrb[0].mxu0
    %4864 = vdwg.mxu0
    %4865 = vmatprep.subr.bf16.mxu0 %v4400
    %4866 = vmatpush1.bf16.msra.mxu0 %v4399
    %4867 = vmatprep.subr.bf16.mxu0 %v4404
    %4868 = vmatpush1.bf16.msra.mxu0 %v4403
    %4869 = vmatprep.subr.bf16.mxu0 %v4408
    %4870 = vmatpush1.bf16.msra.mxu0 %v4407
    %4871 = vmatprep.subr.bf16.mxu0 %v4412
    %4872 = vmatpush1.bf16.msra.mxu0 %v4411
    %4873 = vmatprep.subr.bf16.mxu0 %v4416
    %4874 = vmatpush1.bf16.msra.mxu0 %v4415
    %4875 = vmatprep.subr.bf16.mxu0 %v4420
    %4876 = vmatpush1.bf16.msra.mxu0 %v4419
    %4877 = vmatprep.subr.bf16.mxu0 %v4424
    %4878 = vmatpush1.bf16.msra.mxu0 %v4423
    %4879 = vmatprep.subr.bf16.mxu0 %v4428
    %4880 = vmatpush1.bf16.msra.mxu0 %v4427
    %4881 = vmatprep.subr.bf16.mxu0 %v4432
    %4882 = vmatpush1.bf16.msra.mxu0 %v4431
    %4883 = vmatprep.subr.bf16.mxu0 %v4436
    %4884 = vmatpush1.bf16.msra.mxu0 %v4435
    %4885 = vmatprep.subr.bf16.mxu0 %v4440
    %4886 = vmatpush1.bf16.msra.mxu0 %v4439
    %4887 = vmatprep.subr.bf16.mxu0 %v4444
    %4888 = vmatpush1.bf16.msra.mxu0 %v4443
    %4889 = vmatprep.subr.bf16.mxu0 %v4448
    %4890 = vmatpush1.bf16.msra.mxu0 %v4447
    %4891 = vmatprep.subr.bf16.mxu0 %v4452
    %4892 = vmatpush1.bf16.msra.mxu0 %v4451
    %4893 = vmatprep.subr.bf16.mxu0 %v4456
    %4894 = vmatpush1.bf16.msra.mxu0 %v4455
    %4895 = vmatprep.subr.bf16.mxu0 %v4460
    %4896 = vmatpush1.bf16.msra.mxu0 %v4459
    %4897 = vmatprep.mubr.bf16.mxu0 %v3222
    %4898 = vmatmul.mubr.bf16.gmra.mrb[0].mxu0 %v3221
    %v4899 = vpop.f32.mrb[0].mxu0
    %v4900 = vadd.f32 %v4859, %v4899
    %v4901 = vpop.f32.mrb[0].mxu0
    %v4902 = vadd.f32 %v4861, %v4901
    %v4903 = vpop.f32.mrb[0].mxu0
    %v4904 = vpop.f32.mrb[0].mxu0
    %4905 = vdwg.mxu0
    %4906 = vmatprep.subr.bf16.mxu0 %v4464
    %4907 = vmatpush1.bf16.msra.mxu0 %v4463
    %4908 = vmatprep.subr.bf16.mxu0 %v4468
    %4909 = vmatpush1.bf16.msra.mxu0 %v4467
    %4910 = vmatprep.subr.bf16.mxu0 %v4472
    %4911 = vmatpush1.bf16.msra.mxu0 %v4471
    %4912 = vmatprep.subr.bf16.mxu0 %v4476
    %4913 = vmatpush1.bf16.msra.mxu0 %v4475
    %4914 = vmatprep.subr.bf16.mxu0 %v4480
    %4915 = vmatpush1.bf16.msra.mxu0 %v4479
    %4916 = vmatprep.subr.bf16.mxu0 %v4484
    %4917 = vmatpush1.bf16.msra.mxu0 %v4483
    %4918 = vmatprep.subr.bf16.mxu0 %v4488
    %4919 = vmatpush1.bf16.msra.mxu0 %v4487
    %4920 = vmatprep.subr.bf16.mxu0 %v4492
    %4921 = vmatpush1.bf16.msra.mxu0 %v4491
    %4922 = vmatprep.subr.bf16.mxu0 %v4496
    %4923 = vmatpush1.bf16.msra.mxu0 %v4495
    %4924 = vmatprep.subr.bf16.mxu0 %v4500
    %4925 = vmatpush1.bf16.msra.mxu0 %v4499
    %4926 = vmatprep.subr.bf16.mxu0 %v4504
    %4927 = vmatpush1.bf16.msra.mxu0 %v4503
    %4928 = vmatprep.subr.bf16.mxu0 %v4508
    %4929 = vmatpush1.bf16.msra.mxu0 %v4507
    %4930 = vmatprep.subr.bf16.mxu0 %v4512
    %4931 = vmatpush1.bf16.msra.mxu0 %v4511
    %4932 = vmatprep.subr.bf16.mxu0 %v4516
    %4933 = vmatpush1.bf16.msra.mxu0 %v4515
    %4934 = vmatprep.subr.bf16.mxu0 %v4520
    %4935 = vmatpush1.bf16.msra.mxu0 %v4519
    %4936 = vmatprep.subr.bf16.mxu0 %v4524
    %4937 = vmatpush1.bf16.msra.mxu0 %v4523
    %4938 = vmatprep.mubr.bf16.mxu0 %v3224
    %4939 = vmatmul.mubr.bf16.gmra.mrb[0].mxu0 %v3223
    %v4940 = vpop.f32.mrb[0].mxu0
    %v4941 = vadd.f32 %v4900, %v4940
    %v4942 = vpop.f32.mrb[0].mxu0
    %v4943 = vadd.f32 %v4902, %v4942
    %v4944 = vpop.f32.mrb[0].mxu0
    %v4945 = vpop.f32.mrb[0].mxu0
    %4946 = vdwg.mxu0
    %4947 = vmatprep.subr.bf16.mxu0 %v4274
    %4948 = vmatpush1.bf16.msra.mxu0 %v4273
    %4949 = vmatprep.subr.bf16.mxu0 %v4278
    %4950 = vmatpush1.bf16.msra.mxu0 %v4277
    %4951 = vmatprep.subr.bf16.mxu0 %v4282
    %4952 = vmatpush1.bf16.msra.mxu0 %v4281
    %4953 = vmatprep.subr.bf16.mxu0 %v4286
    %4954 = vmatpush1.bf16.msra.mxu0 %v4285
    %4955 = vmatprep.subr.bf16.mxu0 %v4290
    %4956 = vmatpush1.bf16.msra.mxu0 %v4289
    %4957 = vmatprep.subr.bf16.mxu0 %v4294
    %4958 = vmatpush1.bf16.msra.mxu0 %v4293
    %4959 = vmatprep.subr.bf16.mxu0 %v4298
    %4960 = vmatpush1.bf16.msra.mxu0 %v4297
    %4961 = vmatprep.subr.bf16.mxu0 %v4302
    %4962 = vmatpush1.bf16.msra.mxu0 %v4301
    %4963 = vmatprep.subr.bf16.mxu0 %v4306
    %4964 = vmatpush1.bf16.msra.mxu0 %v4305
    %4965 = vmatprep.subr.bf16.mxu0 %v4310
    %4966 = vmatpush1.bf16.msra.mxu0 %v4309
    %4967 = vmatprep.subr.bf16.mxu0 %v4314
    %4968 = vmatpush1.bf16.msra.mxu0 %v4313
    %4969 = vmatprep.subr.bf16.mxu0 %v4318
    %4970 = vmatpush1.bf16.msra.mxu0 %v4317
    %4971 = vmatprep.subr.bf16.mxu0 %v4322
    %4972 = vmatpush1.bf16.msra.mxu0 %v4321
    %4973 = vmatprep.subr.bf16.mxu0 %v4326
    %4974 = vmatpush1.bf16.msra.mxu0 %v4325
    %4975 = vmatprep.subr.bf16.mxu0 %v4330
    %4976 = vmatpush1.bf16.msra.mxu0 %v4329
    %4977 = vmatprep.subr.bf16.mxu0 %v4334
    %4978 = vmatpush1.bf16.msra.mxu0 %v4333
    %4979 = vmatprep.mubr.bf16.mxu0 %v3218
    %4980 = vmatmul.mubr.bf16.gmra.mrb[0].mxu0 %v3217
    %v4981 = vpop.f32.mrb[0].mxu0
    %v4982 = vadd.f32 %v3494, %v4981
    %v4983 = vpop.f32.mrb[0].mxu0
    %v4984 = vadd.f32 %v3498, %v4983
    %v4985 = vpop.f32.mrb[0].mxu0
    %v4986 = vpop.f32.mrb[0].mxu0
    %4987 = vdwg.mxu0
    %4988 = vmatprep.subr.bf16.mxu0 %v4338
    %4989 = vmatpush1.bf16.msra.mxu0 %v4337
    %4990 = vmatprep.subr.bf16.mxu0 %v4342
    %4991 = vmatpush1.bf16.msra.mxu0 %v4341
    %4992 = vmatprep.subr.bf16.mxu0 %v4346
    %4993 = vmatpush1.bf16.msra.mxu0 %v4345
    %4994 = vmatprep.subr.bf16.mxu0 %v4350
    %4995 = vmatpush1.bf16.msra.mxu0 %v4349
    %4996 = vmatprep.subr.bf16.mxu0 %v4354
    %4997 = vmatpush1.bf16.msra.mxu0 %v4353
    %4998 = vmatprep.subr.bf16.mxu0 %v4358
    %4999 = vmatpush1.bf16.msra.mxu0 %v4357
    %5000 = vmatprep.subr.bf16.mxu0 %v4362
    %5001 = vmatpush1.bf16.msra.mxu0 %v4361
    %5002 = vmatprep.subr.bf16.mxu0 %v4366
    %5003 = vmatpush1.bf16.msra.mxu0 %v4365
    %5004 = vmatprep.subr.bf16.mxu0 %v4370
    %5005 = vmatpush1.bf16.msra.mxu0 %v4369
    %5006 = vmatprep.subr.bf16.mxu0 %v4374
    %5007 = vmatpush1.bf16.msra.mxu0 %v4373
    %5008 = vmatprep.subr.bf16.mxu0 %v4378
    %5009 = vmatpush1.bf16.msra.mxu0 %v4377
    %5010 = vmatprep.subr.bf16.mxu0 %v4382
    %5011 = vmatpush1.bf16.msra.mxu0 %v4381
    %5012 = vmatprep.subr.bf16.mxu0 %v4386
    %5013 = vmatpush1.bf16.msra.mxu0 %v4385
    %5014 = vmatprep.subr.bf16.mxu0 %v4390
    %5015 = vmatpush1.bf16.msra.mxu0 %v4389
    %5016 = vmatprep.subr.bf16.mxu0 %v4394
    %5017 = vmatpush1.bf16.msra.mxu0 %v4393
    %5018 = vmatprep.subr.bf16.mxu0 %v4398
    %5019 = vmatpush1.bf16.msra.mxu0 %v4397
    %5020 = vmatprep.mubr.bf16.mxu0 %v3220
    %5021 = vmatmul.mubr.bf16.gmra.mrb[0].mxu0 %v3219
    %v5022 = vpop.f32.mrb[0].mxu0
    %v5023 = vadd.f32 %v4982, %v5022
    %v5024 = vpop.f32.mrb[0].mxu0
    %v5025 = vadd.f32 %v4984, %v5024
    %v5026 = vpop.f32.mrb[0].mxu0
    %v5027 = vpop.f32.mrb[0].mxu0
    %5028 = vdwg.mxu0
    %5029 = vmatprep.subr.bf16.mxu0 %v4402
    %5030 = vmatpush1.bf16.msra.mxu0 %v4401
    %5031 = vmatprep.subr.bf16.mxu0 %v4406
    %5032 = vmatpush1.bf16.msra.mxu0 %v4405
    %5033 = vmatprep.subr.bf16.mxu0 %v4410
    %5034 = vmatpush1.bf16.msra.mxu0 %v4409
    %5035 = vmatprep.subr.bf16.mxu0 %v4414
    %5036 = vmatpush1.bf16.msra.mxu0 %v4413
    %5037 = vmatprep.subr.bf16.mxu0 %v4418
    %5038 = vmatpush1.bf16.msra.mxu0 %v4417
    %5039 = vmatprep.subr.bf16.mxu0 %v4422
    %5040 = vmatpush1.bf16.msra.mxu0 %v4421
    %5041 = vmatprep.subr.bf16.mxu0 %v4426
    %5042 = vmatpush1.bf16.msra.mxu0 %v4425
    %5043 = vmatprep.subr.bf16.mxu0 %v4430
    %5044 = vmatpush1.bf16.msra.mxu0 %v4429
    %5045 = vmatprep.subr.bf16.mxu0 %v4434
    %5046 = vmatpush1.bf16.msra.mxu0 %v4433
    %5047 = vmatprep.subr.bf16.mxu0 %v4438
    %5048 = vmatpush1.bf16.msra.mxu0 %v4437
    %5049 = vmatprep.subr.bf16.mxu0 %v4442
    %5050 = vmatpush1.bf16.msra.mxu0 %v4441
    %5051 = vmatprep.subr.bf16.mxu0 %v4446
    %5052 = vmatpush1.bf16.msra.mxu0 %v4445
    %5053 = vmatprep.subr.bf16.mxu0 %v4450
    %5054 = vmatpush1.bf16.msra.mxu0 %v4449
    %5055 = vmatprep.subr.bf16.mxu0 %v4454
    %5056 = vmatpush1.bf16.msra.mxu0 %v4453
    %5057 = vmatprep.subr.bf16.mxu0 %v4458
    %5058 = vmatpush1.bf16.msra.mxu0 %v4457
    %5059 = vmatprep.subr.bf16.mxu0 %v4462
    %5060 = vmatpush1.bf16.msra.mxu0 %v4461
    %5061 = vmatprep.mubr.bf16.mxu0 %v3222
    %5062 = vmatmul.mubr.bf16.gmra.mrb[0].mxu0 %v3221
    %v5063 = vpop.f32.mrb[0].mxu0
    %v5064 = vadd.f32 %v5023, %v5063
    %v5065 = vpop.f32.mrb[0].mxu0
    %v5066 = vadd.f32 %v5025, %v5065
    %v5067 = vpop.f32.mrb[0].mxu0
    %v5068 = vpop.f32.mrb[0].mxu0
    %5069 = vdwg.mxu0
    %5070 = vmatprep.subr.bf16.mxu0 %v4466
    %5071 = vmatpush1.bf16.msra.mxu0 %v4465
    %5072 = vmatprep.subr.bf16.mxu0 %v4470
    %5073 = vmatpush1.bf16.msra.mxu0 %v4469
    %5074 = vmatprep.subr.bf16.mxu0 %v4474
    %5075 = vmatpush1.bf16.msra.mxu0 %v4473
    %5076 = vmatprep.subr.bf16.mxu0 %v4478
    %5077 = vmatpush1.bf16.msra.mxu0 %v4477
    %5078 = vmatprep.subr.bf16.mxu0 %v4482
    %5079 = vmatpush1.bf16.msra.mxu0 %v4481
    %5080 = vmatprep.subr.bf16.mxu0 %v4486
    %5081 = vmatpush1.bf16.msra.mxu0 %v4485
    %5082 = vmatprep.subr.bf16.mxu0 %v4490
    %5083 = vmatpush1.bf16.msra.mxu0 %v4489
    %5084 = vmatprep.subr.bf16.mxu0 %v4494
    %5085 = vmatpush1.bf16.msra.mxu0 %v4493
    %5086 = vmatprep.subr.bf16.mxu0 %v4498
    %5087 = vmatpush1.bf16.msra.mxu0 %v4497
    %5088 = vmatprep.subr.bf16.mxu0 %v4502
    %5089 = vmatpush1.bf16.msra.mxu0 %v4501
    %5090 = vmatprep.subr.bf16.mxu0 %v4506
    %5091 = vmatpush1.bf16.msra.mxu0 %v4505
    %5092 = vmatprep.subr.bf16.mxu0 %v4510
    %5093 = vmatpush1.bf16.msra.mxu0 %v4509
    %5094 = vmatprep.subr.bf16.mxu0 %v4514
    %5095 = vmatpush1.bf16.msra.mxu0 %v4513
    %5096 = vmatprep.subr.bf16.mxu0 %v4518
    %5097 = vmatpush1.bf16.msra.mxu0 %v4517
    %5098 = vmatprep.subr.bf16.mxu0 %v4522
    %5099 = vmatpush1.bf16.msra.mxu0 %v4521
    %5100 = vmatprep.subr.bf16.mxu0 %v4526
    %5101 = vmatpush1.bf16.msra.mxu0 %v4525
    %5102 = vmatprep.mubr.bf16.mxu0 %v3224
    %5103 = vmatmul.mubr.bf16.gmra.mrb[0].mxu0 %v3223
    %v5104 = vpop.f32.mrb[0].mxu0
    %v5105 = vadd.f32 %v5064, %v5104
    %v5106 = vpop.f32.mrb[0].mxu0
    %v5107 = vadd.f32 %v5066, %v5106
    %v5108 = vpop.f32.mrb[0].mxu0
    %v5109 = vpop.f32.mrb[0].mxu0
    %5110 = vdwg.mxu0
    %v5111 = vmul.f32 %v4941, 0.2
    %v5112 = vmul.f32 %v4943, 0.2
    %v5113 = vmul.f32 %v5105, 0.2
    %v5114 = vmul.f32 %v5107, 0.2
    %v5115 = vmax.f32 %v4941, %v5111
    %v5116 = vmax.f32 %v4943, %v5112
    %v5117 = vmax.f32 %v5105, %v5113
    %v5118 = vmax.f32 %v5107, %v5114
    %v5119 = vpack.c.bf16 %v5115, %v5115
    %v5120 = vpack.c.bf16 %v5116, %v5116
    %v5121 = vpack.c.bf16 %v5117, %v5117
    %v5122 = vpack.c.bf16 %v5118, %v5118
    %v5123 = vld [vmem:[#allocation11] sm:$0xff]
    %v5124 = vld [vmem:[#allocation11 + $0x8] sm:$0xff]
    %v5125 = vld [vmem:[#allocation11 + $0x10] sm:$0xff]
    %v5126 = vld [vmem:[#allocation11 + $0x18] sm:$0xff]
    %v5127 = vld [vmem:[#allocation11 + $0x20] sm:$0xff]
    %v5128 = vld [vmem:[#allocation11 + $0x28] sm:$0xff]
    %v5129 = vld [vmem:[#allocation11 + $0x30] sm:$0xff]
    %v5130 = vld [vmem:[#allocation11 + $0x38] sm:$0xff]
    %v5131 = vld [vmem:[#allocation11 + $0x40] sm:$0xff]
    %v5132 = vld [vmem:[#allocation11 + $0x48] sm:$0xff]
    %v5133 = vld [vmem:[#allocation11 + $0x50] sm:$0xff]
    %v5134 = vld [vmem:[#allocation11 + $0x58] sm:$0xff]
    %v5135 = vld [vmem:[#allocation11 + $0x60] sm:$0xff]
    %v5136 = vld [vmem:[#allocation11 + $0x68] sm:$0xff]
    %v5137 = vld [vmem:[#allocation11 + $0x70] sm:$0xff]
    %v5138 = vld [vmem:[#allocation11 + $0x78] sm:$0xff]
    %v5139 = vld [vmem:[#allocation11 + $0x80] sm:$0xff]
    %v5140 = vld [vmem:[#allocation11 + $0x88] sm:$0xff]
    %v5141 = vld [vmem:[#allocation11 + $0x90] sm:$0xff]
    %v5142 = vld [vmem:[#allocation11 + $0x98] sm:$0xff]
    %v5143 = vld [vmem:[#allocation11 + $0xa0] sm:$0xff]
    %v5144 = vld [vmem:[#allocation11 + $0xa8] sm:$0xff]
    %v5145 = vld [vmem:[#allocation11 + $0xb0] sm:$0xff]
    %v5146 = vld [vmem:[#allocation11 + $0xb8] sm:$0xff]
    %v5147 = vld [vmem:[#allocation11 + $0xc0] sm:$0xff]
    %v5148 = vld [vmem:[#allocation11 + $0xc8] sm:$0xff]
    %v5149 = vld [vmem:[#allocation11 + $0xd0] sm:$0xff]
    %v5150 = vld [vmem:[#allocation11 + $0xd8] sm:$0xff]
    %v5151 = vld [vmem:[#allocation11 + $0xe0] sm:$0xff]
    %v5152 = vld [vmem:[#allocation11 + $0xe8] sm:$0xff]
    %v5153 = vld [vmem:[#allocation11 + $0xf0] sm:$0xff]
    %v5154 = vld [vmem:[#allocation11 + $0xf8] sm:$0xff]
    %v5155 = vld [vmem:[#allocation11 + $0x100] sm:$0xff]
    %v5156 = vld [vmem:[#allocation11 + $0x108] sm:$0xff]
    %v5157 = vld [vmem:[#allocation11 + $0x110] sm:$0xff]
    %v5158 = vld [vmem:[#allocation11 + $0x118] sm:$0xff]
    %v5159 = vld [vmem:[#allocation11 + $0x120] sm:$0xff]
    %v5160 = vld [vmem:[#allocation11 + $0x128] sm:$0xff]
    %v5161 = vld [vmem:[#allocation11 + $0x130] sm:$0xff]
    %v5162 = vld [vmem:[#allocation11 + $0x138] sm:$0xff]
    %v5163 = vld [vmem:[#allocation11 + $0x140] sm:$0xff]
    %v5164 = vld [vmem:[#allocation11 + $0x148] sm:$0xff]
    %v5165 = vld [vmem:[#allocation11 + $0x150] sm:$0xff]
    %v5166 = vld [vmem:[#allocation11 + $0x158] sm:$0xff]
    %v5167 = vld [vmem:[#allocation11 + $0x160] sm:$0xff]
    %v5168 = vld [vmem:[#allocation11 + $0x168] sm:$0xff]
    %v5169 = vld [vmem:[#allocation11 + $0x170] sm:$0xff]
    %v5170 = vld [vmem:[#allocation11 + $0x178] sm:$0xff]
    %v5171 = vld [vmem:[#allocation11 + $0x180] sm:$0xff]
    %v5172 = vld [vmem:[#allocation11 + $0x188] sm:$0xff]
    %v5173 = vld [vmem:[#allocation11 + $0x190] sm:$0xff]
    %v5174 = vld [vmem:[#allocation11 + $0x198] sm:$0xff]
    %v5175 = vld [vmem:[#allocation11 + $0x1a0] sm:$0xff]
    %v5176 = vld [vmem:[#allocation11 + $0x1a8] sm:$0xff]
    %v5177 = vld [vmem:[#allocation11 + $0x1b0] sm:$0xff]
    %v5178 = vld [vmem:[#allocation11 + $0x1b8] sm:$0xff]
    %v5179 = vld [vmem:[#allocation11 + $0x1c0] sm:$0xff]
    %v5180 = vld [vmem:[#allocation11 + $0x1c8] sm:$0xff]
    %v5181 = vld [vmem:[#allocation11 + $0x1d0] sm:$0xff]
    %v5182 = vld [vmem:[#allocation11 + $0x1d8] sm:$0xff]
    %v5183 = vld [vmem:[#allocation11 + $0x1e0] sm:$0xff]
    %v5184 = vld [vmem:[#allocation11 + $0x1e8] sm:$0xff]
    %v5185 = vld [vmem:[#allocation11 + $0x1f0] sm:$0xff]
    %v5186 = vld [vmem:[#allocation11 + $0x1f8] sm:$0xff]
    %v5187 = vld [vmem:[#allocation13] sm:$0x3]
    %v5189 = vlaneseq
    %v5190 = vshrl.u32 %v5189, 7
    %v5191 = vsub.s32 0, %v5190
    %v5192 = vrot.slane %v5187, %v5191
    %v5193 = vlaneseq
    %v5194 = vshrl.u32 %v5193, 7
    %v5195 = vsub.s32 1, %v5194
    %v5196 = vrot.slane %v5187, %v5195
    %v5263 = vunpack.c.l.b16 %v5123
    %v5264 = vunpack.c.h.b16 %v5123
    %v5265 = vunpack.c.l.b16 %v5124
    %v5266 = vunpack.c.h.b16 %v5124
    %v5267 = vunpack.c.l.b16 %v5125
    %v5268 = vunpack.c.h.b16 %v5125
    %v5269 = vunpack.c.l.b16 %v5126
    %v5270 = vunpack.c.h.b16 %v5126
    %v5271 = vunpack.c.l.b16 %v5127
    %v5272 = vunpack.c.h.b16 %v5127
    %v5273 = vunpack.c.l.b16 %v5128
    %v5274 = vunpack.c.h.b16 %v5128
    %v5275 = vunpack.c.l.b16 %v5129
    %v5276 = vunpack.c.h.b16 %v5129
    %v5277 = vunpack.c.l.b16 %v5130
    %v5278 = vunpack.c.h.b16 %v5130
    %v5279 = vunpack.c.l.b16 %v5131
    %v5280 = vunpack.c.h.b16 %v5131
    %v5281 = vunpack.c.l.b16 %v5132
    %v5282 = vunpack.c.h.b16 %v5132
    %v5283 = vunpack.c.l.b16 %v5133
    %v5284 = vunpack.c.h.b16 %v5133
    %v5285 = vunpack.c.l.b16 %v5134
    %v5286 = vunpack.c.h.b16 %v5134
    %v5287 = vunpack.c.l.b16 %v5135
    %v5288 = vunpack.c.h.b16 %v5135
    %v5289 = vunpack.c.l.b16 %v5136
    %v5290 = vunpack.c.h.b16 %v5136
    %v5291 = vunpack.c.l.b16 %v5137
    %v5292 = vunpack.c.h.b16 %v5137
    %v5293 = vunpack.c.l.b16 %v5138
    %v5294 = vunpack.c.h.b16 %v5138
    %v5295 = vunpack.c.l.b16 %v5139
    %v5296 = vunpack.c.h.b16 %v5139
    %v5297 = vunpack.c.l.b16 %v5140
    %v5298 = vunpack.c.h.b16 %v5140
    %v5299 = vunpack.c.l.b16 %v5141
    %v5300 = vunpack.c.h.b16 %v5141
    %v5301 = vunpack.c.l.b16 %v5142
    %v5302 = vunpack.c.h.b16 %v5142
    %v5303 = vunpack.c.l.b16 %v5143
    %v5304 = vunpack.c.h.b16 %v5143
    %v5305 = vunpack.c.l.b16 %v5144
    %v5306 = vunpack.c.h.b16 %v5144
    %v5307 = vunpack.c.l.b16 %v5145
    %v5308 = vunpack.c.h.b16 %v5145
    %v5309 = vunpack.c.l.b16 %v5146
    %v5310 = vunpack.c.h.b16 %v5146
    %v5311 = vunpack.c.l.b16 %v5147
    %v5312 = vunpack.c.h.b16 %v5147
    %v5313 = vunpack.c.l.b16 %v5148
    %v5314 = vunpack.c.h.b16 %v5148
    %v5315 = vunpack.c.l.b16 %v5149
    %v5316 = vunpack.c.h.b16 %v5149
    %v5317 = vunpack.c.l.b16 %v5150
    %v5318 = vunpack.c.h.b16 %v5150
    %v5319 = vunpack.c.l.b16 %v5151
    %v5320 = vunpack.c.h.b16 %v5151
    %v5321 = vunpack.c.l.b16 %v5152
    %v5322 = vunpack.c.h.b16 %v5152
    %v5323 = vunpack.c.l.b16 %v5153
    %v5324 = vunpack.c.h.b16 %v5153
    %v5325 = vunpack.c.l.b16 %v5154
    %v5326 = vunpack.c.h.b16 %v5154
    %v5327 = vunpack.c.l.b16 %v5155
    %v5328 = vunpack.c.h.b16 %v5155
    %v5329 = vunpack.c.l.b16 %v5156
    %v5330 = vunpack.c.h.b16 %v5156
    %v5331 = vunpack.c.l.b16 %v5157
    %v5332 = vunpack.c.h.b16 %v5157
    %v5333 = vunpack.c.l.b16 %v5158
    %v5334 = vunpack.c.h.b16 %v5158
    %v5335 = vunpack.c.l.b16 %v5159
    %v5336 = vunpack.c.h.b16 %v5159
    %v5337 = vunpack.c.l.b16 %v5160
    %v5338 = vunpack.c.h.b16 %v5160
    %v5339 = vunpack.c.l.b16 %v5161
    %v5340 = vunpack.c.h.b16 %v5161
    %v5341 = vunpack.c.l.b16 %v5162
    %v5342 = vunpack.c.h.b16 %v5162
    %v5343 = vunpack.c.l.b16 %v5163
    %v5344 = vunpack.c.h.b16 %v5163
    %v5345 = vunpack.c.l.b16 %v5164
    %v5346 = vunpack.c.h.b16 %v5164
    %v5347 = vunpack.c.l.b16 %v5165
    %v5348 = vunpack.c.h.b16 %v5165
    %v5349 = vunpack.c.l.b16 %v5166
    %v5350 = vunpack.c.h.b16 %v5166
    %v5351 = vunpack.c.l.b16 %v5167
    %v5352 = vunpack.c.h.b16 %v5167
    %v5353 = vunpack.c.l.b16 %v5168
    %v5354 = vunpack.c.h.b16 %v5168
    %v5355 = vunpack.c.l.b16 %v5169
    %v5356 = vunpack.c.h.b16 %v5169
    %v5357 = vunpack.c.l.b16 %v5170
    %v5358 = vunpack.c.h.b16 %v5170
    %v5359 = vunpack.c.l.b16 %v5171
    %v5360 = vunpack.c.h.b16 %v5171
    %v5361 = vunpack.c.l.b16 %v5172
    %v5362 = vunpack.c.h.b16 %v5172
    %v5363 = vunpack.c.l.b16 %v5173
    %v5364 = vunpack.c.h.b16 %v5173
    %v5365 = vunpack.c.l.b16 %v5174
    %v5366 = vunpack.c.h.b16 %v5174
    %v5367 = vunpack.c.l.b16 %v5175
    %v5368 = vunpack.c.h.b16 %v5175
    %v5369 = vunpack.c.l.b16 %v5176
    %v5370 = vunpack.c.h.b16 %v5176
    %v5371 = vunpack.c.l.b16 %v5177
    %v5372 = vunpack.c.h.b16 %v5177
    %v5373 = vunpack.c.l.b16 %v5178
    %v5374 = vunpack.c.h.b16 %v5178
    %v5375 = vunpack.c.l.b16 %v5179
    %v5376 = vunpack.c.h.b16 %v5179
    %v5377 = vunpack.c.l.b16 %v5180
    %v5378 = vunpack.c.h.b16 %v5180
    %v5379 = vunpack.c.l.b16 %v5181
    %v5380 = vunpack.c.h.b16 %v5181
    %v5381 = vunpack.c.l.b16 %v5182
    %v5382 = vunpack.c.h.b16 %v5182
    %v5383 = vunpack.c.l.b16 %v5183
    %v5384 = vunpack.c.h.b16 %v5183
    %v5385 = vunpack.c.l.b16 %v5184
    %v5386 = vunpack.c.h.b16 %v5184
    %v5387 = vunpack.c.l.b16 %v5185
    %v5388 = vunpack.c.h.b16 %v5185
    %v5389 = vunpack.c.l.b16 %v5186
    %v5390 = vunpack.c.h.b16 %v5186
    %v5391 = vpack.c.b16 %v5265, %v5263
    %v5392 = vpack.c.b16 %v5266, %v5264
    %v5393 = vpack.c.b16 %v5269, %v5267
    %v5394 = vpack.c.b16 %v5270, %v5268
    %v5395 = vpack.c.b16 %v5273, %v5271
    %v5396 = vpack.c.b16 %v5274, %v5272
    %v5397 = vpack.c.b16 %v5277, %v5275
    %v5398 = vpack.c.b16 %v5278, %v5276
    %v5399 = vpack.c.b16 %v5281, %v5279
    %v5400 = vpack.c.b16 %v5282, %v5280
    %v5401 = vpack.c.b16 %v5285, %v5283
    %v5402 = vpack.c.b16 %v5286, %v5284
    %v5403 = vpack.c.b16 %v5289, %v5287
    %v5404 = vpack.c.b16 %v5290, %v5288
    %v5405 = vpack.c.b16 %v5293, %v5291
    %v5406 = vpack.c.b16 %v5294, %v5292
    %v5407 = vpack.c.b16 %v5297, %v5295
    %v5408 = vpack.c.b16 %v5298, %v5296
    %v5409 = vpack.c.b16 %v5301, %v5299
    %v5410 = vpack.c.b16 %v5302, %v5300
    %v5411 = vpack.c.b16 %v5305, %v5303
    %v5412 = vpack.c.b16 %v5306, %v5304
    %v5413 = vpack.c.b16 %v5309, %v5307
    %v5414 = vpack.c.b16 %v5310, %v5308
    %v5415 = vpack.c.b16 %v5313, %v5311
    %v5416 = vpack.c.b16 %v5314, %v5312
    %v5417 = vpack.c.b16 %v5317, %v5315
    %v5418 = vpack.c.b16 %v5318, %v5316
    %v5419 = vpack.c.b16 %v5321, %v5319
    %v5420 = vpack.c.b16 %v5322, %v5320
    %v5421 = vpack.c.b16 %v5325, %v5323
    %v5422 = vpack.c.b16 %v5326, %v5324
    %v5423 = vpack.c.b16 %v5329, %v5327
    %v5424 = vpack.c.b16 %v5330, %v5328
    %v5425 = vpack.c.b16 %v5333, %v5331
    %v5426 = vpack.c.b16 %v5334, %v5332
    %v5427 = vpack.c.b16 %v5337, %v5335
    %v5428 = vpack.c.b16 %v5338, %v5336
    %v5429 = vpack.c.b16 %v5341, %v5339
    %v5430 = vpack.c.b16 %v5342, %v5340
    %v5431 = vpack.c.b16 %v5345, %v5343
    %v5432 = vpack.c.b16 %v5346, %v5344
    %v5433 = vpack.c.b16 %v5349, %v5347
    %v5434 = vpack.c.b16 %v5350, %v5348
    %v5435 = vpack.c.b16 %v5353, %v5351
    %v5436 = vpack.c.b16 %v5354, %v5352
    %v5437 = vpack.c.b16 %v5357, %v5355
    %v5438 = vpack.c.b16 %v5358, %v5356
    %v5439 = vpack.c.b16 %v5361, %v5359
    %v5440 = vpack.c.b16 %v5362, %v5360
    %v5441 = vpack.c.b16 %v5365, %v5363
    %v5442 = vpack.c.b16 %v5366, %v5364
    %v5443 = vpack.c.b16 %v5369, %v5367
    %v5444 = vpack.c.b16 %v5370, %v5368
    %v5445 = vpack.c.b16 %v5373, %v5371
    %v5446 = vpack.c.b16 %v5374, %v5372
    %v5447 = vpack.c.b16 %v5377, %v5375
    %v5448 = vpack.c.b16 %v5378, %v5376
    %v5449 = vpack.c.b16 %v5381, %v5379
    %v5450 = vpack.c.b16 %v5382, %v5380
    %v5451 = vpack.c.b16 %v5385, %v5383
    %v5452 = vpack.c.b16 %v5386, %v5384
    %v5453 = vpack.c.b16 %v5389, %v5387
    %v5454 = vpack.c.b16 %v5390, %v5388
    %5519 = vmatprep.subr.bf16.mxu0 %v5392
    %5520 = vmatpush1.bf16.msra.mxu0 %v5391
    %5521 = vmatprep.subr.bf16.mxu0 %v5394
    %5522 = vmatpush1.bf16.msra.mxu0 %v5393
    %5523 = vmatprep.subr.bf16.mxu0 %v5396
    %5524 = vmatpush1.bf16.msra.mxu0 %v5395
    %5525 = vmatprep.subr.bf16.mxu0 %v5398
    %5526 = vmatpush1.bf16.msra.mxu0 %v5397
    %5527 = vmatprep.subr.bf16.mxu0 %v5400
    %5528 = vmatpush1.bf16.msra.mxu0 %v5399
    %5529 = vmatprep.subr.bf16.mxu0 %v5402
    %5530 = vmatpush1.bf16.msra.mxu0 %v5401
    %5531 = vmatprep.subr.bf16.mxu0 %v5404
    %5532 = vmatpush1.bf16.msra.mxu0 %v5403
    %5533 = vmatprep.subr.bf16.mxu0 %v5406
    %5534 = vmatpush1.bf16.msra.mxu0 %v5405
    %5535 = vmatprep.subr.bf16.mxu0 %v5408
    %5536 = vmatpush1.bf16.msra.mxu0 %v5407
    %5537 = vmatprep.subr.bf16.mxu0 %v5410
    %5538 = vmatpush1.bf16.msra.mxu0 %v5409
    %5539 = vmatprep.subr.bf16.mxu0 %v5412
    %5540 = vmatpush1.bf16.msra.mxu0 %v5411
    %5541 = vmatprep.subr.bf16.mxu0 %v5414
    %5542 = vmatpush1.bf16.msra.mxu0 %v5413
    %5543 = vmatprep.subr.bf16.mxu0 %v5416
    %5544 = vmatpush1.bf16.msra.mxu0 %v5415
    %5545 = vmatprep.subr.bf16.mxu0 %v5418
    %5546 = vmatpush1.bf16.msra.mxu0 %v5417
    %5547 = vmatprep.subr.bf16.mxu0 %v5420
    %5548 = vmatpush1.bf16.msra.mxu0 %v5419
    %5549 = vmatprep.subr.bf16.mxu0 %v5422
    %5550 = vmatpush1.bf16.msra.mxu0 %v5421
    %5551 = vmatprep.mubr.bf16.mxu0 %v5120
    %5552 = vmatmul.mubr.bf16.gmra.mrb[0].mxu0 %v5119
    %v5553 = vpop.f32.mrb[0].mxu0
    %v5554 = vadd.f32 %v5192, %v5553
    %v5555 = vpop.f32.mrb[0].mxu0
    %v5556 = vadd.f32 %v5196, %v5555
    %v5557 = vpop.f32.mrb[0].mxu0
    %v5558 = vpop.f32.mrb[0].mxu0
    %5559 = vdwg.mxu0
    %5560 = vmatprep.subr.bf16.mxu0 %v5424
    %5561 = vmatpush1.bf16.msra.mxu0 %v5423
    %5562 = vmatprep.subr.bf16.mxu0 %v5426
    %5563 = vmatpush1.bf16.msra.mxu0 %v5425
    %5564 = vmatprep.subr.bf16.mxu0 %v5428
    %5565 = vmatpush1.bf16.msra.mxu0 %v5427
    %5566 = vmatprep.subr.bf16.mxu0 %v5430
    %5567 = vmatpush1.bf16.msra.mxu0 %v5429
    %5568 = vmatprep.subr.bf16.mxu0 %v5432
    %5569 = vmatpush1.bf16.msra.mxu0 %v5431
    %5570 = vmatprep.subr.bf16.mxu0 %v5434
    %5571 = vmatpush1.bf16.msra.mxu0 %v5433
    %5572 = vmatprep.subr.bf16.mxu0 %v5436
    %5573 = vmatpush1.bf16.msra.mxu0 %v5435
    %5574 = vmatprep.subr.bf16.mxu0 %v5438
    %5575 = vmatpush1.bf16.msra.mxu0 %v5437
    %5576 = vmatprep.subr.bf16.mxu0 %v5440
    %5577 = vmatpush1.bf16.msra.mxu0 %v5439
    %5578 = vmatprep.subr.bf16.mxu0 %v5442
    %5579 = vmatpush1.bf16.msra.mxu0 %v5441
    %5580 = vmatprep.subr.bf16.mxu0 %v5444
    %5581 = vmatpush1.bf16.msra.mxu0 %v5443
    %5582 = vmatprep.subr.bf16.mxu0 %v5446
    %5583 = vmatpush1.bf16.msra.mxu0 %v5445
    %5584 = vmatprep.subr.bf16.mxu0 %v5448
    %5585 = vmatpush1.bf16.msra.mxu0 %v5447
    %5586 = vmatprep.subr.bf16.mxu0 %v5450
    %5587 = vmatpush1.bf16.msra.mxu0 %v5449
    %5588 = vmatprep.subr.bf16.mxu0 %v5452
    %5589 = vmatpush1.bf16.msra.mxu0 %v5451
    %5590 = vmatprep.subr.bf16.mxu0 %v5454
    %5591 = vmatpush1.bf16.msra.mxu0 %v5453
    %5592 = vmatprep.mubr.bf16.mxu0 %v5122
    %5593 = vmatmul.mubr.bf16.gmra.mrb[0].mxu0 %v5121
    %v5594 = vpop.f32.mrb[0].mxu0
    %v5595 = vadd.f32 %v5554, %v5594
    %v5596 = vpop.f32.mrb[0].mxu0
    %v5597 = vadd.f32 %v5556, %v5596
    %v5598 = vpop.f32.mrb[0].mxu0
    %v5599 = vpop.f32.mrb[0].mxu0
    %5600 = vdwg.mxu0
    %v5601 = vmul.f32 %v5595, 0.2
    %v5602 = vmul.f32 %v5597, 0.2
    %v5603 = vmax.f32 %v5595, %v5601
    %v5604 = vmax.f32 %v5597, %v5602
    %v5605 = vld [vmem:[#allocation14] sm:$0x3]
    %v5607 = vlaneseq
    %v5608 = vshrl.u32 %v5607, 7
    %v5609 = vsub.s32 0, %v5608
    %v5610 = vrot.slane %v5605, %v5609
    %v5611 = vlaneseq
    %v5612 = vshrl.u32 %v5611, 7
    %v5613 = vsub.s32 1, %v5612
    %v5614 = vrot.slane %v5605, %v5613
    %v5617 = vmul.f32 %v5603, %v5610
    %v5618 = vmul.f32 %v5604, %v5614
    %v5619 = vadd.f32 %v5617, %v5618
    %5620 = vadd.xlane.f32.xlu0 %v5619
    %v5621 = vpop.xlane.xlu0 %5620
    %s5622 = sld [smem:[#allocation2]]
    %v5623 = vstv %s5622
    %v5624 = vadd.f32 %v5621, %v5623
    %v5625 = vsub.f32 0.0, %v5624
    %v5626 = vmul.f32 %v5625, 1.442695
    %v5627 = vpow.pop %v5626
    %v5628 = vadd.f32 %v5627, 1.0
    %v5629 = vrcp.pop %v5628
    %v5630 = vmul.f32 1.0, %v5629
    %vm5631 = vcmask 7168
    %5632 = vst.msk [vmem:[%s9] sm:$0xff] %vm5631, %v5630
    // Predicated region
    $region70: #{tpu_custom_call.1} parent=1 // pred_check
      _
    $region71: #{tpu_custom_call.1} parent=1 // pred_check_branch
      %5634 = sbr.rel (0) target = $region73
    $region72: #{tpu_custom_call.1} parent=1 // pred_region
      _
    $region73: #{tpu_custom_call.1} parent=1 // pred_fallthru
      _
    // Predicated region
    $region74: #{tpu_custom_call.1} parent=1 // pred_check
      _
    $region75: #{tpu_custom_call.1} parent=1 // pred_check_branch
      %5636 = sbr.rel (0) target = $region77
    $region76: #{tpu_custom_call.1} parent=1 // pred_region
      _
    $region77: #{tpu_custom_call.1} parent=1 // pred_fallthru
      _
    %5637 = vsyncpa [#allocation4], 1
    %5638 = vsyncpa [#allocation6], 1
    %5639 = vsyncpa [#allocation9], 1
    %5640 = vsyncpa [#allocation12], 1
    %5641 = vsyncpa [#allocation15], 1

</llo_original>
